<compile_context>
chip_gen: v7x
topology: tpu7x:2x2x1
jax: 0.10.0
libtpu: 0.0.40
codegen_flags: <defaults>
</compile_context>

<pallas_src>
import numpy as np

import jax
import jax.numpy as jnp
from jax.experimental import pallas as pl
from jax.experimental.pallas import tpu as pltpu

_BN_EPS = 1e-5


# ----------------------------------------------------------------------------
# Fused whole-network Pallas kernel
# ----------------------------------------------------------------------------
def _fused_net_kernel(x_ref,
                      b1_ref, ud1_ref, sw1_ref, sh1_ref, s1_ref,
                      b2_ref, ud2_ref, sw2_ref, sh2_ref, s2_ref,
                      b3_ref, ud3_ref, sw3_ref, sh3_ref, s3_ref,
                      wf1_ref, bf1_ref, wf2_ref, bf2_ref,
                      out_ref):
    f32 = jnp.float32

    def conv_bn_pool_relu(x, b_ref, ud_ref, sw_ref, sh_ref, s_ref):
        # x: [H, W*Cin].  b_ref: [3, W*Cin, W*Cout] banded conv matrices (one
        # per ky tap, dx taps + zero padding baked in, BN scale folded in).
        y = jnp.dot(x, b_ref[1], preferred_element_type=f32)
        # row shifts for ky=0 (needs x[h-1]) and ky=2 (needs x[h+1]) via
        # constant sub/super-diagonal matrices (zero rows give zero padding).
        y = y + jnp.dot(ud_ref[0],
                        jnp.dot(x, b_ref[0], preferred_element_type=f32),
                        preferred_element_type=f32)
        y = y + jnp.dot(ud_ref[1],
                        jnp.dot(x, b_ref[2], preferred_element_type=f32),
                        preferred_element_type=f32)
        # 2x2 max-pool: even/odd column selection then even/odd row selection.
        d = jnp.maximum(jnp.dot(y, sw_ref[0], preferred_element_type=f32),
                        jnp.dot(y, sw_ref[1], preferred_element_type=f32))
        p = jnp.maximum(jnp.dot(sh_ref[0], d, preferred_element_type=f32),
                        jnp.dot(sh_ref[1], d, preferred_element_type=f32))
        # Folded BN shift (a per-channel constant commutes with max-pool),
        # then ReLU (order pool->relu matches the PyTorch module).
        return jnp.maximum(p + s_ref[...], 0.0)

    x0 = x_ref[0]                                               # [64, 64*3]
    p1 = conv_bn_pool_relu(x0, b1_ref, ud1_ref, sw1_ref, sh1_ref, s1_ref)
    p2 = conv_bn_pool_relu(p1, b2_ref, ud2_ref, sw2_ref, sh2_ref, s2_ref)
    p3 = conv_bn_pool_relu(p2, b3_ref, ud3_ref, sw3_ref, sh3_ref, s3_ref)
    # p3: [8, 8*C3] — rows = h, lanes = (w, c); fc1 weights were permuted to
    # this (h, w, c) ordering (and BN4-scale folded) at prep time.

    nh = wf1_ref.shape[0]
    h1 = jnp.dot(p3[0:1, :], wf1_ref[0], preferred_element_type=f32)
    for h in range(1, nh):
        h1 = h1 + jnp.dot(p3[h:h + 1, :], wf1_ref[h],
                          preferred_element_type=f32)
    h1 = jnp.maximum(h1 + bf1_ref[...], 0.0)                    # fc1+bn4+relu

    z = jnp.dot(h1, wf2_ref[...], preferred_element_type=f32) + bf2_ref[...]
    m = jnp.max(z, axis=-1, keepdims=True)
    lse = m + jnp.log(jnp.sum(jnp.exp(z - m), axis=-1, keepdims=True))
    out_ref[0] = z - lse                                        # log_softmax


def _full_spec(a):
    nd = a.ndim
    return pl.BlockSpec(a.shape, lambda n: (0,) * nd)


@jax.jit
def net_forward(prepped, x_nchw):
    """Forward pass of `Net` (inference) in one fused Pallas kernel."""
    n, _, h, w = x_nchw.shape
    # NCHW -> NHWC -> fuse (W, C) onto the lane dim: [N, H, W*C]
    x_fused = jnp.transpose(x_nchw, (0, 2, 3, 1)).reshape(n, h, -1)

    out = pl.pallas_call(
        _fused_net_kernel,
        out_shape=jax.ShapeDtypeStruct((n, 1, 6), jnp.float32),
        grid=(n,),
        in_specs=[pl.BlockSpec((1, x_fused.shape[1], x_fused.shape[2]),
                               lambda i: (i, 0, 0))]
                 + [_full_spec(a) for a in prepped],
        out_specs=pl.BlockSpec((1, 1, 6), lambda i: (i, 0, 0)),
        compiler_params=pltpu.CompilerParams(
            dimension_semantics=("parallel",)),
    )(x_fused, *prepped)
    return out.reshape(n, 6)


# ----------------------------------------------------------------------------
# One-time parameter preparation (hoisted out of the forward pass)
# ----------------------------------------------------------------------------
def prepare_params(params, num_channels):
    c3 = 4 * num_channels

    def np32(a):
        return np.asarray(a, np.float32)

    def bn_fold(bias, bn):
        gamma, beta = np32(bn["gamma"]), np32(bn["beta"])
        rmean, rvar = np32(bn["rmean"]), np32(bn["rvar"])
        scale = gamma / np.sqrt(rvar + _BN_EPS)
        shift = beta + scale * (np32(bias) - rmean)
        return scale, shift

    def conv_block_mats(w, bias, bn, win):
        w = np32(w)                                    # [Cout, Cin, 3, 3]
        cout, cin = w.shape[0], w.shape[1]
        scale, shift = bn_fold(bias, bn)
        wf = w * scale[:, None, None, None]            # fold BN scale

        # Banded conv matrices: one per ky; entry (wi*Cin+ci, wo*Cout+co)
        # = wf[co, ci, ky, wi - wo + 1] for |wi - wo| <= 1.
        band = np.zeros((3, win * cin, win * cout), np.float32)
        for ky in range(3):
            for kx in range(3):
                blk = wf[:, :, ky, kx].T               # [Cin, Cout]
                for wo in range(win):
                    wi = wo + kx - 1
                    if 0 <= wi < win:
                        band[ky,
                             wi * cin:(wi + 1) * cin,
                             wo * cout:(wo + 1) * cout] = blk

        hh = win  # square feature maps
        ud = np.zeros((2, hh, hh), np.float32)
        for r in range(1, hh):
            ud[0, r, r - 1] = 1.0                      # (ud[0] @ y)[h] = y[h-1]
        for r in range(hh - 1):
            ud[1, r, r + 1] = 1.0                      # (ud[1] @ y)[h] = y[h+1]

        wo_ = win // 2
        sw = np.zeros((2, win * cout, wo_ * cout), np.float32)
        for wo in range(wo_):
            for c in range(cout):
                sw[0, (2 * wo) * cout + c, wo * cout + c] = 1.0
                sw[1, (2 * wo + 1) * cout + c, wo * cout + c] = 1.0

        ho = hh // 2
        sh = np.zeros((2, ho, hh), np.float32)
        for r in range(ho):
            sh[0, r, 2 * r] = 1.0
            sh[1, r, 2 * r + 1] = 1.0

        s_tiled = np.tile(shift, wo_).reshape(1, wo_ * cout)
        return band, ud, sw, sh, s_tiled

    b1, ud1, sw1, sh1, s1 = conv_block_mats(params["conv1_w"],
                                            params["conv1_b"], params["bn1"], 64)
    b2, ud2, sw2, sh2, s2 = conv_block_mats(params["conv2_w"],
                                            params["conv2_b"], params["bn2"], 32)
    b3, ud3, sw3, sh3, s3 = conv_block_mats(params["conv3_w"],
                                            params["conv3_b"], params["bn3"], 16)

    # fc1: PyTorch flatten order is (c, h, w); permute weight columns to the
    # kernel's (h, w, c) layout and fold the BN4 scale.
    scale4, shift4 = bn_fold(params["fc1_b"], params["bn4"])
    fc1_w = np32(params["fc1_w"])                      # [c3, c3*64]
    o = fc1_w.shape[0]
    wf1 = fc1_w.reshape(o, c3, 8, 8)                   # [o, c, h, w]
    wf1 = np.transpose(wf1, (2, 3, 1, 0))              # [h, w, c, o]
    wf1 = wf1.reshape(8, 8 * c3, o) * scale4[None, None, :]
    bf1 = shift4.reshape(1, o)

    wf2 = np32(params["fc2_w"]).T                      # [c3, 6]
    bf2 = np32(params["fc2_b"]).reshape(1, -1)

    prepped = (b1, ud1, sw1, sh1, s1,
               b2, ud2, sw2, sh2, s2,
               b3, ud3, sw3, sh3, s3,
               wf1, bf1, wf2, bf2)
    return tuple(jnp.asarray(a) for a in prepped)


# ----------------------------------------------------------------------------
# Parameter init (PyTorch layouts) and a pure-JAX reference for verification
# ----------------------------------------------------------------------------
def init_params(key, num_channels):
    c = num_channels
    ks = jax.random.split(key, 32)
    k = iter(ks)

    def nrm(shape, s=0.15):
        return jax.random.normal(next(k), shape, jnp.float32) * s

    def bn(ch):
        return dict(gamma=1.0 + nrm((ch,), 0.1), beta=nrm((ch,), 0.1),
                    rmean=nrm((ch,), 0.1),
                    rvar=jnp.abs(nrm((ch,), 1.0)) * 0.5 + 0.5)

    return {
        "conv1_w": nrm((c, 3, 3, 3)),           "conv1_b": nrm((c,), 0.1),
        "bn1": bn(c),
        "conv2_w": nrm((2 * c, c, 3, 3)),       "conv2_b": nrm((2 * c,), 0.1),
        "bn2": bn(2 * c),
        "conv3_w": nrm((4 * c, 2 * c, 3, 3)),   "conv3_b": nrm((4 * c,), 0.1),
        "bn3": bn(4 * c),
        "fc1_w": nrm((4 * c, 4 * c * 8 * 8), 0.03), "fc1_b": nrm((4 * c,), 0.1),
        "bn4": bn(4 * c),
        "fc2_w": nrm((6, 4 * c), 0.3),          "fc2_b": nrm((6,), 0.1),
    }


def reference_forward(params, x_nchw):
    """Pure-JAX (XLA) reference of the PyTorch forward, eval-mode BN."""
    hp = jax.lax.Precision.HIGHEST

    def bn(y, p):
        shape = (1, -1) + (1,) * (y.ndim - 2)
        scale = (p["gamma"] / jnp.sqrt(p["rvar"] + _BN_EPS)).reshape(shape)
        return scale * (y - p["rmean"].reshape(shape)) + p["beta"].reshape(shape)

    def block(x, w, b, bnp):
        y = jax.lax.conv_general_dilated(
            x, w, window_strides=(1, 1), padding=((1, 1), (1, 1)),
            dimension_numbers=("NCHW", "OIHW", "NCHW"), precision=hp)
        y = y + b.reshape(1, -1, 1, 1)
        y = bn(y, bnp)
        n, c, hh, ww = y.shape
        y = y.reshape(n, c, hh // 2, 2, ww // 2, 2).max(axis=(3, 5))
        return jnp.maximum(y, 0.0)

    x = block(x_nchw, params["conv1_w"], params["conv1_b"], params["bn1"])
    x = block(x, params["conv2_w"], params["conv2_b"], params["bn2"])
    x = block(x, params["conv3_w"], params["conv3_b"], params["bn3"])
    x = x.reshape(x.shape[0], -1)                    # (c, h, w) flatten order
    y = jnp.dot(x, params["fc1_w"].T, precision=hp) + params["fc1_b"]
    y = jnp.maximum(bn(y, params["bn4"]), 0.0)
    z = jnp.dot(y, params["fc2_w"].T, precision=hp) + params["fc2_b"]
    return jax.nn.log_softmax(z, axis=-1)


# ----------------------------------------------------------------------------
if __name__ == "__main__":
    num_channels = 4
    batch = 2
    key = jax.random.PRNGKey(0)
    kp, kx = jax.random.split(key)

    params = init_params(kp, num_channels)
    # Input matches Net.apply_transform: NCHW [N, 3, 64, 64]
    x = jax.random.normal(kx, (batch, 3, 64, 64), jnp.float32)

    prepped = prepare_params(params, num_channels)   # one-time weight prep
    out = net_forward(prepped, x)
    out = jax.block_until_ready(out)

    assert out.shape == (batch, 6)
    assert bool(jnp.all(jnp.isfinite(out)))
    # log_softmax rows should sum (in prob space) to ~1
    assert bool(jnp.allclose(jnp.sum(jnp.exp(out), axis=1), 1.0, atol=1e-4))
    # Check against a pure-JAX reference of the PyTorch module.
    ref = reference_forward(params, x)
    assert bool(jnp.allclose(out, ref, atol=3e-3, rtol=3e-3)), \
        float(jnp.max(jnp.abs(out - ref)))
    print("KERNEL_OK")
</pallas_src>

<mosaic_0001>
module attributes {stable_mosaic.version = 11 : i64} {
  func.func @_fused_net_kernel(%arg0: i32, %arg1: memref<1x64x192xf32, #tpu.memory_space<vmem>>, %arg2: memref<3x192x256xf32, #tpu.memory_space<vmem>>, %arg3: memref<2x64x64xf32, #tpu.memory_space<vmem>>, %arg4: memref<2x256x128xf32, #tpu.memory_space<vmem>>, %arg5: memref<2x32x64xf32, #tpu.memory_space<vmem>>, %arg6: memref<1x128xf32, #tpu.memory_space<vmem>>, %arg7: memref<3x128x256xf32, #tpu.memory_space<vmem>>, %arg8: memref<2x32x32xf32, #tpu.memory_space<vmem>>, %arg9: memref<2x256x128xf32, #tpu.memory_space<vmem>>, %arg10: memref<2x16x32xf32, #tpu.memory_space<vmem>>, %arg11: memref<1x128xf32, #tpu.memory_space<vmem>>, %arg12: memref<3x128x256xf32, #tpu.memory_space<vmem>>, %arg13: memref<2x16x16xf32, #tpu.memory_space<vmem>>, %arg14: memref<2x256x128xf32, #tpu.memory_space<vmem>>, %arg15: memref<2x8x16xf32, #tpu.memory_space<vmem>>, %arg16: memref<1x128xf32, #tpu.memory_space<vmem>>, %arg17: memref<8x128x16xf32, #tpu.memory_space<vmem>>, %arg18: memref<1x16xf32, #tpu.memory_space<vmem>>, %arg19: memref<16x6xf32, #tpu.memory_space<vmem>>, %arg20: memref<1x6xf32, #tpu.memory_space<vmem>>, %arg21: memref<1x1x6xf32, #tpu.memory_space<vmem>>) attributes {dimension_semantics = [#tpu.dimension_semantics<parallel>], iteration_bounds = array<i64: 2>, scalar_prefetch = 0 : i64, scratch_operands = 0 : i64, tpu.core_type = #tpu.core_type<tc>, window_params = [{transform_indices = @transform_0, window_bounds = array<i64: 1, 64, 192>}, {pipeline_mode = #tpu.pipeline_mode<synchronous>, transform_indices = @transform_1, window_bounds = array<i64: 3, 192, 256>}, {pipeline_mode = #tpu.pipeline_mode<synchronous>, transform_indices = @transform_2, window_bounds = array<i64: 2, 64, 64>}, {pipeline_mode = #tpu.pipeline_mode<synchronous>, transform_indices = @transform_3, window_bounds = array<i64: 2, 256, 128>}, {pipeline_mode = #tpu.pipeline_mode<synchronous>, transform_indices = @transform_4, window_bounds = array<i64: 2, 32, 64>}, {pipeline_mode = #tpu.pipeline_mode<synchronous>, transform_indices = @transform_5, window_bounds = array<i64: 1, 128>}, {pipeline_mode = #tpu.pipeline_mode<synchronous>, transform_indices = @transform_6, window_bounds = array<i64: 3, 128, 256>}, {pipeline_mode = #tpu.pipeline_mode<synchronous>, transform_indices = @transform_7, window_bounds = array<i64: 2, 32, 32>}, {pipeline_mode = #tpu.pipeline_mode<synchronous>, transform_indices = @transform_8, window_bounds = array<i64: 2, 256, 128>}, {pipeline_mode = #tpu.pipeline_mode<synchronous>, transform_indices = @transform_9, window_bounds = array<i64: 2, 16, 32>}, {pipeline_mode = #tpu.pipeline_mode<synchronous>, transform_indices = @transform_10, window_bounds = array<i64: 1, 128>}, {pipeline_mode = #tpu.pipeline_mode<synchronous>, transform_indices = @transform_11, window_bounds = array<i64: 3, 128, 256>}, {pipeline_mode = #tpu.pipeline_mode<synchronous>, transform_indices = @transform_12, window_bounds = array<i64: 2, 16, 16>}, {pipeline_mode = #tpu.pipeline_mode<synchronous>, transform_indices = @transform_13, window_bounds = array<i64: 2, 256, 128>}, {pipeline_mode = #tpu.pipeline_mode<synchronous>, transform_indices = @transform_14, window_bounds = array<i64: 2, 8, 16>}, {pipeline_mode = #tpu.pipeline_mode<synchronous>, transform_indices = @transform_15, window_bounds = array<i64: 1, 128>}, {pipeline_mode = #tpu.pipeline_mode<synchronous>, transform_indices = @transform_16, window_bounds = array<i64: 8, 128, 16>}, {pipeline_mode = #tpu.pipeline_mode<synchronous>, transform_indices = @transform_17, window_bounds = array<i64: 1, 16>}, {pipeline_mode = #tpu.pipeline_mode<synchronous>, transform_indices = @transform_18, window_bounds = array<i64: 16, 6>}, {pipeline_mode = #tpu.pipeline_mode<synchronous>, transform_indices = @transform_19, window_bounds = array<i64: 1, 6>}, {transform_indices = @transform_20, window_bounds = array<i64: 1, 1, 6>}]} {
    %c0 = arith.constant 0 : index
    %c0_0 = arith.constant 0 : index
    %c0_1 = arith.constant 0 : index
    %0 = vector.load %arg1[%c0, %c0_0, %c0_1] : memref<1x64x192xf32, #tpu.memory_space<vmem>>, vector<1x64x192xf32>
    %1 = vector.shape_cast %0 : vector<1x64x192xf32> to vector<64x192xf32>
    %c1 = arith.constant 1 : index
    %c0_2 = arith.constant 0 : index
    %c0_3 = arith.constant 0 : index
    %2 = vector.load %arg2[%c1, %c0_2, %c0_3] : memref<3x192x256xf32, #tpu.memory_space<vmem>>, vector<1x192x256xf32>
    %3 = vector.shape_cast %2 : vector<1x192x256xf32> to vector<192x256xf32>
    %cst = arith.constant dense<0.000000e+00> : vector<64x256xf32>
    %4 = tpu.matmul %1, %3, %cst {dimension_numbers = #tpu.dot_dimension_numbers<[1], [0], [0], [1], [0, 0, 1, 1], [], []>} : vector<64x192xf32>, vector<192x256xf32>, vector<64x256xf32> -> vector<64x256xf32>
    %c0_4 = arith.constant 0 : index
    %c0_5 = arith.constant 0 : index
    %c0_6 = arith.constant 0 : index
    %5 = vector.load %arg3[%c0_4, %c0_5, %c0_6] : memref<2x64x64xf32, #tpu.memory_space<vmem>>, vector<1x64x64xf32>
    %6 = vector.shape_cast %5 : vector<1x64x64xf32> to vector<64x64xf32>
    %c0_7 = arith.constant 0 : index
    %c0_8 = arith.constant 0 : index
    %c0_9 = arith.constant 0 : index
    %7 = vector.load %arg2[%c0_7, %c0_8, %c0_9] : memref<3x192x256xf32, #tpu.memory_space<vmem>>, vector<1x192x256xf32>
    %8 = vector.shape_cast %7 : vector<1x192x256xf32> to vector<192x256xf32>
    %cst_10 = arith.constant dense<0.000000e+00> : vector<64x256xf32>
    %9 = tpu.matmul %1, %8, %cst_10 {dimension_numbers = #tpu.dot_dimension_numbers<[1], [0], [0], [1], [0, 0, 1, 1], [], []>} : vector<64x192xf32>, vector<192x256xf32>, vector<64x256xf32> -> vector<64x256xf32>
    %cst_11 = arith.constant dense<0.000000e+00> : vector<64x256xf32>
    %10 = tpu.matmul %6, %9, %cst_11 {dimension_numbers = #tpu.dot_dimension_numbers<[1], [0], [0], [1], [0, 0, 1, 1], [], []>} : vector<64x64xf32>, vector<64x256xf32>, vector<64x256xf32> -> vector<64x256xf32>
    %11 = arith.addf %4, %10 : vector<64x256xf32>
    %c1_12 = arith.constant 1 : index
    %c0_13 = arith.constant 0 : index
    %c0_14 = arith.constant 0 : index
    %12 = vector.load %arg3[%c1_12, %c0_13, %c0_14] : memref<2x64x64xf32, #tpu.memory_space<vmem>>, vector<1x64x64xf32>
    %13 = vector.shape_cast %12 : vector<1x64x64xf32> to vector<64x64xf32>
    %c2 = arith.constant 2 : index
    %c0_15 = arith.constant 0 : index
    %c0_16 = arith.constant 0 : index
    %14 = vector.load %arg2[%c2, %c0_15, %c0_16] : memref<3x192x256xf32, #tpu.memory_space<vmem>>, vector<1x192x256xf32>
    %15 = vector.shape_cast %14 : vector<1x192x256xf32> to vector<192x256xf32>
    %cst_17 = arith.constant dense<0.000000e+00> : vector<64x256xf32>
    %16 = tpu.matmul %1, %15, %cst_17 {dimension_numbers = #tpu.dot_dimension_numbers<[1], [0], [0], [1], [0, 0, 1, 1], [], []>} : vector<64x192xf32>, vector<192x256xf32>, vector<64x256xf32> -> vector<64x256xf32>
    %cst_18 = arith.constant dense<0.000000e+00> : vector<64x256xf32>
    %17 = tpu.matmul %13, %16, %cst_18 {dimension_numbers = #tpu.dot_dimension_numbers<[1], [0], [0], [1], [0, 0, 1, 1], [], []>} : vector<64x64xf32>, vector<64x256xf32>, vector<64x256xf32> -> vector<64x256xf32>
    %18 = arith.addf %11, %17 : vector<64x256xf32>
    %c0_19 = arith.constant 0 : index
    %c0_20 = arith.constant 0 : index
    %c0_21 = arith.constant 0 : index
    %19 = vector.load %arg4[%c0_19, %c0_20, %c0_21] : memref<2x256x128xf32, #tpu.memory_space<vmem>>, vector<1x256x128xf32>
    %20 = vector.shape_cast %19 : vector<1x256x128xf32> to vector<256x128xf32>
    %cst_22 = arith.constant dense<0.000000e+00> : vector<64x128xf32>
    %21 = tpu.matmul %18, %20, %cst_22 {dimension_numbers = #tpu.dot_dimension_numbers<[1], [0], [0], [1], [0, 0, 1, 1], [], []>} : vector<64x256xf32>, vector<256x128xf32>, vector<64x128xf32> -> vector<64x128xf32>
    %c1_23 = arith.constant 1 : index
    %c0_24 = arith.constant 0 : index
    %c0_25 = arith.constant 0 : index
    %22 = vector.load %arg4[%c1_23, %c0_24, %c0_25] : memref<2x256x128xf32, #tpu.memory_space<vmem>>, vector<1x256x128xf32>
    %23 = vector.shape_cast %22 : vector<1x256x128xf32> to vector<256x128xf32>
    %cst_26 = arith.constant dense<0.000000e+00> : vector<64x128xf32>
    %24 = tpu.matmul %18, %23, %cst_26 {dimension_numbers = #tpu.dot_dimension_numbers<[1], [0], [0], [1], [0, 0, 1, 1], [], []>} : vector<64x256xf32>, vector<256x128xf32>, vector<64x128xf32> -> vector<64x128xf32>
    %25 = arith.maximumf %21, %24 : vector<64x128xf32>
    %c0_27 = arith.constant 0 : index
    %c0_28 = arith.constant 0 : index
    %c0_29 = arith.constant 0 : index
    %26 = vector.load %arg5[%c0_27, %c0_28, %c0_29] : memref<2x32x64xf32, #tpu.memory_space<vmem>>, vector<1x32x64xf32>
    %27 = vector.shape_cast %26 : vector<1x32x64xf32> to vector<32x64xf32>
    %cst_30 = arith.constant dense<0.000000e+00> : vector<32x128xf32>
    %28 = tpu.matmul %27, %25, %cst_30 {dimension_numbers = #tpu.dot_dimension_numbers<[1], [0], [0], [1], [0, 0, 1, 1], [], []>} : vector<32x64xf32>, vector<64x128xf32>, vector<32x128xf32> -> vector<32x128xf32>
    %c1_31 = arith.constant 1 : index
    %c0_32 = arith.constant 0 : index
    %c0_33 = arith.constant 0 : index
    %29 = vector.load %arg5[%c1_31, %c0_32, %c0_33] : memref<2x32x64xf32, #tpu.memory_space<vmem>>, vector<1x32x64xf32>
    %30 = vector.shape_cast %29 : vector<1x32x64xf32> to vector<32x64xf32>
    %cst_34 = arith.constant dense<0.000000e+00> : vector<32x128xf32>
    %31 = tpu.matmul %30, %25, %cst_34 {dimension_numbers = #tpu.dot_dimension_numbers<[1], [0], [0], [1], [0, 0, 1, 1], [], []>} : vector<32x64xf32>, vector<64x128xf32>, vector<32x128xf32> -> vector<32x128xf32>
    %32 = arith.maximumf %28, %31 : vector<32x128xf32>
    %c0_35 = arith.constant 0 : index
    %c0_36 = arith.constant 0 : index
    %33 = vector.load %arg6[%c0_35, %c0_36] : memref<1x128xf32, #tpu.memory_space<vmem>>, vector<1x128xf32>
    %34 = vector.broadcast %33 : vector<1x128xf32> to vector<32x128xf32>
    %35 = arith.addf %32, %34 : vector<32x128xf32>
    %cst_37 = arith.constant 0.000000e+00 : f32
    %36 = vector.broadcast %cst_37 : f32 to vector<32x128xf32>
    %37 = arith.maximumf %35, %36 : vector<32x128xf32>
    %c1_38 = arith.constant 1 : index
    %c0_39 = arith.constant 0 : index
    %c0_40 = arith.constant 0 : index
    %38 = vector.load %arg7[%c1_38, %c0_39, %c0_40] : memref<3x128x256xf32, #tpu.memory_space<vmem>>, vector<1x128x256xf32>
    %39 = vector.shape_cast %38 : vector<1x128x256xf32> to vector<128x256xf32>
    %cst_41 = arith.constant dense<0.000000e+00> : vector<32x256xf32>
    %40 = tpu.matmul %37, %39, %cst_41 {dimension_numbers = #tpu.dot_dimension_numbers<[1], [0], [0], [1], [0, 0, 1, 1], [], []>} : vector<32x128xf32>, vector<128x256xf32>, vector<32x256xf32> -> vector<32x256xf32>
    %c0_42 = arith.constant 0 : index
    %c0_43 = arith.constant 0 : index
    %c0_44 = arith.constant 0 : index
    %41 = vector.load %arg8[%c0_42, %c0_43, %c0_44] : memref<2x32x32xf32, #tpu.memory_space<vmem>>, vector<1x32x32xf32>
    %42 = vector.shape_cast %41 : vector<1x32x32xf32> to vector<32x32xf32>
    %c0_45 = arith.constant 0 : index
    %c0_46 = arith.constant 0 : index
    %c0_47 = arith.constant 0 : index
    %43 = vector.load %arg7[%c0_45, %c0_46, %c0_47] : memref<3x128x256xf32, #tpu.memory_space<vmem>>, vector<1x128x256xf32>
    %44 = vector.shape_cast %43 : vector<1x128x256xf32> to vector<128x256xf32>
    %cst_48 = arith.constant dense<0.000000e+00> : vector<32x256xf32>
    %45 = tpu.matmul %37, %44, %cst_48 {dimension_numbers = #tpu.dot_dimension_numbers<[1], [0], [0], [1], [0, 0, 1, 1], [], []>} : vector<32x128xf32>, vector<128x256xf32>, vector<32x256xf32> -> vector<32x256xf32>
    %cst_49 = arith.constant dense<0.000000e+00> : vector<32x256xf32>
    %46 = tpu.matmul %42, %45, %cst_49 {dimension_numbers = #tpu.dot_dimension_numbers<[1], [0], [0], [1], [0, 0, 1, 1], [], []>} : vector<32x32xf32>, vector<32x256xf32>, vector<32x256xf32> -> vector<32x256xf32>
    %47 = arith.addf %40, %46 : vector<32x256xf32>
    %c1_50 = arith.constant 1 : index
    %c0_51 = arith.constant 0 : index
    %c0_52 = arith.constant 0 : index
    %48 = vector.load %arg8[%c1_50, %c0_51, %c0_52] : memref<2x32x32xf32, #tpu.memory_space<vmem>>, vector<1x32x32xf32>
    %49 = vector.shape_cast %48 : vector<1x32x32xf32> to vector<32x32xf32>
    %c2_53 = arith.constant 2 : index
    %c0_54 = arith.constant 0 : index
    %c0_55 = arith.constant 0 : index
    %50 = vector.load %arg7[%c2_53, %c0_54, %c0_55] : memref<3x128x256xf32, #tpu.memory_space<vmem>>, vector<1x128x256xf32>
    %51 = vector.shape_cast %50 : vector<1x128x256xf32> to vector<128x256xf32>
    %cst_56 = arith.constant dense<0.000000e+00> : vector<32x256xf32>
    %52 = tpu.matmul %37, %51, %cst_56 {dimension_numbers = #tpu.dot_dimension_numbers<[1], [0], [0], [1], [0, 0, 1, 1], [], []>} : vector<32x128xf32>, vector<128x256xf32>, vector<32x256xf32> -> vector<32x256xf32>
    %cst_57 = arith.constant dense<0.000000e+00> : vector<32x256xf32>
    %53 = tpu.matmul %49, %52, %cst_57 {dimension_numbers = #tpu.dot_dimension_numbers<[1], [0], [0], [1], [0, 0, 1, 1], [], []>} : vector<32x32xf32>, vector<32x256xf32>, vector<32x256xf32> -> vector<32x256xf32>
    %54 = arith.addf %47, %53 : vector<32x256xf32>
    %c0_58 = arith.constant 0 : index
    %c0_59 = arith.constant 0 : index
    %c0_60 = arith.constant 0 : index
    %55 = vector.load %arg9[%c0_58, %c0_59, %c0_60] : memref<2x256x128xf32, #tpu.memory_space<vmem>>, vector<1x256x128xf32>
    %56 = vector.shape_cast %55 : vector<1x256x128xf32> to vector<256x128xf32>
    %cst_61 = arith.constant dense<0.000000e+00> : vector<32x128xf32>
    %57 = tpu.matmul %54, %56, %cst_61 {dimension_numbers = #tpu.dot_dimension_numbers<[1], [0], [0], [1], [0, 0, 1, 1], [], []>} : vector<32x256xf32>, vector<256x128xf32>, vector<32x128xf32> -> vector<32x128xf32>
    %c1_62 = arith.constant 1 : index
    %c0_63 = arith.constant 0 : index
    %c0_64 = arith.constant 0 : index
    %58 = vector.load %arg9[%c1_62, %c0_63, %c0_64] : memref<2x256x128xf32, #tpu.memory_space<vmem>>, vector<1x256x128xf32>
    %59 = vector.shape_cast %58 : vector<1x256x128xf32> to vector<256x128xf32>
    %cst_65 = arith.constant dense<0.000000e+00> : vector<32x128xf32>
    %60 = tpu.matmul %54, %59, %cst_65 {dimension_numbers = #tpu.dot_dimension_numbers<[1], [0], [0], [1], [0, 0, 1, 1], [], []>} : vector<32x256xf32>, vector<256x128xf32>, vector<32x128xf32> -> vector<32x128xf32>
    %61 = arith.maximumf %57, %60 : vector<32x128xf32>
    %c0_66 = arith.constant 0 : index
    %c0_67 = arith.constant 0 : index
    %c0_68 = arith.constant 0 : index
    %62 = vector.load %arg10[%c0_66, %c0_67, %c0_68] : memref<2x16x32xf32, #tpu.memory_space<vmem>>, vector<1x16x32xf32>
    %63 = vector.shape_cast %62 : vector<1x16x32xf32> to vector<16x32xf32>
    %cst_69 = arith.constant dense<0.000000e+00> : vector<16x128xf32>
    %64 = tpu.matmul %63, %61, %cst_69 {dimension_numbers = #tpu.dot_dimension_numbers<[1], [0], [0], [1], [0, 0, 1, 1], [], []>} : vector<16x32xf32>, vector<32x128xf32>, vector<16x128xf32> -> vector<16x128xf32>
    %c1_70 = arith.constant 1 : index
    %c0_71 = arith.constant 0 : index
    %c0_72 = arith.constant 0 : index
    %65 = vector.load %arg10[%c1_70, %c0_71, %c0_72] : memref<2x16x32xf32, #tpu.memory_space<vmem>>, vector<1x16x32xf32>
    %66 = vector.shape_cast %65 : vector<1x16x32xf32> to vector<16x32xf32>
    %cst_73 = arith.constant dense<0.000000e+00> : vector<16x128xf32>
    %67 = tpu.matmul %66, %61, %cst_73 {dimension_numbers = #tpu.dot_dimension_numbers<[1], [0], [0], [1], [0, 0, 1, 1], [], []>} : vector<16x32xf32>, vector<32x128xf32>, vector<16x128xf32> -> vector<16x128xf32>
    %68 = arith.maximumf %64, %67 : vector<16x128xf32>
    %c0_74 = arith.constant 0 : index
    %c0_75 = arith.constant 0 : index
    %69 = vector.load %arg11[%c0_74, %c0_75] : memref<1x128xf32, #tpu.memory_space<vmem>>, vector<1x128xf32>
    %70 = vector.broadcast %69 : vector<1x128xf32> to vector<16x128xf32>
    %71 = arith.addf %68, %70 : vector<16x128xf32>
    %cst_76 = arith.constant 0.000000e+00 : f32
    %72 = vector.broadcast %cst_76 : f32 to vector<16x128xf32>
    %73 = arith.maximumf %71, %72 : vector<16x128xf32>
    %c1_77 = arith.constant 1 : index
    %c0_78 = arith.constant 0 : index
    %c0_79 = arith.constant 0 : index
    %74 = vector.load %arg12[%c1_77, %c0_78, %c0_79] : memref<3x128x256xf32, #tpu.memory_space<vmem>>, vector<1x128x256xf32>
    %75 = vector.shape_cast %74 : vector<1x128x256xf32> to vector<128x256xf32>
    %cst_80 = arith.constant dense<0.000000e+00> : vector<16x256xf32>
    %76 = tpu.matmul %73, %75, %cst_80 {dimension_numbers = #tpu.dot_dimension_numbers<[1], [0], [0], [1], [0, 0, 1, 1], [], []>} : vector<16x128xf32>, vector<128x256xf32>, vector<16x256xf32> -> vector<16x256xf32>
    %c0_81 = arith.constant 0 : index
    %c0_82 = arith.constant 0 : index
    %c0_83 = arith.constant 0 : index
    %77 = vector.load %arg13[%c0_81, %c0_82, %c0_83] : memref<2x16x16xf32, #tpu.memory_space<vmem>>, vector<1x16x16xf32>
    %78 = vector.shape_cast %77 : vector<1x16x16xf32> to vector<16x16xf32>
    %c0_84 = arith.constant 0 : index
    %c0_85 = arith.constant 0 : index
    %c0_86 = arith.constant 0 : index
    %79 = vector.load %arg12[%c0_84, %c0_85, %c0_86] : memref<3x128x256xf32, #tpu.memory_space<vmem>>, vector<1x128x256xf32>
    %80 = vector.shape_cast %79 : vector<1x128x256xf32> to vector<128x256xf32>
    %cst_87 = arith.constant dense<0.000000e+00> : vector<16x256xf32>
    %81 = tpu.matmul %73, %80, %cst_87 {dimension_numbers = #tpu.dot_dimension_numbers<[1], [0], [0], [1], [0, 0, 1, 1], [], []>} : vector<16x128xf32>, vector<128x256xf32>, vector<16x256xf32> -> vector<16x256xf32>
    %cst_88 = arith.constant dense<0.000000e+00> : vector<16x256xf32>
    %82 = tpu.matmul %78, %81, %cst_88 {dimension_numbers = #tpu.dot_dimension_numbers<[1], [0], [0], [1], [0, 0, 1, 1], [], []>} : vector<16x16xf32>, vector<16x256xf32>, vector<16x256xf32> -> vector<16x256xf32>
    %83 = arith.addf %76, %82 : vector<16x256xf32>
    %c1_89 = arith.constant 1 : index
    %c0_90 = arith.constant 0 : index
    %c0_91 = arith.constant 0 : index
    %84 = vector.load %arg13[%c1_89, %c0_90, %c0_91] : memref<2x16x16xf32, #tpu.memory_space<vmem>>, vector<1x16x16xf32>
    %85 = vector.shape_cast %84 : vector<1x16x16xf32> to vector<16x16xf32>
    %c2_92 = arith.constant 2 : index
    %c0_93 = arith.constant 0 : index
    %c0_94 = arith.constant 0 : index
    %86 = vector.load %arg12[%c2_92, %c0_93, %c0_94] : memref<3x128x256xf32, #tpu.memory_space<vmem>>, vector<1x128x256xf32>
    %87 = vector.shape_cast %86 : vector<1x128x256xf32> to vector<128x256xf32>
    %cst_95 = arith.constant dense<0.000000e+00> : vector<16x256xf32>
    %88 = tpu.matmul %73, %87, %cst_95 {dimension_numbers = #tpu.dot_dimension_numbers<[1], [0], [0], [1], [0, 0, 1, 1], [], []>} : vector<16x128xf32>, vector<128x256xf32>, vector<16x256xf32> -> vector<16x256xf32>
    %cst_96 = arith.constant dense<0.000000e+00> : vector<16x256xf32>
    %89 = tpu.matmul %85, %88, %cst_96 {dimension_numbers = #tpu.dot_dimension_numbers<[1], [0], [0], [1], [0, 0, 1, 1], [], []>} : vector<16x16xf32>, vector<16x256xf32>, vector<16x256xf32> -> vector<16x256xf32>
    %90 = arith.addf %83, %89 : vector<16x256xf32>
    %c0_97 = arith.constant 0 : index
    %c0_98 = arith.constant 0 : index
    %c0_99 = arith.constant 0 : index
    %91 = vector.load %arg14[%c0_97, %c0_98, %c0_99] : memref<2x256x128xf32, #tpu.memory_space<vmem>>, vector<1x256x128xf32>
    %92 = vector.shape_cast %91 : vector<1x256x128xf32> to vector<256x128xf32>
    %cst_100 = arith.constant dense<0.000000e+00> : vector<16x128xf32>
    %93 = tpu.matmul %90, %92, %cst_100 {dimension_numbers = #tpu.dot_dimension_numbers<[1], [0], [0], [1], [0, 0, 1, 1], [], []>} : vector<16x256xf32>, vector<256x128xf32>, vector<16x128xf32> -> vector<16x128xf32>
    %c1_101 = arith.constant 1 : index
    %c0_102 = arith.constant 0 : index
    %c0_103 = arith.constant 0 : index
    %94 = vector.load %arg14[%c1_101, %c0_102, %c0_103] : memref<2x256x128xf32, #tpu.memory_space<vmem>>, vector<1x256x128xf32>
    %95 = vector.shape_cast %94 : vector<1x256x128xf32> to vector<256x128xf32>
    %cst_104 = arith.constant dense<0.000000e+00> : vector<16x128xf32>
    %96 = tpu.matmul %90, %95, %cst_104 {dimension_numbers = #tpu.dot_dimension_numbers<[1], [0], [0], [1], [0, 0, 1, 1], [], []>} : vector<16x256xf32>, vector<256x128xf32>, vector<16x128xf32> -> vector<16x128xf32>
    %97 = arith.maximumf %93, %96 : vector<16x128xf32>
    %c0_105 = arith.constant 0 : index
    %c0_106 = arith.constant 0 : index
    %c0_107 = arith.constant 0 : index
    %98 = vector.load %arg15[%c0_105, %c0_106, %c0_107] : memref<2x8x16xf32, #tpu.memory_space<vmem>>, vector<1x8x16xf32>
    %99 = vector.shape_cast %98 : vector<1x8x16xf32> to vector<8x16xf32>
    %cst_108 = arith.constant dense<0.000000e+00> : vector<8x128xf32>
    %100 = tpu.matmul %99, %97, %cst_108 {dimension_numbers = #tpu.dot_dimension_numbers<[1], [0], [0], [1], [0, 0, 1, 1], [], []>} : vector<8x16xf32>, vector<16x128xf32>, vector<8x128xf32> -> vector<8x128xf32>
    %c1_109 = arith.constant 1 : index
    %c0_110 = arith.constant 0 : index
    %c0_111 = arith.constant 0 : index
    %101 = vector.load %arg15[%c1_109, %c0_110, %c0_111] : memref<2x8x16xf32, #tpu.memory_space<vmem>>, vector<1x8x16xf32>
    %102 = vector.shape_cast %101 : vector<1x8x16xf32> to vector<8x16xf32>
    %cst_112 = arith.constant dense<0.000000e+00> : vector<8x128xf32>
    %103 = tpu.matmul %102, %97, %cst_112 {dimension_numbers = #tpu.dot_dimension_numbers<[1], [0], [0], [1], [0, 0, 1, 1], [], []>} : vector<8x16xf32>, vector<16x128xf32>, vector<8x128xf32> -> vector<8x128xf32>
    %104 = arith.maximumf %100, %103 : vector<8x128xf32>
    %c0_113 = arith.constant 0 : index
    %c0_114 = arith.constant 0 : index
    %105 = vector.load %arg16[%c0_113, %c0_114] : memref<1x128xf32, #tpu.memory_space<vmem>>, vector<1x128xf32>
    %106 = vector.broadcast %105 : vector<1x128xf32> to vector<8x128xf32>
    %107 = arith.addf %104, %106 : vector<8x128xf32>
    %cst_115 = arith.constant 0.000000e+00 : f32
    %108 = vector.broadcast %cst_115 : f32 to vector<8x128xf32>
    %109 = arith.maximumf %107, %108 : vector<8x128xf32>
    %110 = vector.extract_strided_slice %109 {offsets = [0, 0], sizes = [1, 128], strides = [1, 1]} : vector<8x128xf32> to vector<1x128xf32>
    %c0_116 = arith.constant 0 : index
    %c0_117 = arith.constant 0 : index
    %c0_118 = arith.constant 0 : index
    %111 = vector.load %arg17[%c0_116, %c0_117, %c0_118] : memref<8x128x16xf32, #tpu.memory_space<vmem>>, vector<1x128x16xf32>
    %112 = vector.shape_cast %111 : vector<1x128x16xf32> to vector<128x16xf32>
    %cst_119 = arith.constant dense<0.000000e+00> : vector<1x16xf32>
    %113 = tpu.matmul %110, %112, %cst_119 {dimension_numbers = #tpu.dot_dimension_numbers<[1], [0], [0], [1], [0, 0, 1, 1], [], []>} : vector<1x128xf32>, vector<128x16xf32>, vector<1x16xf32> -> vector<1x16xf32>
    %114 = vector.extract_strided_slice %109 {offsets = [1, 0], sizes = [1, 128], strides = [1, 1]} : vector<8x128xf32> to vector<1x128xf32>
    %c1_120 = arith.constant 1 : index
    %c0_121 = arith.constant 0 : index
    %c0_122 = arith.constant 0 : index
    %115 = vector.load %arg17[%c1_120, %c0_121, %c0_122] : memref<8x128x16xf32, #tpu.memory_space<vmem>>, vector<1x128x16xf32>
    %116 = vector.shape_cast %115 : vector<1x128x16xf32> to vector<128x16xf32>
    %cst_123 = arith.constant dense<0.000000e+00> : vector<1x16xf32>
    %117 = tpu.matmul %114, %116, %cst_123 {dimension_numbers = #tpu.dot_dimension_numbers<[1], [0], [0], [1], [0, 0, 1, 1], [], []>} : vector<1x128xf32>, vector<128x16xf32>, vector<1x16xf32> -> vector<1x16xf32>
    %118 = arith.addf %113, %117 : vector<1x16xf32>
    %119 = vector.extract_strided_slice %109 {offsets = [2, 0], sizes = [1, 128], strides = [1, 1]} : vector<8x128xf32> to vector<1x128xf32>
    %c2_124 = arith.constant 2 : index
    %c0_125 = arith.constant 0 : index
    %c0_126 = arith.constant 0 : index
    %120 = vector.load %arg17[%c2_124, %c0_125, %c0_126] : memref<8x128x16xf32, #tpu.memory_space<vmem>>, vector<1x128x16xf32>
    %121 = vector.shape_cast %120 : vector<1x128x16xf32> to vector<128x16xf32>
    %cst_127 = arith.constant dense<0.000000e+00> : vector<1x16xf32>
    %122 = tpu.matmul %119, %121, %cst_127 {dimension_numbers = #tpu.dot_dimension_numbers<[1], [0], [0], [1], [0, 0, 1, 1], [], []>} : vector<1x128xf32>, vector<128x16xf32>, vector<1x16xf32> -> vector<1x16xf32>
    %123 = arith.addf %118, %122 : vector<1x16xf32>
    %124 = vector.extract_strided_slice %109 {offsets = [3, 0], sizes = [1, 128], strides = [1, 1]} : vector<8x128xf32> to vector<1x128xf32>
    %c3 = arith.constant 3 : index
    %c0_128 = arith.constant 0 : index
    %c0_129 = arith.constant 0 : index
    %125 = vector.load %arg17[%c3, %c0_128, %c0_129] : memref<8x128x16xf32, #tpu.memory_space<vmem>>, vector<1x128x16xf32>
    %126 = vector.shape_cast %125 : vector<1x128x16xf32> to vector<128x16xf32>
    %cst_130 = arith.constant dense<0.000000e+00> : vector<1x16xf32>
    %127 = tpu.matmul %124, %126, %cst_130 {dimension_numbers = #tpu.dot_dimension_numbers<[1], [0], [0], [1], [0, 0, 1, 1], [], []>} : vector<1x128xf32>, vector<128x16xf32>, vector<1x16xf32> -> vector<1x16xf32>
    %128 = arith.addf %123, %127 : vector<1x16xf32>
    %129 = vector.extract_strided_slice %109 {offsets = [4, 0], sizes = [1, 128], strides = [1, 1]} : vector<8x128xf32> to vector<1x128xf32>
    %c4 = arith.constant 4 : index
    %c0_131 = arith.constant 0 : index
    %c0_132 = arith.constant 0 : index
    %130 = vector.load %arg17[%c4, %c0_131, %c0_132] : memref<8x128x16xf32, #tpu.memory_space<vmem>>, vector<1x128x16xf32>
    %131 = vector.shape_cast %130 : vector<1x128x16xf32> to vector<128x16xf32>
    %cst_133 = arith.constant dense<0.000000e+00> : vector<1x16xf32>
    %132 = tpu.matmul %129, %131, %cst_133 {dimension_numbers = #tpu.dot_dimension_numbers<[1], [0], [0], [1], [0, 0, 1, 1], [], []>} : vector<1x128xf32>, vector<128x16xf32>, vector<1x16xf32> -> vector<1x16xf32>
    %133 = arith.addf %128, %132 : vector<1x16xf32>
    %134 = vector.extract_strided_slice %109 {offsets = [5, 0], sizes = [1, 128], strides = [1, 1]} : vector<8x128xf32> to vector<1x128xf32>
    %c5 = arith.constant 5 : index
    %c0_134 = arith.constant 0 : index
    %c0_135 = arith.constant 0 : index
    %135 = vector.load %arg17[%c5, %c0_134, %c0_135] : memref<8x128x16xf32, #tpu.memory_space<vmem>>, vector<1x128x16xf32>
    %136 = vector.shape_cast %135 : vector<1x128x16xf32> to vector<128x16xf32>
    %cst_136 = arith.constant dense<0.000000e+00> : vector<1x16xf32>
    %137 = tpu.matmul %134, %136, %cst_136 {dimension_numbers = #tpu.dot_dimension_numbers<[1], [0], [0], [1], [0, 0, 1, 1], [], []>} : vector<1x128xf32>, vector<128x16xf32>, vector<1x16xf32> -> vector<1x16xf32>
    %138 = arith.addf %133, %137 : vector<1x16xf32>
    %139 = vector.extract_strided_slice %109 {offsets = [6, 0], sizes = [1, 128], strides = [1, 1]} : vector<8x128xf32> to vector<1x128xf32>
    %c6 = arith.constant 6 : index
    %c0_137 = arith.constant 0 : index
    %c0_138 = arith.constant 0 : index
    %140 = vector.load %arg17[%c6, %c0_137, %c0_138] : memref<8x128x16xf32, #tpu.memory_space<vmem>>, vector<1x128x16xf32>
    %141 = vector.shape_cast %140 : vector<1x128x16xf32> to vector<128x16xf32>
    %cst_139 = arith.constant dense<0.000000e+00> : vector<1x16xf32>
    %142 = tpu.matmul %139, %141, %cst_139 {dimension_numbers = #tpu.dot_dimension_numbers<[1], [0], [0], [1], [0, 0, 1, 1], [], []>} : vector<1x128xf32>, vector<128x16xf32>, vector<1x16xf32> -> vector<1x16xf32>
    %143 = arith.addf %138, %142 : vector<1x16xf32>
    %144 = vector.extract_strided_slice %109 {offsets = [7, 0], sizes = [1, 128], strides = [1, 1]} : vector<8x128xf32> to vector<1x128xf32>
    %c7 = arith.constant 7 : index
    %c0_140 = arith.constant 0 : index
    %c0_141 = arith.constant 0 : index
    %145 = vector.load %arg17[%c7, %c0_140, %c0_141] : memref<8x128x16xf32, #tpu.memory_space<vmem>>, vector<1x128x16xf32>
    %146 = vector.shape_cast %145 : vector<1x128x16xf32> to vector<128x16xf32>
    %cst_142 = arith.constant dense<0.000000e+00> : vector<1x16xf32>
    %147 = tpu.matmul %144, %146, %cst_142 {dimension_numbers = #tpu.dot_dimension_numbers<[1], [0], [0], [1], [0, 0, 1, 1], [], []>} : vector<1x128xf32>, vector<128x16xf32>, vector<1x16xf32> -> vector<1x16xf32>
    %148 = arith.addf %143, %147 : vector<1x16xf32>
    %c0_143 = arith.constant 0 : index
    %c0_144 = arith.constant 0 : index
    %149 = vector.load %arg18[%c0_143, %c0_144] : memref<1x16xf32, #tpu.memory_space<vmem>>, vector<1x16xf32>
    %150 = arith.addf %148, %149 : vector<1x16xf32>
    %cst_145 = arith.constant 0.000000e+00 : f32
    %151 = vector.broadcast %cst_145 : f32 to vector<1x16xf32>
    %152 = arith.maximumf %150, %151 : vector<1x16xf32>
    %c0_146 = arith.constant 0 : index
    %c0_147 = arith.constant 0 : index
    %153 = vector.load %arg19[%c0_146, %c0_147] : memref<16x6xf32, #tpu.memory_space<vmem>>, vector<16x6xf32>
    %cst_148 = arith.constant dense<0.000000e+00> : vector<1x6xf32>
    %154 = tpu.matmul %152, %153, %cst_148 {dimension_numbers = #tpu.dot_dimension_numbers<[1], [0], [0], [1], [0, 0, 1, 1], [], []>} : vector<1x16xf32>, vector<16x6xf32>, vector<1x6xf32> -> vector<1x6xf32>
    %c0_149 = arith.constant 0 : index
    %c0_150 = arith.constant 0 : index
    %155 = vector.load %arg20[%c0_149, %c0_150] : memref<1x6xf32, #tpu.memory_space<vmem>>, vector<1x6xf32>
    %156 = arith.addf %154, %155 : vector<1x6xf32>
    %cst_151 = arith.constant dense<0xFF800000> : vector<1xf32>
    %157 = vector.multi_reduction <maximumf>, %156, %cst_151 [1] : vector<1x6xf32> to vector<1xf32>
    %158 = vector.shape_cast %157 : vector<1xf32> to vector<1x1xf32>
    %159 = vector.broadcast %158 : vector<1x1xf32> to vector<1x6xf32>
    %160 = arith.subf %156, %159 : vector<1x6xf32>
    %161 = math.exp %160 : vector<1x6xf32>
    %cst_152 = arith.constant dense<0.000000e+00> : vector<1xf32>
    %162 = vector.multi_reduction <add>, %161, %cst_152 [1] : vector<1x6xf32> to vector<1xf32>
    %163 = vector.shape_cast %162 : vector<1xf32> to vector<1x1xf32>
    %164 = math.log %163 : vector<1x1xf32>
    %165 = arith.addf %158, %164 : vector<1x1xf32>
    %166 = vector.broadcast %165 : vector<1x1xf32> to vector<1x6xf32>
    %167 = arith.subf %156, %166 : vector<1x6xf32>
    %c0_153 = arith.constant 0 : index
    %c0_154 = arith.constant 0 : index
    %c0_155 = arith.constant 0 : index
    %168 = vector.load %arg21[%c0_153, %c0_154, %c0_155] : memref<1x1x6xf32, #tpu.memory_space<vmem>>, vector<1x1x6xf32>
    %169 = vector.shape_cast %168 : vector<1x1x6xf32> to vector<1x6xf32>
    %170 = vector.shape_cast %167 : vector<1x6xf32> to vector<1x1x6xf32>
    tpu.vector_store %arg21[%c0_153, %c0_154, %c0_155], %170 {strides = array<i32>} : memref<1x1x6xf32, #tpu.memory_space<vmem>>, vector<1x1x6xf32>,
    return
  }
  func.func @transform_0(%arg0: i32) -> (i32, i32, i32) {
    %c0_i32 = arith.constant 0 : i32
    %c0_i32_0 = arith.constant 0 : i32
    %c0_i32_1 = arith.constant 0 : i32
    return %arg0, %c0_i32, %c0_i32_0 : i32, i32, i32
  }
  func.func @transform_1(%arg0: i32) -> (i32, i32, i32) {
    %c0_i32 = arith.constant 0 : i32
    %c0_i32_0 = arith.constant 0 : i32
    %c0_i32_1 = arith.constant 0 : i32
    %c0_i32_2 = arith.constant 0 : i32
    return %c0_i32, %c0_i32_0, %c0_i32_1 : i32, i32, i32
  }
  func.func @transform_2(%arg0: i32) -> (i32, i32, i32) {
    %c0_i32 = arith.constant 0 : i32
    %c0_i32_0 = arith.constant 0 : i32
    %c0_i32_1 = arith.constant 0 : i32
    %c0_i32_2 = arith.constant 0 : i32
    return %c0_i32, %c0_i32_0, %c0_i32_1 : i32, i32, i32
  }
  func.func @transform_3(%arg0: i32) -> (i32, i32, i32) {
    %c0_i32 = arith.constant 0 : i32
    %c0_i32_0 = arith.constant 0 : i32
    %c0_i32_1 = arith.constant 0 : i32
    %c0_i32_2 = arith.constant 0 : i32
    return %c0_i32, %c0_i32_0, %c0_i32_1 : i32, i32, i32
  }
  func.func @transform_4(%arg0: i32) -> (i32, i32, i32) {
    %c0_i32 = arith.constant 0 : i32
    %c0_i32_0 = arith.constant 0 : i32
    %c0_i32_1 = arith.constant 0 : i32
    %c0_i32_2 = arith.constant 0 : i32
    return %c0_i32, %c0_i32_0, %c0_i32_1 : i32, i32, i32
  }
  func.func @transform_5(%arg0: i32) -> (i32, i32) {
    %c0_i32 = arith.constant 0 : i32
    %c0_i32_0 = arith.constant 0 : i32
    %c0_i32_1 = arith.constant 0 : i32
    return %c0_i32, %c0_i32_0 : i32, i32
  }
  func.func @transform_6(%arg0: i32) -> (i32, i32, i32) {
    %c0_i32 = arith.constant 0 : i32
    %c0_i32_0 = arith.constant 0 : i32
    %c0_i32_1 = arith.constant 0 : i32
    %c0_i32_2 = arith.constant 0 : i32
    return %c0_i32, %c0_i32_0, %c0_i32_1 : i32, i32, i32
  }
  func.func @transform_7(%arg0: i32) -> (i32, i32, i32) {
    %c0_i32 = arith.constant 0 : i32
    %c0_i32_0 = arith.constant 0 : i32
    %c0_i32_1 = arith.constant 0 : i32
    %c0_i32_2 = arith.constant 0 : i32
    return %c0_i32, %c0_i32_0, %c0_i32_1 : i32, i32, i32
  }
  func.func @transform_8(%arg0: i32) -> (i32, i32, i32) {
    %c0_i32 = arith.constant 0 : i32
    %c0_i32_0 = arith.constant 0 : i32
    %c0_i32_1 = arith.constant 0 : i32
    %c0_i32_2 = arith.constant 0 : i32
    return %c0_i32, %c0_i32_0, %c0_i32_1 : i32, i32, i32
  }
  func.func @transform_9(%arg0: i32) -> (i32, i32, i32) {
    %c0_i32 = arith.constant 0 : i32
    %c0_i32_0 = arith.constant 0 : i32
    %c0_i32_1 = arith.constant 0 : i32
    %c0_i32_2 = arith.constant 0 : i32
    return %c0_i32, %c0_i32_0, %c0_i32_1 : i32, i32, i32
  }
  func.func @transform_10(%arg0: i32) -> (i32, i32) {
    %c0_i32 = arith.constant 0 : i32
    %c0_i32_0 = arith.constant 0 : i32
    %c0_i32_1 = arith.constant 0 : i32
    return %c0_i32, %c0_i32_0 : i32, i32
  }
  func.func @transform_11(%arg0: i32) -> (i32, i32, i32) {
    %c0_i32 = arith.constant 0 : i32
    %c0_i32_0 = arith.constant 0 : i32
    %c0_i32_1 = arith.constant 0 : i32
    %c0_i32_2 = arith.constant 0 : i32
    return %c0_i32, %c0_i32_0, %c0_i32_1 : i32, i32, i32
  }
  func.func @transform_12(%arg0: i32) -> (i32, i32, i32) {
    %c0_i32 = arith.constant 0 : i32
    %c0_i32_0 = arith.constant 0 : i32
    %c0_i32_1 = arith.constant 0 : i32
    %c0_i32_2 = arith.constant 0 : i32
    return %c0_i32, %c0_i32_0, %c0_i32_1 : i32, i32, i32
  }
  func.func @transform_13(%arg0: i32) -> (i32, i32, i32) {
    %c0_i32 = arith.constant 0 : i32
    %c0_i32_0 = arith.constant 0 : i32
    %c0_i32_1 = arith.constant 0 : i32
    %c0_i32_2 = arith.constant 0 : i32
    return %c0_i32, %c0_i32_0, %c0_i32_1 : i32, i32, i32
  }
  func.func @transform_14(%arg0: i32) -> (i32, i32, i32) {
    %c0_i32 = arith.constant 0 : i32
    %c0_i32_0 = arith.constant 0 : i32
    %c0_i32_1 = arith.constant 0 : i32
    %c0_i32_2 = arith.constant 0 : i32
    return %c0_i32, %c0_i32_0, %c0_i32_1 : i32, i32, i32
  }
  func.func @transform_15(%arg0: i32) -> (i32, i32) {
    %c0_i32 = arith.constant 0 : i32
    %c0_i32_0 = arith.constant 0 : i32
    %c0_i32_1 = arith.constant 0 : i32
    return %c0_i32, %c0_i32_0 : i32, i32
  }
  func.func @transform_16(%arg0: i32) -> (i32, i32, i32) {
    %c0_i32 = arith.constant 0 : i32
    %c0_i32_0 = arith.constant 0 : i32
    %c0_i32_1 = arith.constant 0 : i32
    %c0_i32_2 = arith.constant 0 : i32
    return %c0_i32, %c0_i32_0, %c0_i32_1 : i32, i32, i32
  }
  func.func @transform_17(%arg0: i32) -> (i32, i32) {
    %c0_i32 = arith.constant 0 : i32
    %c0_i32_0 = arith.constant 0 : i32
    %c0_i32_1 = arith.constant 0 : i32
    return %c0_i32, %c0_i32_0 : i32, i32
  }
  func.func @transform_18(%arg0: i32) -> (i32, i32) {
    %c0_i32 = arith.constant 0 : i32
    %c0_i32_0 = arith.constant 0 : i32
    %c0_i32_1 = arith.constant 0 : i32
    return %c0_i32, %c0_i32_0 : i32, i32
  }
  func.func @transform_19(%arg0: i32) -> (i32, i32) {
    %c0_i32 = arith.constant 0 : i32
    %c0_i32_0 = arith.constant 0 : i32
    %c0_i32_1 = arith.constant 0 : i32
    return %c0_i32, %c0_i32_0 : i32, i32
  }
  func.func @transform_20(%arg0: i32) -> (i32, i32, i32) {
    %c0_i32 = arith.constant 0 : i32
    %c0_i32_0 = arith.constant 0 : i32
    %c0_i32_1 = arith.constant 0 : i32
    return %arg0, %c0_i32, %c0_i32_0 : i32, i32, i32
  }
}

</mosaic_0001>

<llo_original>
// kernel: net_forward.1
$region0: #{net_forward.1}
  #allocation0 [shape = 'u32[]', space=smem, size = 0x4, offset = 0x4, fixed_abs, tag = 'smem constant byte address 0x4 - core index']
  #allocation1 [shape = 'u32[144,128]{1,0:T(1,128)}', space=vmem, size = 0x12000, scoped, tag = 'internal scratch']
  %s0 = inlined_call_operand.vmem [shape: f32[2,64,192], index: 0, kind: input, shape index: {}]
  %s1 = inlined_call_operand.vmem [shape: f32[3,192,256], index: 1, kind: input, shape index: {}]
  %s2 = inlined_call_operand.hbm [shape: f32[2,64,64], index: 2, kind: input, shape index: {}]
  %s3 = inlined_call_operand.vmem [shape: f32[2,256,128], index: 3, kind: input, shape index: {}]
  %s4 = inlined_call_operand.hbm [shape: f32[2,32,64], index: 4, kind: input, shape index: {}]
  %s5 = inlined_call_operand.vmem [shape: f32[1,128], index: 5, kind: input, shape index: {}]
  %s6 = inlined_call_operand.vmem [shape: f32[3,128,256], index: 6, kind: input, shape index: {}]
  %s7 = inlined_call_operand.hbm [shape: f32[2,32,32], index: 7, kind: input, shape index: {}]
  %s8 = inlined_call_operand.hbm [shape: f32[2,256,128], index: 8, kind: input, shape index: {}]
  %s9 = inlined_call_operand.vmem [shape: f32[2,16,32], index: 9, kind: input, shape index: {}]
  %s10 = inlined_call_operand.vmem [shape: f32[1,128], index: 10, kind: input, shape index: {}]
  %s11 = inlined_call_operand.hbm [shape: f32[3,128,256], index: 11, kind: input, shape index: {}]
  %s12 = inlined_call_operand.hbm [shape: f32[2,16,16], index: 12, kind: input, shape index: {}]
  %s13 = inlined_call_operand.hbm [shape: f32[2,256,128], index: 13, kind: input, shape index: {}]
  %s14 = inlined_call_operand.vmem [shape: f32[2,8,16], index: 14, kind: input, shape index: {}]
  %s15 = inlined_call_operand.vmem [shape: f32[1,128], index: 15, kind: input, shape index: {}]
  %s16 = inlined_call_operand.vmem [shape: f32[8,128,16], index: 16, kind: input, shape index: {}]
  %s17 = inlined_call_operand.vmem [shape: f32[1,16], index: 17, kind: input, shape index: {}]
  %s18 = inlined_call_operand.vmem [shape: f32[16,6], index: 18, kind: input, shape index: {}]
  %s19 = inlined_call_operand.vmem [shape: f32[1,6], index: 19, kind: input, shape index: {}]
  %s20 = inlined_call_operand.hbm [shape: f32[2,1,6], index: 20, kind: output, shape index: {}]
  %s21 = sld [smem:[#allocation0]]
  $region141: #{net_forward.1} parent=0
    _
  %s23 = ssub.s32 1, %s21
  %s24 = scalar_select 0, %s23, %s21
  $region1: #{net_forward.1} parent=0
    #allocation2 [shape = 'u8[65536]{0}', space=vmem, size = 0x10000, scoped, tag = 'input window, operand 2, single buffered']
    #allocation3 [shape = 's32[2]{0}', space=sflag, size = 0x8, scoped, tag = 'scoped memory for net_forward.1']
    #allocation4 [shape = 's32[2]{0}', space=sflag, size = 0x8, scoped, tag = 'scoped memory for net_forward.1']
    #allocation5 [shape = 'u8[32768]{0}', space=vmem, size = 0x8000, scoped, tag = 'input window, operand 4, single buffered']
    #allocation6 [shape = 's32[1]{0}', space=sflag, size = 0x4, scoped, tag = 'scoped memory for net_forward.1']
    #allocation7 [shape = 'u8[32768]{0}', space=vmem, size = 0x8000, scoped, tag = 'input window, operand 7, single buffered']
    #allocation8 [shape = 'u8[262144]{0}', space=vmem, size = 0x40000, scoped, tag = 'input window, operand 8, single buffered']
    #allocation9 [shape = 's32[1]{0}', space=sflag, size = 0x4, scoped, tag = 'scoped memory for net_forward.1']
    #allocation10 [shape = 'u8[393216]{0}', space=vmem, size = 0x60000, scoped, tag = 'input window, operand 11, single buffered']
    #allocation11 [shape = 'u8[16384]{0}', space=vmem, size = 0x4000, scoped, tag = 'input window, operand 12, single buffered']
    #allocation12 [shape = 's32[1]{0}', space=sflag, size = 0x4, scoped, tag = 'scoped memory for net_forward.1']
    #allocation13 [shape = 'u8[262144]{0}', space=vmem, size = 0x40000, scoped, tag = 'input window, operand 13, single buffered']
    #allocation14 [shape = 'u8[1024]{0}', space=vmem, size = 0x400, scoped, tag = 'output window, operand 0']
    %25 = vsyncpa [#allocation3], 0
    %26 = vsyncpa [#allocation6], 0
    %27 = vsyncpa [#allocation9], 0
    %28 = vsyncpa [#allocation12], 0
    %29 = vsyncpa [#allocation4], 0
    %s30 = scalar_lea.sflag [#allocation4], 1
    %31 = vsyncpa %s30, 0
    loop: start=0, step=1, limit=4
    $region2: #{net_forward.1} parent=1 // loop_pre_header
      _
    $region3: #{net_forward.1} parent=1 // loop_header
      %s33 = sphi 0, %s37
      %p34 = scmp.ge.s32.totalorder %s33, 4
      %s43 = sphi 0, %s45
      %s46 = sphi 0, %s43
      %s47 = sphi 0, %s46
      %s63 = sphi 0, %s47
      %s67 = sphi 0, %s67
      %s69 = sphi 0, %s67
      %s70 = sphi 0, %s69
      %s84 = sphi 0, %s70
      %s88 = sphi 0, %s88
      %s90 = sphi 0, %s88
      %s91 = sphi 0, %s90
      %s105 = sphi 0, %s91
      %s109 = sphi 0, %s109
      %s111 = sphi 0, %s109
      %s112 = sphi 0, %s111
      %s126 = sphi 0, %s112
      %s130 = sphi 0, %s130
      %s132 = sphi 0, %s130
      %s133 = sphi 0, %s132
      %s147 = sphi 0, %s133
      %s151 = sphi 0, %s151
      %s153 = sphi 0, %s151
      %s154 = sphi 0, %s153
      %s168 = sphi 0, %s154
      %s172 = sphi 0, %s172
      %s174 = sphi 0, %s172
      %s175 = sphi 0, %s174
      %s189 = sphi 0, %s175
      %s193 = sphi 0, %s193
      %s195 = sphi 0, %s193
      %s196 = sphi 0, %s195
      %s210 = sphi 0, %s196
      %s214 = sphi 0, %s214
      %s216 = sphi 0, %s214
      %s217 = sphi 0, %s216
      %s231 = sphi 0, %s217
      %s235 = sphi 0, %s235
      %s237 = sphi 0, %s235
      %s238 = sphi 0, %s237
      %s252 = sphi 0, %s238
      %s256 = sphi 0, %s256
      %s258 = sphi 0, %s256
      %s259 = sphi 0, %s258
      %s273 = sphi 0, %s259
      %s277 = sphi 0, %s277
      %s279 = sphi 0, %s277
      %s280 = sphi 0, %s279
      %s294 = sphi 0, %s280
      %s298 = sphi 0, %s298
      %s300 = sphi 0, %s298
      %s301 = sphi 0, %s300
      %s315 = sphi 0, %s301
      %s319 = sphi 0, %s319
      %s321 = sphi 0, %s319
      %s322 = sphi 0, %s321
      %s336 = sphi 0, %s322
      %s340 = sphi 0, %s340
      %s342 = sphi 0, %s340
      %s343 = sphi 0, %s342
      %s357 = sphi 0, %s343
      %s361 = sphi 0, %s361
      %s363 = sphi 0, %s361
      %s364 = sphi 0, %s363
      %s378 = sphi 0, %s364
      %s382 = sphi 0, %s382
      %s384 = sphi 0, %s382
      %s385 = sphi 0, %s384
      %s399 = sphi 0, %s385
      %s403 = sphi 0, %s403
      %s405 = sphi 0, %s403
      %s406 = sphi 0, %s405
      %s420 = sphi 0, %s406
      %s424 = sphi 0, %s424
      %s426 = sphi 0, %s424
      %s427 = sphi 0, %s426
      %s441 = sphi 0, %s427
      %s445 = sphi 0, %s445
      %s447 = sphi 0, %s445
      %s448 = sphi 0, %s447
      %s462 = sphi 0, %s448
      %s468 = sphi 0, %s470
      %s471 = sphi 0, %s468
      %s472 = sphi 0, %s471
      %s488 = sphi 0, %s472
    $region4: #{net_forward.1} parent=1 // loop_header_branch
      %36 = sbr.rel (%p34) target = $region8
    $region5: #{net_forward.1} parent=1 // loop_body
      %s38 = ssub.s32 %s33, 1
      %s39 = ssub.s32 %s33, 2
      %s40 = sadd.s32 %s33, 1
      %s41 = ssub.s32 %s33, %s40
      %p42 = scmp.eq.s32.totalorder %s41, 0
      %s44 = sadd.s32 %s43, 1
      %s45 = scalar_select %p42, %s43, %s44
      %p48 = pneg %p42
      %p49 = scmp.eq.s32.totalorder %s33, 1
      %p50 = por %p48, %p49
      %p51 = scmp.ne.s32.totalorder %s43, %s46
      %p52 = scmp.eq.s32.totalorder %s33, 0
      %p53 = por %p51, %p52
      %p54 = scmp.ne.s32.totalorder %s43, %s46
      %p55 = scmp.eq.s32.totalorder %s38, 1
      %p56 = por %p54, %p55
      %p57 = scmp.ne.s32.totalorder %s46, %s47
      %p58 = scmp.eq.s32.totalorder %s38, 0
      %p59 = por %p57, %p58
      %p60 = scmp.ne.s32.totalorder %s46, %s47
      %p61 = scmp.eq.s32.totalorder %s39, 1
      %p62 = por %p60, %p61
      %p64 = scmp.ne.s32.totalorder %s47, %s63
      %p65 = scmp.eq.s32.totalorder %s39, 0
      %p66 = por %p64, %p65
      %s68 = sadd.s32 %s67, 1
      %p71 = scmp.eq.s32.totalorder %s33, 1
      %p72 = scmp.ne.s32.totalorder %s67, %s69
      %p73 = scmp.eq.s32.totalorder %s33, 0
      %p74 = por %p72, %p73
      %p75 = scmp.ne.s32.totalorder %s67, %s69
      %p76 = scmp.eq.s32.totalorder %s38, 1
      %p77 = por %p75, %p76
      %p78 = scmp.ne.s32.totalorder %s69, %s70
      %p79 = scmp.eq.s32.totalorder %s38, 0
      %p80 = por %p78, %p79
      %p81 = scmp.ne.s32.totalorder %s69, %s70
      %p82 = scmp.eq.s32.totalorder %s39, 1
      %p83 = por %p81, %p82
      %p85 = scmp.ne.s32.totalorder %s70, %s84
      %p86 = scmp.eq.s32.totalorder %s39, 0
      %p87 = por %p85, %p86
      %s89 = sadd.s32 %s88, 1
      %p92 = scmp.eq.s32.totalorder %s33, 1
      %p93 = scmp.ne.s32.totalorder %s88, %s90
      %p94 = scmp.eq.s32.totalorder %s33, 0
      %p95 = por %p93, %p94
      %p96 = scmp.ne.s32.totalorder %s88, %s90
      %p97 = scmp.eq.s32.totalorder %s38, 1
      %p98 = por %p96, %p97
      %p99 = scmp.ne.s32.totalorder %s90, %s91
      %p100 = scmp.eq.s32.totalorder %s38, 0
      %p101 = por %p99, %p100
      %p102 = scmp.ne.s32.totalorder %s90, %s91
      %p103 = scmp.eq.s32.totalorder %s39, 1
      %p104 = por %p102, %p103
      %p106 = scmp.ne.s32.totalorder %s91, %s105
      %p107 = scmp.eq.s32.totalorder %s39, 0
      %p108 = por %p106, %p107
      %s110 = sadd.s32 %s109, 1
      %p113 = scmp.eq.s32.totalorder %s33, 1
      %p114 = scmp.ne.s32.totalorder %s109, %s111
      %p115 = scmp.eq.s32.totalorder %s33, 0
      %p116 = por %p114, %p115
      %p117 = scmp.ne.s32.totalorder %s109, %s111
      %p118 = scmp.eq.s32.totalorder %s38, 1
      %p119 = por %p117, %p118
      %p120 = scmp.ne.s32.totalorder %s111, %s112
      %p121 = scmp.eq.s32.totalorder %s38, 0
      %p122 = por %p120, %p121
      %p123 = scmp.ne.s32.totalorder %s111, %s112
      %p124 = scmp.eq.s32.totalorder %s39, 1
      %p125 = por %p123, %p124
      %p127 = scmp.ne.s32.totalorder %s112, %s126
      %p128 = scmp.eq.s32.totalorder %s39, 0
      %p129 = por %p127, %p128
      %s131 = sadd.s32 %s130, 1
      %p134 = scmp.eq.s32.totalorder %s33, 1
      %p135 = scmp.ne.s32.totalorder %s130, %s132
      %p136 = scmp.eq.s32.totalorder %s33, 0
      %p137 = por %p135, %p136
      %p138 = scmp.ne.s32.totalorder %s130, %s132
      %p139 = scmp.eq.s32.totalorder %s38, 1
      %p140 = por %p138, %p139
      %p141 = scmp.ne.s32.totalorder %s132, %s133
      %p142 = scmp.eq.s32.totalorder %s38, 0
      %p143 = por %p141, %p142
      %p144 = scmp.ne.s32.totalorder %s132, %s133
      %p145 = scmp.eq.s32.totalorder %s39, 1
      %p146 = por %p144, %p145
      %p148 = scmp.ne.s32.totalorder %s133, %s147
      %p149 = scmp.eq.s32.totalorder %s39, 0
      %p150 = por %p148, %p149
      %s152 = sadd.s32 %s151, 1
      %p155 = scmp.eq.s32.totalorder %s33, 1
      %p156 = scmp.ne.s32.totalorder %s151, %s153
      %p157 = scmp.eq.s32.totalorder %s33, 0
      %p158 = por %p156, %p157
      %p159 = scmp.ne.s32.totalorder %s151, %s153
      %p160 = scmp.eq.s32.totalorder %s38, 1
      %p161 = por %p159, %p160
      %p162 = scmp.ne.s32.totalorder %s153, %s154
      %p163 = scmp.eq.s32.totalorder %s38, 0
      %p164 = por %p162, %p163
      %p165 = scmp.ne.s32.totalorder %s153, %s154
      %p166 = scmp.eq.s32.totalorder %s39, 1
      %p167 = por %p165, %p166
      %p169 = scmp.ne.s32.totalorder %s154, %s168
      %p170 = scmp.eq.s32.totalorder %s39, 0
      %p171 = por %p169, %p170
      %s173 = sadd.s32 %s172, 1
      %p176 = scmp.eq.s32.totalorder %s33, 1
      %p177 = scmp.ne.s32.totalorder %s172, %s174
      %p178 = scmp.eq.s32.totalorder %s33, 0
      %p179 = por %p177, %p178
      %p180 = scmp.ne.s32.totalorder %s172, %s174
      %p181 = scmp.eq.s32.totalorder %s38, 1
      %p182 = por %p180, %p181
      %p183 = scmp.ne.s32.totalorder %s174, %s175
      %p184 = scmp.eq.s32.totalorder %s38, 0
      %p185 = por %p183, %p184
      %p186 = scmp.ne.s32.totalorder %s174, %s175
      %p187 = scmp.eq.s32.totalorder %s39, 1
      %p188 = por %p186, %p187
      %p190 = scmp.ne.s32.totalorder %s175, %s189
      %p191 = scmp.eq.s32.totalorder %s39, 0
      %p192 = por %p190, %p191
      %s194 = sadd.s32 %s193, 1
      %p197 = scmp.eq.s32.totalorder %s33, 1
      %p198 = scmp.ne.s32.totalorder %s193, %s195
      %p199 = scmp.eq.s32.totalorder %s33, 0
      %p200 = por %p198, %p199
      %p201 = scmp.ne.s32.totalorder %s193, %s195
      %p202 = scmp.eq.s32.totalorder %s38, 1
      %p203 = por %p201, %p202
      %p204 = scmp.ne.s32.totalorder %s195, %s196
      %p205 = scmp.eq.s32.totalorder %s38, 0
      %p206 = por %p204, %p205
      %p207 = scmp.ne.s32.totalorder %s195, %s196
      %p208 = scmp.eq.s32.totalorder %s39, 1
      %p209 = por %p207, %p208
      %p211 = scmp.ne.s32.totalorder %s196, %s210
      %p212 = scmp.eq.s32.totalorder %s39, 0
      %p213 = por %p211, %p212
      %s215 = sadd.s32 %s214, 1
      %p218 = scmp.eq.s32.totalorder %s33, 1
      %p219 = scmp.ne.s32.totalorder %s214, %s216
      %p220 = scmp.eq.s32.totalorder %s33, 0
      %p221 = por %p219, %p220
      %p222 = scmp.ne.s32.totalorder %s214, %s216
      %p223 = scmp.eq.s32.totalorder %s38, 1
      %p224 = por %p222, %p223
      %p225 = scmp.ne.s32.totalorder %s216, %s217
      %p226 = scmp.eq.s32.totalorder %s38, 0
      %p227 = por %p225, %p226
      %p228 = scmp.ne.s32.totalorder %s216, %s217
      %p229 = scmp.eq.s32.totalorder %s39, 1
      %p230 = por %p228, %p229
      %p232 = scmp.ne.s32.totalorder %s217, %s231
      %p233 = scmp.eq.s32.totalorder %s39, 0
      %p234 = por %p232, %p233
      %s236 = sadd.s32 %s235, 1
      %p239 = scmp.eq.s32.totalorder %s33, 1
      %p240 = scmp.ne.s32.totalorder %s235, %s237
      %p241 = scmp.eq.s32.totalorder %s33, 0
      %p242 = por %p240, %p241
      %p243 = scmp.ne.s32.totalorder %s235, %s237
      %p244 = scmp.eq.s32.totalorder %s38, 1
      %p245 = por %p243, %p244
      %p246 = scmp.ne.s32.totalorder %s237, %s238
      %p247 = scmp.eq.s32.totalorder %s38, 0
      %p248 = por %p246, %p247
      %p249 = scmp.ne.s32.totalorder %s237, %s238
      %p250 = scmp.eq.s32.totalorder %s39, 1
      %p251 = por %p249, %p250
      %p253 = scmp.ne.s32.totalorder %s238, %s252
      %p254 = scmp.eq.s32.totalorder %s39, 0
      %p255 = por %p253, %p254
      %s257 = sadd.s32 %s256, 1
      %p260 = scmp.eq.s32.totalorder %s33, 1
      %p261 = scmp.ne.s32.totalorder %s256, %s258
      %p262 = scmp.eq.s32.totalorder %s33, 0
      %p263 = por %p261, %p262
      %p264 = scmp.ne.s32.totalorder %s256, %s258
      %p265 = scmp.eq.s32.totalorder %s38, 1
      %p266 = por %p264, %p265
      %p267 = scmp.ne.s32.totalorder %s258, %s259
      %p268 = scmp.eq.s32.totalorder %s38, 0
      %p269 = por %p267, %p268
      %p270 = scmp.ne.s32.totalorder %s258, %s259
      %p271 = scmp.eq.s32.totalorder %s39, 1
      %p272 = por %p270, %p271
      %p274 = scmp.ne.s32.totalorder %s259, %s273
      %p275 = scmp.eq.s32.totalorder %s39, 0
      %p276 = por %p274, %p275
      %s278 = sadd.s32 %s277, 1
      %p281 = scmp.eq.s32.totalorder %s33, 1
      %p282 = scmp.ne.s32.totalorder %s277, %s279
      %p283 = scmp.eq.s32.totalorder %s33, 0
      %p284 = por %p282, %p283
      %p285 = scmp.ne.s32.totalorder %s277, %s279
      %p286 = scmp.eq.s32.totalorder %s38, 1
      %p287 = por %p285, %p286
      %p288 = scmp.ne.s32.totalorder %s279, %s280
      %p289 = scmp.eq.s32.totalorder %s38, 0
      %p290 = por %p288, %p289
      %p291 = scmp.ne.s32.totalorder %s279, %s280
      %p292 = scmp.eq.s32.totalorder %s39, 1
      %p293 = por %p291, %p292
      %p295 = scmp.ne.s32.totalorder %s280, %s294
      %p296 = scmp.eq.s32.totalorder %s39, 0
      %p297 = por %p295, %p296
      %s299 = sadd.s32 %s298, 1
      %p302 = scmp.eq.s32.totalorder %s33, 1
      %p303 = scmp.ne.s32.totalorder %s298, %s300
      %p304 = scmp.eq.s32.totalorder %s33, 0
      %p305 = por %p303, %p304
      %p306 = scmp.ne.s32.totalorder %s298, %s300
      %p307 = scmp.eq.s32.totalorder %s38, 1
      %p308 = por %p306, %p307
      %p309 = scmp.ne.s32.totalorder %s300, %s301
      %p310 = scmp.eq.s32.totalorder %s38, 0
      %p311 = por %p309, %p310
      %p312 = scmp.ne.s32.totalorder %s300, %s301
      %p313 = scmp.eq.s32.totalorder %s39, 1
      %p314 = por %p312, %p313
      %p316 = scmp.ne.s32.totalorder %s301, %s315
      %p317 = scmp.eq.s32.totalorder %s39, 0
      %p318 = por %p316, %p317
      %s320 = sadd.s32 %s319, 1
      %p323 = scmp.eq.s32.totalorder %s33, 1
      %p324 = scmp.ne.s32.totalorder %s319, %s321
      %p325 = scmp.eq.s32.totalorder %s33, 0
      %p326 = por %p324, %p325
      %p327 = scmp.ne.s32.totalorder %s319, %s321
      %p328 = scmp.eq.s32.totalorder %s38, 1
      %p329 = por %p327, %p328
      %p330 = scmp.ne.s32.totalorder %s321, %s322
      %p331 = scmp.eq.s32.totalorder %s38, 0
      %p332 = por %p330, %p331
      %p333 = scmp.ne.s32.totalorder %s321, %s322
      %p334 = scmp.eq.s32.totalorder %s39, 1
      %p335 = por %p333, %p334
      %p337 = scmp.ne.s32.totalorder %s322, %s336
      %p338 = scmp.eq.s32.totalorder %s39, 0
      %p339 = por %p337, %p338
      %s341 = sadd.s32 %s340, 1
      %p344 = scmp.eq.s32.totalorder %s33, 1
      %p345 = scmp.ne.s32.totalorder %s340, %s342
      %p346 = scmp.eq.s32.totalorder %s33, 0
      %p347 = por %p345, %p346
      %p348 = scmp.ne.s32.totalorder %s340, %s342
      %p349 = scmp.eq.s32.totalorder %s38, 1
      %p350 = por %p348, %p349
      %p351 = scmp.ne.s32.totalorder %s342, %s343
      %p352 = scmp.eq.s32.totalorder %s38, 0
      %p353 = por %p351, %p352
      %p354 = scmp.ne.s32.totalorder %s342, %s343
      %p355 = scmp.eq.s32.totalorder %s39, 1
      %p356 = por %p354, %p355
      %p358 = scmp.ne.s32.totalorder %s343, %s357
      %p359 = scmp.eq.s32.totalorder %s39, 0
      %p360 = por %p358, %p359
      %s362 = sadd.s32 %s361, 1
      %p365 = scmp.eq.s32.totalorder %s33, 1
      %p366 = scmp.ne.s32.totalorder %s361, %s363
      %p367 = scmp.eq.s32.totalorder %s33, 0
      %p368 = por %p366, %p367
      %p369 = scmp.ne.s32.totalorder %s361, %s363
      %p370 = scmp.eq.s32.totalorder %s38, 1
      %p371 = por %p369, %p370
      %p372 = scmp.ne.s32.totalorder %s363, %s364
      %p373 = scmp.eq.s32.totalorder %s38, 0
      %p374 = por %p372, %p373
      %p375 = scmp.ne.s32.totalorder %s363, %s364
      %p376 = scmp.eq.s32.totalorder %s39, 1
      %p377 = por %p375, %p376
      %p379 = scmp.ne.s32.totalorder %s364, %s378
      %p380 = scmp.eq.s32.totalorder %s39, 0
      %p381 = por %p379, %p380
      %s383 = sadd.s32 %s382, 1
      %p386 = scmp.eq.s32.totalorder %s33, 1
      %p387 = scmp.ne.s32.totalorder %s382, %s384
      %p388 = scmp.eq.s32.totalorder %s33, 0
      %p389 = por %p387, %p388
      %p390 = scmp.ne.s32.totalorder %s382, %s384
      %p391 = scmp.eq.s32.totalorder %s38, 1
      %p392 = por %p390, %p391
      %p393 = scmp.ne.s32.totalorder %s384, %s385
      %p394 = scmp.eq.s32.totalorder %s38, 0
      %p395 = por %p393, %p394
      %p396 = scmp.ne.s32.totalorder %s384, %s385
      %p397 = scmp.eq.s32.totalorder %s39, 1
      %p398 = por %p396, %p397
      %p400 = scmp.ne.s32.totalorder %s385, %s399
      %p401 = scmp.eq.s32.totalorder %s39, 0
      %p402 = por %p400, %p401
      %s404 = sadd.s32 %s403, 1
      %p407 = scmp.eq.s32.totalorder %s33, 1
      %p408 = scmp.ne.s32.totalorder %s403, %s405
      %p409 = scmp.eq.s32.totalorder %s33, 0
      %p410 = por %p408, %p409
      %p411 = scmp.ne.s32.totalorder %s403, %s405
      %p412 = scmp.eq.s32.totalorder %s38, 1
      %p413 = por %p411, %p412
      %p414 = scmp.ne.s32.totalorder %s405, %s406
      %p415 = scmp.eq.s32.totalorder %s38, 0
      %p416 = por %p414, %p415
      %p417 = scmp.ne.s32.totalorder %s405, %s406
      %p418 = scmp.eq.s32.totalorder %s39, 1
      %p419 = por %p417, %p418
      %p421 = scmp.ne.s32.totalorder %s406, %s420
      %p422 = scmp.eq.s32.totalorder %s39, 0
      %p423 = por %p421, %p422
      %s425 = sadd.s32 %s424, 1
      %p428 = scmp.eq.s32.totalorder %s33, 1
      %p429 = scmp.ne.s32.totalorder %s424, %s426
      %p430 = scmp.eq.s32.totalorder %s33, 0
      %p431 = por %p429, %p430
      %p432 = scmp.ne.s32.totalorder %s424, %s426
      %p433 = scmp.eq.s32.totalorder %s38, 1
      %p434 = por %p432, %p433
      %p435 = scmp.ne.s32.totalorder %s426, %s427
      %p436 = scmp.eq.s32.totalorder %s38, 0
      %p437 = por %p435, %p436
      %p438 = scmp.ne.s32.totalorder %s426, %s427
      %p439 = scmp.eq.s32.totalorder %s39, 1
      %p440 = por %p438, %p439
      %p442 = scmp.ne.s32.totalorder %s427, %s441
      %p443 = scmp.eq.s32.totalorder %s39, 0
      %p444 = por %p442, %p443
      %s446 = sadd.s32 %s445, 1
      %p449 = scmp.eq.s32.totalorder %s33, 1
      %p450 = scmp.ne.s32.totalorder %s445, %s447
      %p451 = scmp.eq.s32.totalorder %s33, 0
      %p452 = por %p450, %p451
      %p453 = scmp.ne.s32.totalorder %s445, %s447
      %p454 = scmp.eq.s32.totalorder %s38, 1
      %p455 = por %p453, %p454
      %p456 = scmp.ne.s32.totalorder %s447, %s448
      %p457 = scmp.eq.s32.totalorder %s38, 0
      %p458 = por %p456, %p457
      %p459 = scmp.ne.s32.totalorder %s447, %s448
      %p460 = scmp.eq.s32.totalorder %s39, 1
      %p461 = por %p459, %p460
      %p463 = scmp.ne.s32.totalorder %s448, %s462
      %p464 = scmp.eq.s32.totalorder %s39, 0
      %p465 = por %p463, %p464
      %s466 = ssub.s32 %s33, %s40
      %p467 = scmp.eq.s32.totalorder %s466, 0
      %s469 = sadd.s32 %s468, 1
      %s470 = scalar_select %p467, %s468, %s469
      %p473 = pneg %p467
      %p474 = scmp.eq.s32.totalorder %s33, 1
      %p475 = por %p473, %p474
      %p476 = scmp.ne.s32.totalorder %s468, %s471
      %p477 = scmp.eq.s32.totalorder %s33, 0
      %p478 = por %p476, %p477
      %p479 = scmp.ne.s32.totalorder %s468, %s471
      %p480 = scmp.eq.s32.totalorder %s38, 1
      %p481 = por %p479, %p480
      %p482 = scmp.ne.s32.totalorder %s471, %s472
      %p483 = scmp.eq.s32.totalorder %s38, 0
      %p484 = por %p482, %p483
      %p485 = scmp.ne.s32.totalorder %s471, %s472
      %p486 = scmp.eq.s32.totalorder %s39, 1
      %p487 = por %p485, %p486
      %p489 = scmp.ne.s32.totalorder %s472, %s488
      %p490 = scmp.eq.s32.totalorder %s39, 0
      %p491 = por %p489, %p490
      %p492 = scmp.le.s32.totalorder 1, %s33
      %p493 = scmp.lt.s32.totalorder %s33, 3
      %p494 = pnand %p492, %p493
      %p495 = pneg %p494
      // Predicated region
      $region9: #{net_forward.1} parent=5 // pred_check
        _
      $region10: #{net_forward.1} parent=5 // pred_check_branch
        %497 = sbr.rel (%p494) target = $region12
      $region11: #{net_forward.1} parent=5 // pred_region
        %s498 = ssub.s32 %s33, 1
        // Predicated region
        $region13: #{net_forward.1} parent=11 // pred_check
          %p499 = pneg %p80
        $region14: #{net_forward.1} parent=11 // pred_check_branch
          %501 = sbr.rel (%p499) target = $region16
        $region15: #{net_forward.1} parent=11 // pred_region
          _
        $region16: #{net_forward.1} parent=11 // pred_fallthru
          _
        // Predicated region
        $region17: #{net_forward.1} parent=11 // pred_check
          %p502 = pneg %p101
        $region18: #{net_forward.1} parent=11 // pred_check_branch
          %504 = sbr.rel (%p502) target = $region20
        $region19: #{net_forward.1} parent=11 // pred_region
          %s506 = ssub.s32 2048, 2048
          %507 = vsyncadd [#allocation3], %s506
          %s508 = sshll.u32 [#allocation2], 4
          %s509 = int_to_ptr.vmem [resolvable:$true] %s508
          %514 = dma.hbm_to_vmem [thread:$0]  %s2, 2048, %s509, [#allocation3], 128, 128, 8
        $region20: #{net_forward.1} parent=11 // pred_fallthru
          _
        // Predicated region
        $region21: #{net_forward.1} parent=11 // pred_check
          %p515 = pneg %p122
        $region22: #{net_forward.1} parent=11 // pred_check_branch
          %517 = sbr.rel (%p515) target = $region24
        $region23: #{net_forward.1} parent=11 // pred_region
          _
        $region24: #{net_forward.1} parent=11 // pred_fallthru
          _
        // Predicated region
        $region25: #{net_forward.1} parent=11 // pred_check
          %p518 = pneg %p143
        $region26: #{net_forward.1} parent=11 // pred_check_branch
          %520 = sbr.rel (%p518) target = $region28
        $region27: #{net_forward.1} parent=11 // pred_region
          %s522 = ssub.s32 1024, 1024
          %523 = vsyncadd [#allocation6], %s522
          %s524 = sshll.u32 [#allocation5], 4
          %s525 = int_to_ptr.vmem [resolvable:$true] %s524
          %530 = dma.hbm_to_vmem [thread:$0]  %s4, 1024, %s525, [#allocation6], 128, 128, 8
        $region28: #{net_forward.1} parent=11 // pred_fallthru
          _
        // Predicated region
        $region29: #{net_forward.1} parent=11 // pred_check
          %p531 = pneg %p164
        $region30: #{net_forward.1} parent=11 // pred_check_branch
          %533 = sbr.rel (%p531) target = $region32
        $region31: #{net_forward.1} parent=11 // pred_region
          _
        $region32: #{net_forward.1} parent=11 // pred_fallthru
          _
        // Predicated region
        $region33: #{net_forward.1} parent=11 // pred_check
          %p534 = pneg %p185
        $region34: #{net_forward.1} parent=11 // pred_check_branch
          %536 = sbr.rel (%p534) target = $region36
        $region35: #{net_forward.1} parent=11 // pred_region
          _
        $region36: #{net_forward.1} parent=11 // pred_fallthru
          _
        // Predicated region
        $region37: #{net_forward.1} parent=11 // pred_check
          %p537 = pneg %p206
        $region38: #{net_forward.1} parent=11 // pred_check_branch
          %539 = sbr.rel (%p537) target = $region40
        $region39: #{net_forward.1} parent=11 // pred_region
          %s541 = ssub.s32 1024, 1024
          %542 = vsyncadd [#allocation6], %s541
          %s543 = sshll.u32 [#allocation7], 4
          %s544 = int_to_ptr.vmem [resolvable:$true] %s543
          %549 = dma.hbm_to_vmem [thread:$0]  %s7, 1024, %s544, [#allocation6], 128, 128, 8
        $region40: #{net_forward.1} parent=11 // pred_fallthru
          _
        // Predicated region
        $region41: #{net_forward.1} parent=11 // pred_check
          %p550 = pneg %p227
        $region42: #{net_forward.1} parent=11 // pred_check_branch
          %552 = sbr.rel (%p550) target = $region44
        $region43: #{net_forward.1} parent=11 // pred_region
          %s554 = ssub.s32 8192, 8192
          %555 = vsyncadd [#allocation9], %s554
          %s556 = sshll.u32 [#allocation8], 4
          %s557 = int_to_ptr.vmem [resolvable:$true] %s556
          %562 = dma.hbm_to_vmem [thread:$0]  %s8, 8192, %s557, [#allocation9], 128, 128, 8
        $region44: #{net_forward.1} parent=11 // pred_fallthru
          _
        // Predicated region
        $region45: #{net_forward.1} parent=11 // pred_check
          %p563 = pneg %p248
        $region46: #{net_forward.1} parent=11 // pred_check_branch
          %565 = sbr.rel (%p563) target = $region48
        $region47: #{net_forward.1} parent=11 // pred_region
          _
        $region48: #{net_forward.1} parent=11 // pred_fallthru
          _
        // Predicated region
        $region49: #{net_forward.1} parent=11 // pred_check
          %p566 = pneg %p269
        $region50: #{net_forward.1} parent=11 // pred_check_branch
          %568 = sbr.rel (%p566) target = $region52
        $region51: #{net_forward.1} parent=11 // pred_region
          _
        $region52: #{net_forward.1} parent=11 // pred_fallthru
          _
        // Predicated region
        $region53: #{net_forward.1} parent=11 // pred_check
          %p569 = pneg %p290
        $region54: #{net_forward.1} parent=11 // pred_check_branch
          %571 = sbr.rel (%p569) target = $region56
        $region55: #{net_forward.1} parent=11 // pred_region
          %s573 = ssub.s32 12288, 12288
          %574 = vsyncadd [#allocation9], %s573
          %s575 = sshll.u32 [#allocation10], 4
          %s576 = int_to_ptr.vmem [resolvable:$true] %s575
          %581 = dma.hbm_to_vmem [thread:$0]  %s11, 12288, %s576, [#allocation9], 256, 256, 16
        $region56: #{net_forward.1} parent=11 // pred_fallthru
          _
        // Predicated region
        $region57: #{net_forward.1} parent=11 // pred_check
          %p582 = pneg %p311
        $region58: #{net_forward.1} parent=11 // pred_check_branch
          %584 = sbr.rel (%p582) target = $region60
        $region59: #{net_forward.1} parent=11 // pred_region
          %s586 = ssub.s32 512, 512
          %587 = vsyncadd [#allocation12], %s586
          %s588 = sshll.u32 [#allocation11], 4
          %s589 = int_to_ptr.vmem [resolvable:$true] %s588
          %594 = dma.hbm_to_vmem [thread:$0]  %s12, 512, %s589, [#allocation12], 128, 128, 8
        $region60: #{net_forward.1} parent=11 // pred_fallthru
          _
        // Predicated region
        $region61: #{net_forward.1} parent=11 // pred_check
          %p595 = pneg %p332
        $region62: #{net_forward.1} parent=11 // pred_check_branch
          %597 = sbr.rel (%p595) target = $region64
        $region63: #{net_forward.1} parent=11 // pred_region
          %s599 = ssub.s32 8192, 8192
          %600 = vsyncadd [#allocation12], %s599
          %s601 = sshll.u32 [#allocation13], 4
          %s602 = int_to_ptr.vmem [resolvable:$true] %s601
          %607 = dma.hbm_to_vmem [thread:$0]  %s13, 8192, %s602, [#allocation12], 128, 128, 8
        $region64: #{net_forward.1} parent=11 // pred_fallthru
          _
        // Predicated region
        $region65: #{net_forward.1} parent=11 // pred_check
          %p608 = pneg %p353
        $region66: #{net_forward.1} parent=11 // pred_check_branch
          %610 = sbr.rel (%p608) target = $region68
        $region67: #{net_forward.1} parent=11 // pred_region
          _
        $region68: #{net_forward.1} parent=11 // pred_fallthru
          _
        // Predicated region
        $region69: #{net_forward.1} parent=11 // pred_check
          %p611 = pneg %p374
        $region70: #{net_forward.1} parent=11 // pred_check_branch
          %613 = sbr.rel (%p611) target = $region72
        $region71: #{net_forward.1} parent=11 // pred_region
          _
        $region72: #{net_forward.1} parent=11 // pred_fallthru
          _
        // Predicated region
        $region73: #{net_forward.1} parent=11 // pred_check
          %p614 = pneg %p395
        $region74: #{net_forward.1} parent=11 // pred_check_branch
          %616 = sbr.rel (%p614) target = $region76
        $region75: #{net_forward.1} parent=11 // pred_region
          _
        $region76: #{net_forward.1} parent=11 // pred_fallthru
          _
        // Predicated region
        $region77: #{net_forward.1} parent=11 // pred_check
          %p617 = pneg %p416
        $region78: #{net_forward.1} parent=11 // pred_check_branch
          %619 = sbr.rel (%p617) target = $region80
        $region79: #{net_forward.1} parent=11 // pred_region
          _
        $region80: #{net_forward.1} parent=11 // pred_fallthru
          _
        // Predicated region
        $region81: #{net_forward.1} parent=11 // pred_check
          %p620 = pneg %p437
        $region82: #{net_forward.1} parent=11 // pred_check_branch
          %622 = sbr.rel (%p620) target = $region84
        $region83: #{net_forward.1} parent=11 // pred_region
          _
        $region84: #{net_forward.1} parent=11 // pred_fallthru
          _
        // Predicated region
        $region85: #{net_forward.1} parent=11 // pred_check
          %p623 = pneg %p458
        $region86: #{net_forward.1} parent=11 // pred_check_branch
          %625 = sbr.rel (%p623) target = $region88
        $region87: #{net_forward.1} parent=11 // pred_region
          _
        $region88: #{net_forward.1} parent=11 // pred_fallthru
          _
      $region12: #{net_forward.1} parent=5 // pred_fallthru
        _
      %p626 = scmp.lt.s32.totalorder %s33, 2
      // Predicated region
      $region89: #{net_forward.1} parent=5 // pred_check
        %p627 = pneg %p626
      $region90: #{net_forward.1} parent=5 // pred_check_branch
        %629 = sbr.rel (%p627) target = $region92
      $region91: #{net_forward.1} parent=5 // pred_region
        // Predicated region
        $region93: #{net_forward.1} parent=91 // pred_check
          %p630 = pneg %p53
        $region94: #{net_forward.1} parent=91 // pred_check_branch
          %632 = sbr.rel (%p630) target = $region96
        $region95: #{net_forward.1} parent=91 // pred_region
          %p633 = scmp.lt.s32.totalorder %s33, 1
          %s634 = scalar_select %p633, %s33, 1
          %s635 = smul.addr %s634, 16
          %s636 = smul.addr %s635, 8
          %s637 = scalar_lea.vmem %s0, %s636
        $region96: #{net_forward.1} parent=91 // pred_fallthru
          _
      $region92: #{net_forward.1} parent=5 // pred_fallthru
        _
      %p638 = scmp.le.s32.totalorder 1, %s33
      %p639 = scmp.lt.s32.totalorder %s33, 3
      %p640 = pnand %p638, %p639
      %p641 = pneg %p640
      // Predicated region
      $region97: #{net_forward.1} parent=5 // pred_check
        _
      $region98: #{net_forward.1} parent=5 // pred_check_branch
        %643 = sbr.rel (%p640) target = $region100
      $region99: #{net_forward.1} parent=5 // pred_region
        %s644 = ssub.s32 %s33, 1
        // Predicated region
        $region101: #{net_forward.1} parent=99 // pred_check
          %p645 = pneg %p101
        $region102: #{net_forward.1} parent=99 // pred_check_branch
          %647 = sbr.rel (%p645) target = $region104
        $region103: #{net_forward.1} parent=99 // pred_region
          %648 = dma.done [#allocation3], 2048
        $region104: #{net_forward.1} parent=99 // pred_fallthru
          _
        // Predicated region
        $region105: #{net_forward.1} parent=99 // pred_check
          %p649 = pneg %p143
        $region106: #{net_forward.1} parent=99 // pred_check_branch
          %651 = sbr.rel (%p649) target = $region108
        $region107: #{net_forward.1} parent=99 // pred_region
          %652 = dma.done [#allocation6], 1024
        $region108: #{net_forward.1} parent=99 // pred_fallthru
          _
        // Predicated region
        $region109: #{net_forward.1} parent=99 // pred_check
          %p653 = pneg %p206
        $region110: #{net_forward.1} parent=99 // pred_check_branch
          %655 = sbr.rel (%p653) target = $region112
        $region111: #{net_forward.1} parent=99 // pred_region
          %656 = dma.done [#allocation6], 1024
        $region112: #{net_forward.1} parent=99 // pred_fallthru
          _
        // Predicated region
        $region113: #{net_forward.1} parent=99 // pred_check
          %p657 = pneg %p227
        $region114: #{net_forward.1} parent=99 // pred_check_branch
          %659 = sbr.rel (%p657) target = $region116
        $region115: #{net_forward.1} parent=99 // pred_region
          %660 = dma.done [#allocation9], 8192
        $region116: #{net_forward.1} parent=99 // pred_fallthru
          _
        // Predicated region
        $region117: #{net_forward.1} parent=99 // pred_check
          %p661 = pneg %p290
        $region118: #{net_forward.1} parent=99 // pred_check_branch
          %663 = sbr.rel (%p661) target = $region120
        $region119: #{net_forward.1} parent=99 // pred_region
          %664 = dma.done [#allocation9], 12288
        $region120: #{net_forward.1} parent=99 // pred_fallthru
          _
        // Predicated region
        $region121: #{net_forward.1} parent=99 // pred_check
          %p665 = pneg %p311
        $region122: #{net_forward.1} parent=99 // pred_check_branch
          %667 = sbr.rel (%p665) target = $region124
        $region123: #{net_forward.1} parent=99 // pred_region
          %668 = dma.done [#allocation12], 512
        $region124: #{net_forward.1} parent=99 // pred_fallthru
          _
        // Predicated region
        $region125: #{net_forward.1} parent=99 // pred_check
          %p669 = pneg %p332
        $region126: #{net_forward.1} parent=99 // pred_check_branch
          %671 = sbr.rel (%p669) target = $region128
        $region127: #{net_forward.1} parent=99 // pred_region
          %672 = dma.done [#allocation12], 8192
        $region128: #{net_forward.1} parent=99 // pred_fallthru
          _
        %p673 = scmp.lt.s32.totalorder %s38, 1
        %s674 = scalar_select %p673, %s38, 1
        %s675 = smul.addr %s674, 16
        %s676 = smul.addr %s675, 8
        %s677 = scalar_lea.vmem %s0, %s676
        %p678 = pneg %p59
        %p679 = pneg %p56
        %p680 = pneg %p80
        %p681 = pneg %p77
        %p682 = pneg %p101
        %p683 = pneg %p98
        %p684 = pneg %p122
        %p685 = pneg %p119
        %p686 = pneg %p143
        %p687 = pneg %p140
        %p688 = pneg %p164
        %p689 = pneg %p161
        %p690 = pneg %p185
        %p691 = pneg %p182
        %p692 = pneg %p206
        %p693 = pneg %p203
        %p694 = pneg %p227
        %p695 = pneg %p224
        %p696 = pneg %p248
        %p697 = pneg %p245
        %p698 = pneg %p269
        %p699 = pneg %p266
        %p700 = pneg %p290
        %p701 = pneg %p287
        %p702 = pneg %p311
        %p703 = pneg %p308
        %p704 = pneg %p332
        %p705 = pneg %p329
        %p706 = pneg %p353
        %p707 = pneg %p350
        %p708 = pneg %p374
        %p709 = pneg %p371
        %p710 = pneg %p395
        %p711 = pneg %p392
        %p712 = pneg %p416
        %p713 = pneg %p413
        %p714 = pneg %p437
        %p715 = pneg %p434
        %p716 = pneg %p458
        %p717 = pneg %p455
        %p718 = pneg %p484
        %p719 = pneg %p481
        %s720 = sand.u32 %s471, 1
        %s721 = scalar_lea.sflag [#allocation4], %s720
        %s722 = sand.u32 %s471, 1
        %s723 = scalar_lea.vmem [#allocation14], %s722
        %p724 = scmp.lt.s32.totalorder %s38, 1
        %s725 = scalar_select %p724, %s38, 1
        %s726 = smul.addr %s725, 16
        %s727 = smul.addr %s726, 8
        %s728 = scalar_lea.vmem %s0, %s727
        %v729 = vld [vmem:[%s728] sm:$0xff]
        %v730 = vld [vmem:[%s728 + $0x8] sm:$0xff]
        %v731 = vld [vmem:[%s728 + $0x10] sm:$0xff]
        %v732 = vld [vmem:[%s728 + $0x18] sm:$0xff]
        %v733 = vld [vmem:[%s728 + $0x20] sm:$0xff]
        %v734 = vld [vmem:[%s728 + $0x28] sm:$0xff]
        %v735 = vld [vmem:[%s728 + $0x30] sm:$0xff]
        %v736 = vld [vmem:[%s728 + $0x38] sm:$0xff]
        %v737 = vld [vmem:[%s728 + $0x40] sm:$0xff]
        %v738 = vld [vmem:[%s728 + $0x48] sm:$0xff]
        %v739 = vld [vmem:[%s728 + $0x50] sm:$0xff]
        %v740 = vld [vmem:[%s728 + $0x58] sm:$0xff]
        %v741 = vld [vmem:[%s728 + $0x60] sm:$0xff]
        %v742 = vld [vmem:[%s728 + $0x68] sm:$0xff]
        %v743 = vld [vmem:[%s728 + $0x70] sm:$0xff]
        %v744 = vld [vmem:[%s728 + $0x78] sm:$0xff]
        %s745 = scalar_lea.vmem %s1, 384
        %v746 = vld [vmem:[%s745] sm:$0xff]
        %v747 = vld [vmem:[%s745 + $0x8] sm:$0xff]
        %v748 = vld [vmem:[%s745 + $0x10] sm:$0xff]
        %v749 = vld [vmem:[%s745 + $0x18] sm:$0xff]
        %v750 = vld [vmem:[%s745 + $0x20] sm:$0xff]
        %v751 = vld [vmem:[%s745 + $0x28] sm:$0xff]
        %v752 = vld [vmem:[%s745 + $0x30] sm:$0xff]
        %v753 = vld [vmem:[%s745 + $0x38] sm:$0xff]
        %v754 = vld [vmem:[%s745 + $0x40] sm:$0xff]
        %v755 = vld [vmem:[%s745 + $0x48] sm:$0xff]
        %v756 = vld [vmem:[%s745 + $0x50] sm:$0xff]
        %v757 = vld [vmem:[%s745 + $0x58] sm:$0xff]
        %v758 = vld [vmem:[%s745 + $0x60] sm:$0xff]
        %v759 = vld [vmem:[%s745 + $0x68] sm:$0xff]
        %v760 = vld [vmem:[%s745 + $0x70] sm:$0xff]
        %v761 = vld [vmem:[%s745 + $0x78] sm:$0xff]
        %v762 = vld [vmem:[%s745 + $0x80] sm:$0xff]
        %v763 = vld [vmem:[%s745 + $0x88] sm:$0xff]
        %v764 = vld [vmem:[%s745 + $0x90] sm:$0xff]
        %v765 = vld [vmem:[%s745 + $0x98] sm:$0xff]
        %v766 = vld [vmem:[%s745 + $0xa0] sm:$0xff]
        %v767 = vld [vmem:[%s745 + $0xa8] sm:$0xff]
        %v768 = vld [vmem:[%s745 + $0xb0] sm:$0xff]
        %v769 = vld [vmem:[%s745 + $0xb8] sm:$0xff]
        %v770 = vld [vmem:[%s745 + $0xc0] sm:$0xff]
        %v771 = vld [vmem:[%s745 + $0xc8] sm:$0xff]
        %v772 = vld [vmem:[%s745 + $0xd0] sm:$0xff]
        %v773 = vld [vmem:[%s745 + $0xd8] sm:$0xff]
        %v774 = vld [vmem:[%s745 + $0xe0] sm:$0xff]
        %v775 = vld [vmem:[%s745 + $0xe8] sm:$0xff]
        %v776 = vld [vmem:[%s745 + $0xf0] sm:$0xff]
        %v777 = vld [vmem:[%s745 + $0xf8] sm:$0xff]
        %v778 = vld [vmem:[%s745 + $0x100] sm:$0xff]
        %v779 = vld [vmem:[%s745 + $0x108] sm:$0xff]
        %v780 = vld [vmem:[%s745 + $0x110] sm:$0xff]
        %v781 = vld [vmem:[%s745 + $0x118] sm:$0xff]
        %v782 = vld [vmem:[%s745 + $0x120] sm:$0xff]
        %v783 = vld [vmem:[%s745 + $0x128] sm:$0xff]
        %v784 = vld [vmem:[%s745 + $0x130] sm:$0xff]
        %v785 = vld [vmem:[%s745 + $0x138] sm:$0xff]
        %v786 = vld [vmem:[%s745 + $0x140] sm:$0xff]
        %v787 = vld [vmem:[%s745 + $0x148] sm:$0xff]
        %v788 = vld [vmem:[%s745 + $0x150] sm:$0xff]
        %v789 = vld [vmem:[%s745 + $0x158] sm:$0xff]
        %v790 = vld [vmem:[%s745 + $0x160] sm:$0xff]
        %v791 = vld [vmem:[%s745 + $0x168] sm:$0xff]
        %v792 = vld [vmem:[%s745 + $0x170] sm:$0xff]
        %v793 = vld [vmem:[%s745 + $0x178] sm:$0xff]
        %v794 = vld [vmem:[#allocation2] sm:$0xff]
        %v795 = vld [vmem:[#allocation2 + $0x8] sm:$0xff]
        %v796 = vld [vmem:[#allocation2 + $0x10] sm:$0xff]
        %v797 = vld [vmem:[#allocation2 + $0x18] sm:$0xff]
        %v798 = vld [vmem:[#allocation2 + $0x20] sm:$0xff]
        %v799 = vld [vmem:[#allocation2 + $0x28] sm:$0xff]
        %v800 = vld [vmem:[#allocation2 + $0x30] sm:$0xff]
        %v801 = vld [vmem:[#allocation2 + $0x38] sm:$0xff]
        %v802 = vld [vmem:[%s1] sm:$0xff]
        %v803 = vld [vmem:[%s1 + $0x8] sm:$0xff]
        %v804 = vld [vmem:[%s1 + $0x10] sm:$0xff]
        %v805 = vld [vmem:[%s1 + $0x18] sm:$0xff]
        %v806 = vld [vmem:[%s1 + $0x20] sm:$0xff]
        %v807 = vld [vmem:[%s1 + $0x28] sm:$0xff]
        %v808 = vld [vmem:[%s1 + $0x30] sm:$0xff]
        %v809 = vld [vmem:[%s1 + $0x38] sm:$0xff]
        %v810 = vld [vmem:[%s1 + $0x40] sm:$0xff]
        %v811 = vld [vmem:[%s1 + $0x48] sm:$0xff]
        %v812 = vld [vmem:[%s1 + $0x50] sm:$0xff]
        %v813 = vld [vmem:[%s1 + $0x58] sm:$0xff]
        %v814 = vld [vmem:[%s1 + $0x60] sm:$0xff]
        %v815 = vld [vmem:[%s1 + $0x68] sm:$0xff]
        %v816 = vld [vmem:[%s1 + $0x70] sm:$0xff]
        %v817 = vld [vmem:[%s1 + $0x78] sm:$0xff]
        %v818 = vld [vmem:[%s1 + $0x80] sm:$0xff]
        %v819 = vld [vmem:[%s1 + $0x88] sm:$0xff]
        %v820 = vld [vmem:[%s1 + $0x90] sm:$0xff]
        %v821 = vld [vmem:[%s1 + $0x98] sm:$0xff]
        %v822 = vld [vmem:[%s1 + $0xa0] sm:$0xff]
        %v823 = vld [vmem:[%s1 + $0xa8] sm:$0xff]
        %v824 = vld [vmem:[%s1 + $0xb0] sm:$0xff]
        %v825 = vld [vmem:[%s1 + $0xb8] sm:$0xff]
        %v826 = vld [vmem:[%s1 + $0xc0] sm:$0xff]
        %v827 = vld [vmem:[%s1 + $0xc8] sm:$0xff]
        %v828 = vld [vmem:[%s1 + $0xd0] sm:$0xff]
        %v829 = vld [vmem:[%s1 + $0xd8] sm:$0xff]
        %v830 = vld [vmem:[%s1 + $0xe0] sm:$0xff]
        %v831 = vld [vmem:[%s1 + $0xe8] sm:$0xff]
        %v832 = vld [vmem:[%s1 + $0xf0] sm:$0xff]
        %v833 = vld [vmem:[%s1 + $0xf8] sm:$0xff]
        %v834 = vld [vmem:[%s1 + $0x100] sm:$0xff]
        %v835 = vld [vmem:[%s1 + $0x108] sm:$0xff]
        %v836 = vld [vmem:[%s1 + $0x110] sm:$0xff]
        %v837 = vld [vmem:[%s1 + $0x118] sm:$0xff]
        %v838 = vld [vmem:[%s1 + $0x120] sm:$0xff]
        %v839 = vld [vmem:[%s1 + $0x128] sm:$0xff]
        %v840 = vld [vmem:[%s1 + $0x130] sm:$0xff]
        %v841 = vld [vmem:[%s1 + $0x138] sm:$0xff]
        %v842 = vld [vmem:[%s1 + $0x140] sm:$0xff]
        %v843 = vld [vmem:[%s1 + $0x148] sm:$0xff]
        %v844 = vld [vmem:[%s1 + $0x150] sm:$0xff]
        %v845 = vld [vmem:[%s1 + $0x158] sm:$0xff]
        %v846 = vld [vmem:[%s1 + $0x160] sm:$0xff]
        %v847 = vld [vmem:[%s1 + $0x168] sm:$0xff]
        %v848 = vld [vmem:[%s1 + $0x170] sm:$0xff]
        %v849 = vld [vmem:[%s1 + $0x178] sm:$0xff]
        %vm850 = vcmask 523264
        %v852 = vsel %vm850, %v730, 0
        %v855 = vsel %vm850, %v732, 0
        %v858 = vsel %vm850, %v734, 0
        %v861 = vsel %vm850, %v736, 0
        %v864 = vsel %vm850, %v738, 0
        %v867 = vsel %vm850, %v740, 0
        %v870 = vsel %vm850, %v742, 0
        %v873 = vsel %vm850, %v744, 0
        %875 = vmatprep.subr.mxu0 %v803
        %876 = vmatpush1.msra.mxu0 %v802
        %877 = vmatprep.subr.mxu0 %v805
        %878 = vmatpush1.msra.mxu0 %v804
        %879 = vmatprep.subr.mxu0 %v807
        %880 = vmatpush1.msra.mxu0 %v806
        %881 = vmatprep.subr.mxu0 %v809
        %882 = vmatpush1.msra.mxu0 %v808
        %883 = vmatprep.subr.mxu0 %v811
        %884 = vmatpush1.msra.mxu0 %v810
        %885 = vmatprep.subr.mxu0 %v813
        %886 = vmatpush1.msra.mxu0 %v812
        %887 = vmatprep.subr.mxu0 %v815
        %888 = vmatpush1.msra.mxu0 %v814
        %889 = vmatprep.subr.mxu0 %v817
        %890 = vmatpush1.msra.mxu0 %v816
        %891 = vmatprep.subr.mxu0 %v819
        %892 = vmatpush1.msra.mxu0 %v818
        %893 = vmatprep.subr.mxu0 %v821
        %894 = vmatpush1.msra.mxu0 %v820
        %895 = vmatprep.subr.mxu0 %v823
        %896 = vmatpush1.msra.mxu0 %v822
        %897 = vmatprep.subr.mxu0 %v825
        %898 = vmatpush1.msra.mxu0 %v824
        %899 = vmatprep.subr.mxu0 %v827
        %900 = vmatpush1.msra.mxu0 %v826
        %901 = vmatprep.subr.mxu0 %v829
        %902 = vmatpush1.msra.mxu0 %v828
        %903 = vmatprep.subr.mxu0 %v831
        %904 = vmatpush1.msra.mxu0 %v830
        %905 = vmatprep.subr.mxu0 %v833
        %906 = vmatpush1.msra.mxu0 %v832
        %907 = vmatprep.subr.mxu0 %v835
        %908 = vmatpush1.msra.mxu0 %v834
        %909 = vmatprep.subr.mxu0 %v837
        %910 = vmatpush1.msra.mxu0 %v836
        %911 = vmatprep.subr.mxu0 %v839
        %912 = vmatpush1.msra.mxu0 %v838
        %913 = vmatprep.subr.mxu0 %v841
        %914 = vmatpush1.msra.mxu0 %v840
        %915 = vmatprep.subr.mxu0 %v843
        %916 = vmatpush1.msra.mxu0 %v842
        %917 = vmatprep.subr.mxu0 %v845
        %918 = vmatpush1.msra.mxu0 %v844
        %919 = vmatprep.subr.mxu0 %v847
        %920 = vmatpush1.msra.mxu0 %v846
        %921 = vmatprep.subr.mxu0 %v849
        %922 = vmatpush1.msra.mxu0 %v848
        %923 = vmatprep.subr.mxu0 0.0
        %924 = vmatpush1.msra.mxu0 0.0
        %925 = vmatprep.subr.mxu0 0.0
        %926 = vmatpush1.msra.mxu0 0.0
        %927 = vmatprep.subr.mxu0 0.0
        %928 = vmatpush1.msra.mxu0 0.0
        %929 = vmatprep.subr.mxu0 0.0
        %930 = vmatpush1.msra.mxu0 0.0
        %931 = vmatprep.subr.mxu0 0.0
        %932 = vmatpush1.msra.mxu0 0.0
        %933 = vmatprep.subr.mxu0 0.0
        %934 = vmatpush1.msra.mxu0 0.0
        %935 = vmatprep.subr.mxu0 0.0
        %936 = vmatpush1.msra.mxu0 0.0
        %937 = vmatprep.subr.mxu0 0.0
        %938 = vmatpush1.msra.mxu0 0.0
        %939 = vmatprep.mubr.f32.mxu0 %v852
        %940 = vmatmul.mubr.f32.gmra.mrb[0].mxu0 %v729
        %v941 = vpop.f32.mrb[0].mxu0
        %v942 = vadd.f32 0.0, %v941
        %v943 = vpop.f32.mrb[0].mxu0
        %v944 = vadd.f32 0.0, %v943
        %945 = vmatprep.mubr.f32.mxu0 %v855
        %946 = vmatmul.mubr.f32.gmra.mrb[0].mxu0 %v731
        %v947 = vpop.f32.mrb[0].mxu0
        %v948 = vadd.f32 0.0, %v947
        %v949 = vpop.f32.mrb[0].mxu0
        %v950 = vadd.f32 0.0, %v949
        %951 = vmatprep.mubr.f32.mxu0 %v858
        %952 = vmatmul.mubr.f32.gmra.mrb[0].mxu0 %v733
        %v953 = vpop.f32.mrb[0].mxu0
        %v954 = vadd.f32 0.0, %v953
        %v955 = vpop.f32.mrb[0].mxu0
        %v956 = vadd.f32 0.0, %v955
        %957 = vmatprep.mubr.f32.mxu0 %v861
        %958 = vmatmul.mubr.f32.gmra.mrb[0].mxu0 %v735
        %v959 = vpop.f32.mrb[0].mxu0
        %v960 = vadd.f32 0.0, %v959
        %v961 = vpop.f32.mrb[0].mxu0
        %v962 = vadd.f32 0.0, %v961
        %963 = vmatprep.mubr.f32.mxu0 %v864
        %964 = vmatmul.mubr.f32.gmra.mrb[0].mxu0 %v737
        %v965 = vpop.f32.mrb[0].mxu0
        %v966 = vadd.f32 0.0, %v965
        %v967 = vpop.f32.mrb[0].mxu0
        %v968 = vadd.f32 0.0, %v967
        %969 = vmatprep.mubr.f32.mxu0 %v867
        %970 = vmatmul.mubr.f32.gmra.mrb[0].mxu0 %v739
        %v971 = vpop.f32.mrb[0].mxu0
        %v972 = vadd.f32 0.0, %v971
        %v973 = vpop.f32.mrb[0].mxu0
        %v974 = vadd.f32 0.0, %v973
        %975 = vmatprep.mubr.f32.mxu0 %v870
        %976 = vmatmul.mubr.f32.gmra.mrb[0].mxu0 %v741
        %v977 = vpop.f32.mrb[0].mxu0
        %v978 = vadd.f32 0.0, %v977
        %v979 = vpop.f32.mrb[0].mxu0
        %v980 = vadd.f32 0.0, %v979
        %981 = vmatprep.mubr.f32.mxu0 %v873
        %982 = vmatmul.mubr.f32.gmra.mrb[0].mxu0 %v743
        %v983 = vpop.f32.mrb[0].mxu0
        %v984 = vadd.f32 0.0, %v983
        %v985 = vpop.f32.mrb[0].mxu0
        %v986 = vadd.f32 0.0, %v985
        %987 = vdwg.mxu0
        %v989 = vsel %vm850, %v794, 0
        %v992 = vsel %vm850, %v795, 0
        %v995 = vsel %vm850, %v796, 0
        %v998 = vsel %vm850, %v797, 0
        %v1001 = vsel %vm850, %v798, 0
        %v1004 = vsel %vm850, %v799, 0
        %v1007 = vsel %vm850, %v800, 0
        %v1010 = vsel %vm850, %v801, 0
        %1012 = vmatprep.subr.mxu0 %v944
        %1013 = vmatpush1.msra.mxu0 %v942
        %1014 = vmatprep.subr.mxu0 %v950
        %1015 = vmatpush1.msra.mxu0 %v948
        %1016 = vmatprep.subr.mxu0 %v956
        %1017 = vmatpush1.msra.mxu0 %v954
        %1018 = vmatprep.subr.mxu0 %v962
        %1019 = vmatpush1.msra.mxu0 %v960
        %1020 = vmatprep.subr.mxu0 %v968
        %1021 = vmatpush1.msra.mxu0 %v966
        %1022 = vmatprep.subr.mxu0 %v974
        %1023 = vmatpush1.msra.mxu0 %v972
        %1024 = vmatprep.subr.mxu0 %v980
        %1025 = vmatpush1.msra.mxu0 %v978
        %1026 = vmatprep.subr.mxu0 %v986
        %1027 = vmatpush1.msra.mxu0 %v984
        %1028 = vmatprep.subr.mxu0 0.0
        %1029 = vmatpush1.msra.mxu0 0.0
        %1030 = vmatprep.subr.mxu0 0.0
        %1031 = vmatpush1.msra.mxu0 0.0
        %1032 = vmatprep.subr.mxu0 0.0
        %1033 = vmatpush1.msra.mxu0 0.0
        %1034 = vmatprep.subr.mxu0 0.0
        %1035 = vmatpush1.msra.mxu0 0.0
        %1036 = vmatprep.subr.mxu0 0.0
        %1037 = vmatpush1.msra.mxu0 0.0
        %1038 = vmatprep.subr.mxu0 0.0
        %1039 = vmatpush1.msra.mxu0 0.0
        %1040 = vmatprep.subr.mxu0 0.0
        %1041 = vmatpush1.msra.mxu0 0.0
        %1042 = vmatprep.subr.mxu0 0.0
        %1043 = vmatpush1.msra.mxu0 0.0
        %1044 = vmatprep.subr.mxu0 0.0
        %1045 = vmatpush1.msra.mxu0 0.0
        %1046 = vmatprep.subr.mxu0 0.0
        %1047 = vmatpush1.msra.mxu0 0.0
        %1048 = vmatprep.subr.mxu0 0.0
        %1049 = vmatpush1.msra.mxu0 0.0
        %1050 = vmatprep.subr.mxu0 0.0
        %1051 = vmatpush1.msra.mxu0 0.0
        %1052 = vmatprep.subr.mxu0 0.0
        %1053 = vmatpush1.msra.mxu0 0.0
        %1054 = vmatprep.subr.mxu0 0.0
        %1055 = vmatpush1.msra.mxu0 0.0
        %1056 = vmatprep.subr.mxu0 0.0
        %1057 = vmatpush1.msra.mxu0 0.0
        %1058 = vmatprep.subr.mxu0 0.0
        %1059 = vmatpush1.msra.mxu0 0.0
        %1060 = vmatprep.subr.mxu0 0.0
        %1061 = vmatpush1.msra.mxu0 0.0
        %1062 = vmatprep.subr.mxu0 0.0
        %1063 = vmatpush1.msra.mxu0 0.0
        %1064 = vmatprep.subr.mxu0 0.0
        %1065 = vmatpush1.msra.mxu0 0.0
        %1066 = vmatprep.subr.mxu0 0.0
        %1067 = vmatpush1.msra.mxu0 0.0
        %1068 = vmatprep.subr.mxu0 0.0
        %1069 = vmatpush1.msra.mxu0 0.0
        %1070 = vmatprep.subr.mxu0 0.0
        %1071 = vmatpush1.msra.mxu0 0.0
        %1072 = vmatprep.subr.mxu0 0.0
        %1073 = vmatpush1.msra.mxu0 0.0
        %1074 = vmatprep.subr.mxu0 0.0
        %1075 = vmatpush1.msra.mxu0 0.0
        %1076 = vmatprep.mubr.f32.mxu0 0.0
        %1077 = vmatmul.mubr.f32.gmra.mrb[0].mxu0 %v989
        %v1078 = vpop.f32.mrb[0].mxu0
        %v1079 = vadd.f32 0.0, %v1078
        %v1080 = vpop.f32.mrb[0].mxu0
        %v1081 = vadd.f32 0.0, %v1080
        %1082 = vmatprep.mubr.f32.mxu0 0.0
        %1083 = vmatmul.mubr.f32.gmra.mrb[0].mxu0 %v992
        %v1084 = vpop.f32.mrb[0].mxu0
        %v1085 = vadd.f32 0.0, %v1084
        %v1086 = vpop.f32.mrb[0].mxu0
        %v1087 = vadd.f32 0.0, %v1086
        %1088 = vmatprep.mubr.f32.mxu0 0.0
        %1089 = vmatmul.mubr.f32.gmra.mrb[0].mxu0 %v995
        %v1090 = vpop.f32.mrb[0].mxu0
        %v1091 = vadd.f32 0.0, %v1090
        %v1092 = vpop.f32.mrb[0].mxu0
        %v1093 = vadd.f32 0.0, %v1092
        %1094 = vmatprep.mubr.f32.mxu0 0.0
        %1095 = vmatmul.mubr.f32.gmra.mrb[0].mxu0 %v998
        %v1096 = vpop.f32.mrb[0].mxu0
        %v1097 = vadd.f32 0.0, %v1096
        %v1098 = vpop.f32.mrb[0].mxu0
        %v1099 = vadd.f32 0.0, %v1098
        %1100 = vmatprep.mubr.f32.mxu0 0.0
        %1101 = vmatmul.mubr.f32.gmra.mrb[0].mxu0 %v1001
        %v1102 = vpop.f32.mrb[0].mxu0
        %v1103 = vadd.f32 0.0, %v1102
        %v1104 = vpop.f32.mrb[0].mxu0
        %v1105 = vadd.f32 0.0, %v1104
        %1106 = vmatprep.mubr.f32.mxu0 0.0
        %1107 = vmatmul.mubr.f32.gmra.mrb[0].mxu0 %v1004
        %v1108 = vpop.f32.mrb[0].mxu0
        %v1109 = vadd.f32 0.0, %v1108
        %v1110 = vpop.f32.mrb[0].mxu0
        %v1111 = vadd.f32 0.0, %v1110
        %1112 = vmatprep.mubr.f32.mxu0 0.0
        %1113 = vmatmul.mubr.f32.gmra.mrb[0].mxu0 %v1007
        %v1114 = vpop.f32.mrb[0].mxu0
        %v1115 = vadd.f32 0.0, %v1114
        %v1116 = vpop.f32.mrb[0].mxu0
        %v1117 = vadd.f32 0.0, %v1116
        %1118 = vmatprep.mubr.f32.mxu0 0.0
        %1119 = vmatmul.mubr.f32.gmra.mrb[0].mxu0 %v1010
        %v1120 = vpop.f32.mrb[0].mxu0
        %v1121 = vadd.f32 0.0, %v1120
        %v1122 = vpop.f32.mrb[0].mxu0
        %v1123 = vadd.f32 0.0, %v1122
        %1124 = vdwg.mxu0
        %1125 = vmatprep.subr.mxu0 %v747
        %1126 = vmatpush1.msra.mxu0 %v746
        %1127 = vmatprep.subr.mxu0 %v749
        %1128 = vmatpush1.msra.mxu0 %v748
        %1129 = vmatprep.subr.mxu0 %v751
        %1130 = vmatpush1.msra.mxu0 %v750
        %1131 = vmatprep.subr.mxu0 %v753
        %1132 = vmatpush1.msra.mxu0 %v752
        %1133 = vmatprep.subr.mxu0 %v755
        %1134 = vmatpush1.msra.mxu0 %v754
        %1135 = vmatprep.subr.mxu0 %v757
        %1136 = vmatpush1.msra.mxu0 %v756
        %1137 = vmatprep.subr.mxu0 %v759
        %1138 = vmatpush1.msra.mxu0 %v758
        %1139 = vmatprep.subr.mxu0 %v761
        %1140 = vmatpush1.msra.mxu0 %v760
        %1141 = vmatprep.subr.mxu0 %v763
        %1142 = vmatpush1.msra.mxu0 %v762
        %1143 = vmatprep.subr.mxu0 %v765
        %1144 = vmatpush1.msra.mxu0 %v764
        %1145 = vmatprep.subr.mxu0 %v767
        %1146 = vmatpush1.msra.mxu0 %v766
        %1147 = vmatprep.subr.mxu0 %v769
        %1148 = vmatpush1.msra.mxu0 %v768
        %1149 = vmatprep.subr.mxu0 %v771
        %1150 = vmatpush1.msra.mxu0 %v770
        %1151 = vmatprep.subr.mxu0 %v773
        %1152 = vmatpush1.msra.mxu0 %v772
        %1153 = vmatprep.subr.mxu0 %v775
        %1154 = vmatpush1.msra.mxu0 %v774
        %1155 = vmatprep.subr.mxu0 %v777
        %1156 = vmatpush1.msra.mxu0 %v776
        %1157 = vmatprep.subr.mxu0 %v779
        %1158 = vmatpush1.msra.mxu0 %v778
        %1159 = vmatprep.subr.mxu0 %v781
        %1160 = vmatpush1.msra.mxu0 %v780
        %1161 = vmatprep.subr.mxu0 %v783
        %1162 = vmatpush1.msra.mxu0 %v782
        %1163 = vmatprep.subr.mxu0 %v785
        %1164 = vmatpush1.msra.mxu0 %v784
        %1165 = vmatprep.subr.mxu0 %v787
        %1166 = vmatpush1.msra.mxu0 %v786
        %1167 = vmatprep.subr.mxu0 %v789
        %1168 = vmatpush1.msra.mxu0 %v788
        %1169 = vmatprep.subr.mxu0 %v791
        %1170 = vmatpush1.msra.mxu0 %v790
        %1171 = vmatprep.subr.mxu0 %v793
        %1172 = vmatpush1.msra.mxu0 %v792
        %1173 = vmatprep.subr.mxu0 0.0
        %1174 = vmatpush1.msra.mxu0 0.0
        %1175 = vmatprep.subr.mxu0 0.0
        %1176 = vmatpush1.msra.mxu0 0.0
        %1177 = vmatprep.subr.mxu0 0.0
        %1178 = vmatpush1.msra.mxu0 0.0
        %1179 = vmatprep.subr.mxu0 0.0
        %1180 = vmatpush1.msra.mxu0 0.0
        %1181 = vmatprep.subr.mxu0 0.0
        %1182 = vmatpush1.msra.mxu0 0.0
        %1183 = vmatprep.subr.mxu0 0.0
        %1184 = vmatpush1.msra.mxu0 0.0
        %1185 = vmatprep.subr.mxu0 0.0
        %1186 = vmatpush1.msra.mxu0 0.0
        %1187 = vmatprep.subr.mxu0 0.0
        %1188 = vmatpush1.msra.mxu0 0.0
        %1189 = vmatprep.mubr.f32.mxu0 %v852
        %1190 = vmatmul.mubr.f32.gmra.mrb[0].mxu0 %v729
        %v1191 = vpop.f32.mrb[0].mxu0
        %v1192 = vadd.f32 %v1079, %v1191
        %v1193 = vpop.f32.mrb[0].mxu0
        %v1194 = vadd.f32 %v1081, %v1193
        %1195 = vmatprep.mubr.f32.mxu0 %v855
        %1196 = vmatmul.mubr.f32.gmra.mrb[0].mxu0 %v731
        %v1197 = vpop.f32.mrb[0].mxu0
        %v1198 = vadd.f32 %v1085, %v1197
        %v1199 = vpop.f32.mrb[0].mxu0
        %v1200 = vadd.f32 %v1087, %v1199
        %1201 = vmatprep.mubr.f32.mxu0 %v858
        %1202 = vmatmul.mubr.f32.gmra.mrb[0].mxu0 %v733
        %v1203 = vpop.f32.mrb[0].mxu0
        %v1204 = vadd.f32 %v1091, %v1203
        %v1205 = vpop.f32.mrb[0].mxu0
        %v1206 = vadd.f32 %v1093, %v1205
        %1207 = vmatprep.mubr.f32.mxu0 %v861
        %1208 = vmatmul.mubr.f32.gmra.mrb[0].mxu0 %v735
        %v1209 = vpop.f32.mrb[0].mxu0
        %v1210 = vadd.f32 %v1097, %v1209
        %v1211 = vpop.f32.mrb[0].mxu0
        %v1212 = vadd.f32 %v1099, %v1211
        %1213 = vmatprep.mubr.f32.mxu0 %v864
        %1214 = vmatmul.mubr.f32.gmra.mrb[0].mxu0 %v737
        %v1215 = vpop.f32.mrb[0].mxu0
        %v1216 = vadd.f32 %v1103, %v1215
        %v1217 = vpop.f32.mrb[0].mxu0
        %v1218 = vadd.f32 %v1105, %v1217
        %1219 = vmatprep.mubr.f32.mxu0 %v867
        %1220 = vmatmul.mubr.f32.gmra.mrb[0].mxu0 %v739
        %v1221 = vpop.f32.mrb[0].mxu0
        %v1222 = vadd.f32 %v1109, %v1221
        %v1223 = vpop.f32.mrb[0].mxu0
        %v1224 = vadd.f32 %v1111, %v1223
        %1225 = vmatprep.mubr.f32.mxu0 %v870
        %1226 = vmatmul.mubr.f32.gmra.mrb[0].mxu0 %v741
        %v1227 = vpop.f32.mrb[0].mxu0
        %v1228 = vadd.f32 %v1115, %v1227
        %v1229 = vpop.f32.mrb[0].mxu0
        %v1230 = vadd.f32 %v1117, %v1229
        %1231 = vmatprep.mubr.f32.mxu0 %v873
        %1232 = vmatmul.mubr.f32.gmra.mrb[0].mxu0 %v743
        %v1233 = vpop.f32.mrb[0].mxu0
        %v1234 = vadd.f32 %v1121, %v1233
        %v1235 = vpop.f32.mrb[0].mxu0
        %v1236 = vadd.f32 %v1123, %v1235
        %1237 = vdwg.mxu0
        %s1238 = scalar_lea.vmem [#allocation2], 64
        %v1239 = vld [vmem:[%s1238] sm:$0xff]
        %v1240 = vld [vmem:[%s1238 + $0x8] sm:$0xff]
        %v1241 = vld [vmem:[%s1238 + $0x10] sm:$0xff]
        %v1242 = vld [vmem:[%s1238 + $0x18] sm:$0xff]
        %v1243 = vld [vmem:[%s1238 + $0x20] sm:$0xff]
        %v1244 = vld [vmem:[%s1238 + $0x28] sm:$0xff]
        %v1245 = vld [vmem:[%s1238 + $0x30] sm:$0xff]
        %v1246 = vld [vmem:[%s1238 + $0x38] sm:$0xff]
        %s1247 = scalar_lea.vmem %s1, 768
        %v1248 = vld [vmem:[%s1247] sm:$0xff]
        %v1249 = vld [vmem:[%s1247 + $0x8] sm:$0xff]
        %v1250 = vld [vmem:[%s1247 + $0x10] sm:$0xff]
        %v1251 = vld [vmem:[%s1247 + $0x18] sm:$0xff]
        %v1252 = vld [vmem:[%s1247 + $0x20] sm:$0xff]
        %v1253 = vld [vmem:[%s1247 + $0x28] sm:$0xff]
        %v1254 = vld [vmem:[%s1247 + $0x30] sm:$0xff]
        %v1255 = vld [vmem:[%s1247 + $0x38] sm:$0xff]
        %v1256 = vld [vmem:[%s1247 + $0x40] sm:$0xff]
        %v1257 = vld [vmem:[%s1247 + $0x48] sm:$0xff]
        %v1258 = vld [vmem:[%s1247 + $0x50] sm:$0xff]
        %v1259 = vld [vmem:[%s1247 + $0x58] sm:$0xff]
        %v1260 = vld [vmem:[%s1247 + $0x60] sm:$0xff]
        %v1261 = vld [vmem:[%s1247 + $0x68] sm:$0xff]
        %v1262 = vld [vmem:[%s1247 + $0x70] sm:$0xff]
        %v1263 = vld [vmem:[%s1247 + $0x78] sm:$0xff]
        %v1264 = vld [vmem:[%s1247 + $0x80] sm:$0xff]
        %v1265 = vld [vmem:[%s1247 + $0x88] sm:$0xff]
        %v1266 = vld [vmem:[%s1247 + $0x90] sm:$0xff]
        %v1267 = vld [vmem:[%s1247 + $0x98] sm:$0xff]
        %v1268 = vld [vmem:[%s1247 + $0xa0] sm:$0xff]
        %v1269 = vld [vmem:[%s1247 + $0xa8] sm:$0xff]
        %v1270 = vld [vmem:[%s1247 + $0xb0] sm:$0xff]
        %v1271 = vld [vmem:[%s1247 + $0xb8] sm:$0xff]
        %v1272 = vld [vmem:[%s1247 + $0xc0] sm:$0xff]
        %v1273 = vld [vmem:[%s1247 + $0xc8] sm:$0xff]
        %v1274 = vld [vmem:[%s1247 + $0xd0] sm:$0xff]
        %v1275 = vld [vmem:[%s1247 + $0xd8] sm:$0xff]
        %v1276 = vld [vmem:[%s1247 + $0xe0] sm:$0xff]
        %v1277 = vld [vmem:[%s1247 + $0xe8] sm:$0xff]
        %v1278 = vld [vmem:[%s1247 + $0xf0] sm:$0xff]
        %v1279 = vld [vmem:[%s1247 + $0xf8] sm:$0xff]
        %v1280 = vld [vmem:[%s1247 + $0x100] sm:$0xff]
        %v1281 = vld [vmem:[%s1247 + $0x108] sm:$0xff]
        %v1282 = vld [vmem:[%s1247 + $0x110] sm:$0xff]
        %v1283 = vld [vmem:[%s1247 + $0x118] sm:$0xff]
        %v1284 = vld [vmem:[%s1247 + $0x120] sm:$0xff]
        %v1285 = vld [vmem:[%s1247 + $0x128] sm:$0xff]
        %v1286 = vld [vmem:[%s1247 + $0x130] sm:$0xff]
        %v1287 = vld [vmem:[%s1247 + $0x138] sm:$0xff]
        %v1288 = vld [vmem:[%s1247 + $0x140] sm:$0xff]
        %v1289 = vld [vmem:[%s1247 + $0x148] sm:$0xff]
        %v1290 = vld [vmem:[%s1247 + $0x150] sm:$0xff]
        %v1291 = vld [vmem:[%s1247 + $0x158] sm:$0xff]
        %v1292 = vld [vmem:[%s1247 + $0x160] sm:$0xff]
        %v1293 = vld [vmem:[%s1247 + $0x168] sm:$0xff]
        %v1294 = vld [vmem:[%s1247 + $0x170] sm:$0xff]
        %v1295 = vld [vmem:[%s1247 + $0x178] sm:$0xff]
        %1296 = vmatprep.subr.mxu0 %v1249
        %1297 = vmatpush1.msra.mxu0 %v1248
        %1298 = vmatprep.subr.mxu0 %v1251
        %1299 = vmatpush1.msra.mxu0 %v1250
        %1300 = vmatprep.subr.mxu0 %v1253
        %1301 = vmatpush1.msra.mxu0 %v1252
        %1302 = vmatprep.subr.mxu0 %v1255
        %1303 = vmatpush1.msra.mxu0 %v1254
        %1304 = vmatprep.subr.mxu0 %v1257
        %1305 = vmatpush1.msra.mxu0 %v1256
        %1306 = vmatprep.subr.mxu0 %v1259
        %1307 = vmatpush1.msra.mxu0 %v1258
        %1308 = vmatprep.subr.mxu0 %v1261
        %1309 = vmatpush1.msra.mxu0 %v1260
        %1310 = vmatprep.subr.mxu0 %v1263
        %1311 = vmatpush1.msra.mxu0 %v1262
        %1312 = vmatprep.subr.mxu0 %v1265
        %1313 = vmatpush1.msra.mxu0 %v1264
        %1314 = vmatprep.subr.mxu0 %v1267
        %1315 = vmatpush1.msra.mxu0 %v1266
        %1316 = vmatprep.subr.mxu0 %v1269
        %1317 = vmatpush1.msra.mxu0 %v1268
        %1318 = vmatprep.subr.mxu0 %v1271
        %1319 = vmatpush1.msra.mxu0 %v1270
        %1320 = vmatprep.subr.mxu0 %v1273
        %1321 = vmatpush1.msra.mxu0 %v1272
        %1322 = vmatprep.subr.mxu0 %v1275
        %1323 = vmatpush1.msra.mxu0 %v1274
        %1324 = vmatprep.subr.mxu0 %v1277
        %1325 = vmatpush1.msra.mxu0 %v1276
        %1326 = vmatprep.subr.mxu0 %v1279
        %1327 = vmatpush1.msra.mxu0 %v1278
        %1328 = vmatprep.subr.mxu0 %v1281
        %1329 = vmatpush1.msra.mxu0 %v1280
        %1330 = vmatprep.subr.mxu0 %v1283
        %1331 = vmatpush1.msra.mxu0 %v1282
        %1332 = vmatprep.subr.mxu0 %v1285
        %1333 = vmatpush1.msra.mxu0 %v1284
        %1334 = vmatprep.subr.mxu0 %v1287
        %1335 = vmatpush1.msra.mxu0 %v1286
        %1336 = vmatprep.subr.mxu0 %v1289
        %1337 = vmatpush1.msra.mxu0 %v1288
        %1338 = vmatprep.subr.mxu0 %v1291
        %1339 = vmatpush1.msra.mxu0 %v1290
        %1340 = vmatprep.subr.mxu0 %v1293
        %1341 = vmatpush1.msra.mxu0 %v1292
        %1342 = vmatprep.subr.mxu0 %v1295
        %1343 = vmatpush1.msra.mxu0 %v1294
        %1344 = vmatprep.subr.mxu0 0.0
        %1345 = vmatpush1.msra.mxu0 0.0
        %1346 = vmatprep.subr.mxu0 0.0
        %1347 = vmatpush1.msra.mxu0 0.0
        %1348 = vmatprep.subr.mxu0 0.0
        %1349 = vmatpush1.msra.mxu0 0.0
        %1350 = vmatprep.subr.mxu0 0.0
        %1351 = vmatpush1.msra.mxu0 0.0
        %1352 = vmatprep.subr.mxu0 0.0
        %1353 = vmatpush1.msra.mxu0 0.0
        %1354 = vmatprep.subr.mxu0 0.0
        %1355 = vmatpush1.msra.mxu0 0.0
        %1356 = vmatprep.subr.mxu0 0.0
        %1357 = vmatpush1.msra.mxu0 0.0
        %1358 = vmatprep.subr.mxu0 0.0
        %1359 = vmatpush1.msra.mxu0 0.0
        %1360 = vmatprep.mubr.f32.mxu0 %v852
        %1361 = vmatmul.mubr.f32.gmra.mrb[0].mxu0 %v729
        %v1362 = vpop.f32.mrb[0].mxu0
        %v1363 = vadd.f32 0.0, %v1362
        %v1364 = vpop.f32.mrb[0].mxu0
        %v1365 = vadd.f32 0.0, %v1364
        %1366 = vmatprep.mubr.f32.mxu0 %v855
        %1367 = vmatmul.mubr.f32.gmra.mrb[0].mxu0 %v731
        %v1368 = vpop.f32.mrb[0].mxu0
        %v1369 = vadd.f32 0.0, %v1368
        %v1370 = vpop.f32.mrb[0].mxu0
        %v1371 = vadd.f32 0.0, %v1370
        %1372 = vmatprep.mubr.f32.mxu0 %v858
        %1373 = vmatmul.mubr.f32.gmra.mrb[0].mxu0 %v733
        %v1374 = vpop.f32.mrb[0].mxu0
        %v1375 = vadd.f32 0.0, %v1374
        %v1376 = vpop.f32.mrb[0].mxu0
        %v1377 = vadd.f32 0.0, %v1376
        %1378 = vmatprep.mubr.f32.mxu0 %v861
        %1379 = vmatmul.mubr.f32.gmra.mrb[0].mxu0 %v735
        %v1380 = vpop.f32.mrb[0].mxu0
        %v1381 = vadd.f32 0.0, %v1380
        %v1382 = vpop.f32.mrb[0].mxu0
        %v1383 = vadd.f32 0.0, %v1382
        %1384 = vmatprep.mubr.f32.mxu0 %v864
        %1385 = vmatmul.mubr.f32.gmra.mrb[0].mxu0 %v737
        %v1386 = vpop.f32.mrb[0].mxu0
        %v1387 = vadd.f32 0.0, %v1386
        %v1388 = vpop.f32.mrb[0].mxu0
        %v1389 = vadd.f32 0.0, %v1388
        %1390 = vmatprep.mubr.f32.mxu0 %v867
        %1391 = vmatmul.mubr.f32.gmra.mrb[0].mxu0 %v739
        %v1392 = vpop.f32.mrb[0].mxu0
        %v1393 = vadd.f32 0.0, %v1392
        %v1394 = vpop.f32.mrb[0].mxu0
        %v1395 = vadd.f32 0.0, %v1394
        %1396 = vmatprep.mubr.f32.mxu0 %v870
        %1397 = vmatmul.mubr.f32.gmra.mrb[0].mxu0 %v741
        %v1398 = vpop.f32.mrb[0].mxu0
        %v1399 = vadd.f32 0.0, %v1398
        %v1400 = vpop.f32.mrb[0].mxu0
        %v1401 = vadd.f32 0.0, %v1400
        %1402 = vmatprep.mubr.f32.mxu0 %v873
        %1403 = vmatmul.mubr.f32.gmra.mrb[0].mxu0 %v743
        %v1404 = vpop.f32.mrb[0].mxu0
        %v1405 = vadd.f32 0.0, %v1404
        %v1406 = vpop.f32.mrb[0].mxu0
        %v1407 = vadd.f32 0.0, %v1406
        %1408 = vdwg.mxu0
        %v1410 = vsel %vm850, %v1239, 0
        %v1413 = vsel %vm850, %v1240, 0
        %v1416 = vsel %vm850, %v1241, 0
        %v1419 = vsel %vm850, %v1242, 0
        %v1422 = vsel %vm850, %v1243, 0
        %v1425 = vsel %vm850, %v1244, 0
        %v1428 = vsel %vm850, %v1245, 0
        %v1431 = vsel %vm850, %v1246, 0
        %1433 = vmatprep.subr.mxu0 %v1365
        %1434 = vmatpush1.msra.mxu0 %v1363
        %1435 = vmatprep.subr.mxu0 %v1371
        %1436 = vmatpush1.msra.mxu0 %v1369
        %1437 = vmatprep.subr.mxu0 %v1377
        %1438 = vmatpush1.msra.mxu0 %v1375
        %1439 = vmatprep.subr.mxu0 %v1383
        %1440 = vmatpush1.msra.mxu0 %v1381
        %1441 = vmatprep.subr.mxu0 %v1389
        %1442 = vmatpush1.msra.mxu0 %v1387
        %1443 = vmatprep.subr.mxu0 %v1395
        %1444 = vmatpush1.msra.mxu0 %v1393
        %1445 = vmatprep.subr.mxu0 %v1401
        %1446 = vmatpush1.msra.mxu0 %v1399
        %1447 = vmatprep.subr.mxu0 %v1407
        %1448 = vmatpush1.msra.mxu0 %v1405
        %1449 = vmatprep.subr.mxu0 0.0
        %1450 = vmatpush1.msra.mxu0 0.0
        %1451 = vmatprep.subr.mxu0 0.0
        %1452 = vmatpush1.msra.mxu0 0.0
        %1453 = vmatprep.subr.mxu0 0.0
        %1454 = vmatpush1.msra.mxu0 0.0
        %1455 = vmatprep.subr.mxu0 0.0
        %1456 = vmatpush1.msra.mxu0 0.0
        %1457 = vmatprep.subr.mxu0 0.0
        %1458 = vmatpush1.msra.mxu0 0.0
        %1459 = vmatprep.subr.mxu0 0.0
        %1460 = vmatpush1.msra.mxu0 0.0
        %1461 = vmatprep.subr.mxu0 0.0
        %1462 = vmatpush1.msra.mxu0 0.0
        %1463 = vmatprep.subr.mxu0 0.0
        %1464 = vmatpush1.msra.mxu0 0.0
        %1465 = vmatprep.subr.mxu0 0.0
        %1466 = vmatpush1.msra.mxu0 0.0
        %1467 = vmatprep.subr.mxu0 0.0
        %1468 = vmatpush1.msra.mxu0 0.0
        %1469 = vmatprep.subr.mxu0 0.0
        %1470 = vmatpush1.msra.mxu0 0.0
        %1471 = vmatprep.subr.mxu0 0.0
        %1472 = vmatpush1.msra.mxu0 0.0
        %1473 = vmatprep.subr.mxu0 0.0
        %1474 = vmatpush1.msra.mxu0 0.0
        %1475 = vmatprep.subr.mxu0 0.0
        %1476 = vmatpush1.msra.mxu0 0.0
        %1477 = vmatprep.subr.mxu0 0.0
        %1478 = vmatpush1.msra.mxu0 0.0
        %1479 = vmatprep.subr.mxu0 0.0
        %1480 = vmatpush1.msra.mxu0 0.0
        %1481 = vmatprep.subr.mxu0 0.0
        %1482 = vmatpush1.msra.mxu0 0.0
        %1483 = vmatprep.subr.mxu0 0.0
        %1484 = vmatpush1.msra.mxu0 0.0
        %1485 = vmatprep.subr.mxu0 0.0
        %1486 = vmatpush1.msra.mxu0 0.0
        %1487 = vmatprep.subr.mxu0 0.0
        %1488 = vmatpush1.msra.mxu0 0.0
        %1489 = vmatprep.subr.mxu0 0.0
        %1490 = vmatpush1.msra.mxu0 0.0
        %1491 = vmatprep.subr.mxu0 0.0
        %1492 = vmatpush1.msra.mxu0 0.0
        %1493 = vmatprep.subr.mxu0 0.0
        %1494 = vmatpush1.msra.mxu0 0.0
        %1495 = vmatprep.subr.mxu0 0.0
        %1496 = vmatpush1.msra.mxu0 0.0
        %1497 = vmatprep.mubr.f32.mxu0 0.0
        %1498 = vmatmul.mubr.f32.gmra.mrb[0].mxu0 %v1410
        %v1499 = vpop.f32.mrb[0].mxu0
        %v1500 = vadd.f32 0.0, %v1499
        %v1501 = vpop.f32.mrb[0].mxu0
        %v1502 = vadd.f32 0.0, %v1501
        %1503 = vmatprep.mubr.f32.mxu0 0.0
        %1504 = vmatmul.mubr.f32.gmra.mrb[0].mxu0 %v1413
        %v1505 = vpop.f32.mrb[0].mxu0
        %v1506 = vadd.f32 0.0, %v1505
        %v1507 = vpop.f32.mrb[0].mxu0
        %v1508 = vadd.f32 0.0, %v1507
        %1509 = vmatprep.mubr.f32.mxu0 0.0
        %1510 = vmatmul.mubr.f32.gmra.mrb[0].mxu0 %v1416
        %v1511 = vpop.f32.mrb[0].mxu0
        %v1512 = vadd.f32 0.0, %v1511
        %v1513 = vpop.f32.mrb[0].mxu0
        %v1514 = vadd.f32 0.0, %v1513
        %1515 = vmatprep.mubr.f32.mxu0 0.0
        %1516 = vmatmul.mubr.f32.gmra.mrb[0].mxu0 %v1419
        %v1517 = vpop.f32.mrb[0].mxu0
        %v1518 = vadd.f32 0.0, %v1517
        %v1519 = vpop.f32.mrb[0].mxu0
        %v1520 = vadd.f32 0.0, %v1519
        %1521 = vmatprep.mubr.f32.mxu0 0.0
        %1522 = vmatmul.mubr.f32.gmra.mrb[0].mxu0 %v1422
        %v1523 = vpop.f32.mrb[0].mxu0
        %v1524 = vadd.f32 0.0, %v1523
        %v1525 = vpop.f32.mrb[0].mxu0
        %v1526 = vadd.f32 0.0, %v1525
        %1527 = vmatprep.mubr.f32.mxu0 0.0
        %1528 = vmatmul.mubr.f32.gmra.mrb[0].mxu0 %v1425
        %v1529 = vpop.f32.mrb[0].mxu0
        %v1530 = vadd.f32 0.0, %v1529
        %v1531 = vpop.f32.mrb[0].mxu0
        %v1532 = vadd.f32 0.0, %v1531
        %1533 = vmatprep.mubr.f32.mxu0 0.0
        %1534 = vmatmul.mubr.f32.gmra.mrb[0].mxu0 %v1428
        %v1535 = vpop.f32.mrb[0].mxu0
        %v1536 = vadd.f32 0.0, %v1535
        %v1537 = vpop.f32.mrb[0].mxu0
        %v1538 = vadd.f32 0.0, %v1537
        %1539 = vmatprep.mubr.f32.mxu0 0.0
        %1540 = vmatmul.mubr.f32.gmra.mrb[0].mxu0 %v1431
        %v1541 = vpop.f32.mrb[0].mxu0
        %v1542 = vadd.f32 0.0, %v1541
        %v1543 = vpop.f32.mrb[0].mxu0
        %v1544 = vadd.f32 0.0, %v1543
        %1545 = vdwg.mxu0
        %v1546 = vadd.f32 %v1192, %v1500
        %v1547 = vadd.f32 %v1194, %v1502
        %v1548 = vadd.f32 %v1198, %v1506
        %v1549 = vadd.f32 %v1200, %v1508
        %v1550 = vadd.f32 %v1204, %v1512
        %v1551 = vadd.f32 %v1206, %v1514
        %v1552 = vadd.f32 %v1210, %v1518
        %v1553 = vadd.f32 %v1212, %v1520
        %v1554 = vadd.f32 %v1216, %v1524
        %v1555 = vadd.f32 %v1218, %v1526
        %v1556 = vadd.f32 %v1222, %v1530
        %v1557 = vadd.f32 %v1224, %v1532
        %v1558 = vadd.f32 %v1228, %v1536
        %v1559 = vadd.f32 %v1230, %v1538
        %v1560 = vadd.f32 %v1234, %v1542
        %v1561 = vadd.f32 %v1236, %v1544
        %v1562 = vld [vmem:[%s3] sm:$0xff]
        %v1563 = vld [vmem:[%s3 + $0x8] sm:$0xff]
        %v1564 = vld [vmem:[%s3 + $0x10] sm:$0xff]
        %v1565 = vld [vmem:[%s3 + $0x18] sm:$0xff]
        %v1566 = vld [vmem:[%s3 + $0x20] sm:$0xff]
        %v1567 = vld [vmem:[%s3 + $0x28] sm:$0xff]
        %v1568 = vld [vmem:[%s3 + $0x30] sm:$0xff]
        %v1569 = vld [vmem:[%s3 + $0x38] sm:$0xff]
        %v1570 = vld [vmem:[%s3 + $0x40] sm:$0xff]
        %v1571 = vld [vmem:[%s3 + $0x48] sm:$0xff]
        %v1572 = vld [vmem:[%s3 + $0x50] sm:$0xff]
        %v1573 = vld [vmem:[%s3 + $0x58] sm:$0xff]
        %v1574 = vld [vmem:[%s3 + $0x60] sm:$0xff]
        %v1575 = vld [vmem:[%s3 + $0x68] sm:$0xff]
        %v1576 = vld [vmem:[%s3 + $0x70] sm:$0xff]
        %v1577 = vld [vmem:[%s3 + $0x78] sm:$0xff]
        %v1578 = vld [vmem:[%s3 + $0x80] sm:$0xff]
        %v1579 = vld [vmem:[%s3 + $0x88] sm:$0xff]
        %v1580 = vld [vmem:[%s3 + $0x90] sm:$0xff]
        %v1581 = vld [vmem:[%s3 + $0x98] sm:$0xff]
        %v1582 = vld [vmem:[%s3 + $0xa0] sm:$0xff]
        %v1583 = vld [vmem:[%s3 + $0xa8] sm:$0xff]
        %v1584 = vld [vmem:[%s3 + $0xb0] sm:$0xff]
        %v1585 = vld [vmem:[%s3 + $0xb8] sm:$0xff]
        %v1586 = vld [vmem:[%s3 + $0xc0] sm:$0xff]
        %v1587 = vld [vmem:[%s3 + $0xc8] sm:$0xff]
        %v1588 = vld [vmem:[%s3 + $0xd0] sm:$0xff]
        %v1589 = vld [vmem:[%s3 + $0xd8] sm:$0xff]
        %v1590 = vld [vmem:[%s3 + $0xe0] sm:$0xff]
        %v1591 = vld [vmem:[%s3 + $0xe8] sm:$0xff]
        %v1592 = vld [vmem:[%s3 + $0xf0] sm:$0xff]
        %v1593 = vld [vmem:[%s3 + $0xf8] sm:$0xff]
        %1594 = vmatprep.subr.mxu0 0.0
        %1595 = vmatpush1.msra.mxu0 %v1562
        %1596 = vmatprep.subr.mxu0 0.0
        %1597 = vmatpush1.msra.mxu0 %v1563
        %1598 = vmatprep.subr.mxu0 0.0
        %1599 = vmatpush1.msra.mxu0 %v1564
        %1600 = vmatprep.subr.mxu0 0.0
        %1601 = vmatpush1.msra.mxu0 %v1565
        %1602 = vmatprep.subr.mxu0 0.0
        %1603 = vmatpush1.msra.mxu0 %v1566
        %1604 = vmatprep.subr.mxu0 0.0
        %1605 = vmatpush1.msra.mxu0 %v1567
        %1606 = vmatprep.subr.mxu0 0.0
        %1607 = vmatpush1.msra.mxu0 %v1568
        %1608 = vmatprep.subr.mxu0 0.0
        %1609 = vmatpush1.msra.mxu0 %v1569
        %1610 = vmatprep.subr.mxu0 0.0
        %1611 = vmatpush1.msra.mxu0 %v1570
        %1612 = vmatprep.subr.mxu0 0.0
        %1613 = vmatpush1.msra.mxu0 %v1571
        %1614 = vmatprep.subr.mxu0 0.0
        %1615 = vmatpush1.msra.mxu0 %v1572
        %1616 = vmatprep.subr.mxu0 0.0
        %1617 = vmatpush1.msra.mxu0 %v1573
        %1618 = vmatprep.subr.mxu0 0.0
        %1619 = vmatpush1.msra.mxu0 %v1574
        %1620 = vmatprep.subr.mxu0 0.0
        %1621 = vmatpush1.msra.mxu0 %v1575
        %1622 = vmatprep.subr.mxu0 0.0
        %1623 = vmatpush1.msra.mxu0 %v1576
        %1624 = vmatprep.subr.mxu0 0.0
        %1625 = vmatpush1.msra.mxu0 %v1577
        %1626 = vmatprep.subr.mxu0 0.0
        %1627 = vmatpush1.msra.mxu0 %v1578
        %1628 = vmatprep.subr.mxu0 0.0
        %1629 = vmatpush1.msra.mxu0 %v1579
        %1630 = vmatprep.subr.mxu0 0.0
        %1631 = vmatpush1.msra.mxu0 %v1580
        %1632 = vmatprep.subr.mxu0 0.0
        %1633 = vmatpush1.msra.mxu0 %v1581
        %1634 = vmatprep.subr.mxu0 0.0
        %1635 = vmatpush1.msra.mxu0 %v1582
        %1636 = vmatprep.subr.mxu0 0.0
        %1637 = vmatpush1.msra.mxu0 %v1583
        %1638 = vmatprep.subr.mxu0 0.0
        %1639 = vmatpush1.msra.mxu0 %v1584
        %1640 = vmatprep.subr.mxu0 0.0
        %1641 = vmatpush1.msra.mxu0 %v1585
        %1642 = vmatprep.subr.mxu0 0.0
        %1643 = vmatpush1.msra.mxu0 %v1586
        %1644 = vmatprep.subr.mxu0 0.0
        %1645 = vmatpush1.msra.mxu0 %v1587
        %1646 = vmatprep.subr.mxu0 0.0
        %1647 = vmatpush1.msra.mxu0 %v1588
        %1648 = vmatprep.subr.mxu0 0.0
        %1649 = vmatpush1.msra.mxu0 %v1589
        %1650 = vmatprep.subr.mxu0 0.0
        %1651 = vmatpush1.msra.mxu0 %v1590
        %1652 = vmatprep.subr.mxu0 0.0
        %1653 = vmatpush1.msra.mxu0 %v1591
        %1654 = vmatprep.subr.mxu0 0.0
        %1655 = vmatpush1.msra.mxu0 %v1592
        %1656 = vmatprep.subr.mxu0 0.0
        %1657 = vmatpush1.msra.mxu0 %v1593
        %1658 = vmatprep.mubr.f32.mxu0 %v1547
        %1659 = vmatmul.mubr.f32.gmra.mrb[0].mxu0 %v1546
        %v1660 = vpop.f32.mrb[0].mxu0
        %v1661 = vadd.f32 0.0, %v1660
        %v1662 = vpop.f32.mrb[0].mxu0
        %1663 = vmatprep.mubr.f32.mxu0 %v1549
        %1664 = vmatmul.mubr.f32.gmra.mrb[0].mxu0 %v1548
        %v1665 = vpop.f32.mrb[0].mxu0
        %v1666 = vadd.f32 0.0, %v1665
        %v1667 = vpop.f32.mrb[0].mxu0
        %1668 = vmatprep.mubr.f32.mxu0 %v1551
        %1669 = vmatmul.mubr.f32.gmra.mrb[0].mxu0 %v1550
        %v1670 = vpop.f32.mrb[0].mxu0
        %v1671 = vadd.f32 0.0, %v1670
        %v1672 = vpop.f32.mrb[0].mxu0
        %1673 = vmatprep.mubr.f32.mxu0 %v1553
        %1674 = vmatmul.mubr.f32.gmra.mrb[0].mxu0 %v1552
        %v1675 = vpop.f32.mrb[0].mxu0
        %v1676 = vadd.f32 0.0, %v1675
        %v1677 = vpop.f32.mrb[0].mxu0
        %1678 = vmatprep.mubr.f32.mxu0 %v1555
        %1679 = vmatmul.mubr.f32.gmra.mrb[0].mxu0 %v1554
        %v1680 = vpop.f32.mrb[0].mxu0
        %v1681 = vadd.f32 0.0, %v1680
        %v1682 = vpop.f32.mrb[0].mxu0
        %1683 = vmatprep.mubr.f32.mxu0 %v1557
        %1684 = vmatmul.mubr.f32.gmra.mrb[0].mxu0 %v1556
        %v1685 = vpop.f32.mrb[0].mxu0
        %v1686 = vadd.f32 0.0, %v1685
        %v1687 = vpop.f32.mrb[0].mxu0
        %1688 = vmatprep.mubr.f32.mxu0 %v1559
        %1689 = vmatmul.mubr.f32.gmra.mrb[0].mxu0 %v1558
        %v1690 = vpop.f32.mrb[0].mxu0
        %v1691 = vadd.f32 0.0, %v1690
        %v1692 = vpop.f32.mrb[0].mxu0
        %1693 = vmatprep.mubr.f32.mxu0 %v1561
        %1694 = vmatmul.mubr.f32.gmra.mrb[0].mxu0 %v1560
        %v1695 = vpop.f32.mrb[0].mxu0
        %v1696 = vadd.f32 0.0, %v1695
        %v1697 = vpop.f32.mrb[0].mxu0
        %1698 = vdwg.mxu0
        %s1699 = scalar_lea.vmem %s3, 256
        %v1700 = vld [vmem:[%s1699] sm:$0xff]
        %v1701 = vld [vmem:[%s1699 + $0x8] sm:$0xff]
        %v1702 = vld [vmem:[%s1699 + $0x10] sm:$0xff]
        %v1703 = vld [vmem:[%s1699 + $0x18] sm:$0xff]
        %v1704 = vld [vmem:[%s1699 + $0x20] sm:$0xff]
        %v1705 = vld [vmem:[%s1699 + $0x28] sm:$0xff]
        %v1706 = vld [vmem:[%s1699 + $0x30] sm:$0xff]
        %v1707 = vld [vmem:[%s1699 + $0x38] sm:$0xff]
        %v1708 = vld [vmem:[%s1699 + $0x40] sm:$0xff]
        %v1709 = vld [vmem:[%s1699 + $0x48] sm:$0xff]
        %v1710 = vld [vmem:[%s1699 + $0x50] sm:$0xff]
        %v1711 = vld [vmem:[%s1699 + $0x58] sm:$0xff]
        %v1712 = vld [vmem:[%s1699 + $0x60] sm:$0xff]
        %v1713 = vld [vmem:[%s1699 + $0x68] sm:$0xff]
        %v1714 = vld [vmem:[%s1699 + $0x70] sm:$0xff]
        %v1715 = vld [vmem:[%s1699 + $0x78] sm:$0xff]
        %v1716 = vld [vmem:[%s1699 + $0x80] sm:$0xff]
        %v1717 = vld [vmem:[%s1699 + $0x88] sm:$0xff]
        %v1718 = vld [vmem:[%s1699 + $0x90] sm:$0xff]
        %v1719 = vld [vmem:[%s1699 + $0x98] sm:$0xff]
        %v1720 = vld [vmem:[%s1699 + $0xa0] sm:$0xff]
        %v1721 = vld [vmem:[%s1699 + $0xa8] sm:$0xff]
        %v1722 = vld [vmem:[%s1699 + $0xb0] sm:$0xff]
        %v1723 = vld [vmem:[%s1699 + $0xb8] sm:$0xff]
        %v1724 = vld [vmem:[%s1699 + $0xc0] sm:$0xff]
        %v1725 = vld [vmem:[%s1699 + $0xc8] sm:$0xff]
        %v1726 = vld [vmem:[%s1699 + $0xd0] sm:$0xff]
        %v1727 = vld [vmem:[%s1699 + $0xd8] sm:$0xff]
        %v1728 = vld [vmem:[%s1699 + $0xe0] sm:$0xff]
        %v1729 = vld [vmem:[%s1699 + $0xe8] sm:$0xff]
        %v1730 = vld [vmem:[%s1699 + $0xf0] sm:$0xff]
        %v1731 = vld [vmem:[%s1699 + $0xf8] sm:$0xff]
        %1732 = vmatprep.subr.mxu0 0.0
        %1733 = vmatpush1.msra.mxu0 %v1700
        %1734 = vmatprep.subr.mxu0 0.0
        %1735 = vmatpush1.msra.mxu0 %v1701
        %1736 = vmatprep.subr.mxu0 0.0
        %1737 = vmatpush1.msra.mxu0 %v1702
        %1738 = vmatprep.subr.mxu0 0.0
        %1739 = vmatpush1.msra.mxu0 %v1703
        %1740 = vmatprep.subr.mxu0 0.0
        %1741 = vmatpush1.msra.mxu0 %v1704
        %1742 = vmatprep.subr.mxu0 0.0
        %1743 = vmatpush1.msra.mxu0 %v1705
        %1744 = vmatprep.subr.mxu0 0.0
        %1745 = vmatpush1.msra.mxu0 %v1706
        %1746 = vmatprep.subr.mxu0 0.0
        %1747 = vmatpush1.msra.mxu0 %v1707
        %1748 = vmatprep.subr.mxu0 0.0
        %1749 = vmatpush1.msra.mxu0 %v1708
        %1750 = vmatprep.subr.mxu0 0.0
        %1751 = vmatpush1.msra.mxu0 %v1709
        %1752 = vmatprep.subr.mxu0 0.0
        %1753 = vmatpush1.msra.mxu0 %v1710
        %1754 = vmatprep.subr.mxu0 0.0
        %1755 = vmatpush1.msra.mxu0 %v1711
        %1756 = vmatprep.subr.mxu0 0.0
        %1757 = vmatpush1.msra.mxu0 %v1712
        %1758 = vmatprep.subr.mxu0 0.0
        %1759 = vmatpush1.msra.mxu0 %v1713
        %1760 = vmatprep.subr.mxu0 0.0
        %1761 = vmatpush1.msra.mxu0 %v1714
        %1762 = vmatprep.subr.mxu0 0.0
        %1763 = vmatpush1.msra.mxu0 %v1715
        %1764 = vmatprep.subr.mxu0 0.0
        %1765 = vmatpush1.msra.mxu0 %v1716
        %1766 = vmatprep.subr.mxu0 0.0
        %1767 = vmatpush1.msra.mxu0 %v1717
        %1768 = vmatprep.subr.mxu0 0.0
        %1769 = vmatpush1.msra.mxu0 %v1718
        %1770 = vmatprep.subr.mxu0 0.0
        %1771 = vmatpush1.msra.mxu0 %v1719
        %1772 = vmatprep.subr.mxu0 0.0
        %1773 = vmatpush1.msra.mxu0 %v1720
        %1774 = vmatprep.subr.mxu0 0.0
        %1775 = vmatpush1.msra.mxu0 %v1721
        %1776 = vmatprep.subr.mxu0 0.0
        %1777 = vmatpush1.msra.mxu0 %v1722
        %1778 = vmatprep.subr.mxu0 0.0
        %1779 = vmatpush1.msra.mxu0 %v1723
        %1780 = vmatprep.subr.mxu0 0.0
        %1781 = vmatpush1.msra.mxu0 %v1724
        %1782 = vmatprep.subr.mxu0 0.0
        %1783 = vmatpush1.msra.mxu0 %v1725
        %1784 = vmatprep.subr.mxu0 0.0
        %1785 = vmatpush1.msra.mxu0 %v1726
        %1786 = vmatprep.subr.mxu0 0.0
        %1787 = vmatpush1.msra.mxu0 %v1727
        %1788 = vmatprep.subr.mxu0 0.0
        %1789 = vmatpush1.msra.mxu0 %v1728
        %1790 = vmatprep.subr.mxu0 0.0
        %1791 = vmatpush1.msra.mxu0 %v1729
        %1792 = vmatprep.subr.mxu0 0.0
        %1793 = vmatpush1.msra.mxu0 %v1730
        %1794 = vmatprep.subr.mxu0 0.0
        %1795 = vmatpush1.msra.mxu0 %v1731
        %1796 = vmatprep.mubr.f32.mxu0 %v1547
        %1797 = vmatmul.mubr.f32.gmra.mrb[0].mxu0 %v1546
        %v1798 = vpop.f32.mrb[0].mxu0
        %v1799 = vadd.f32 0.0, %v1798
        %v1800 = vpop.f32.mrb[0].mxu0
        %1801 = vmatprep.mubr.f32.mxu0 %v1549
        %1802 = vmatmul.mubr.f32.gmra.mrb[0].mxu0 %v1548
        %v1803 = vpop.f32.mrb[0].mxu0
        %v1804 = vadd.f32 0.0, %v1803
        %v1805 = vpop.f32.mrb[0].mxu0
        %1806 = vmatprep.mubr.f32.mxu0 %v1551
        %1807 = vmatmul.mubr.f32.gmra.mrb[0].mxu0 %v1550
        %v1808 = vpop.f32.mrb[0].mxu0
        %v1809 = vadd.f32 0.0, %v1808
        %v1810 = vpop.f32.mrb[0].mxu0
        %1811 = vmatprep.mubr.f32.mxu0 %v1553
        %1812 = vmatmul.mubr.f32.gmra.mrb[0].mxu0 %v1552
        %v1813 = vpop.f32.mrb[0].mxu0
        %v1814 = vadd.f32 0.0, %v1813
        %v1815 = vpop.f32.mrb[0].mxu0
        %1816 = vmatprep.mubr.f32.mxu0 %v1555
        %1817 = vmatmul.mubr.f32.gmra.mrb[0].mxu0 %v1554
        %v1818 = vpop.f32.mrb[0].mxu0
        %v1819 = vadd.f32 0.0, %v1818
        %v1820 = vpop.f32.mrb[0].mxu0
        %1821 = vmatprep.mubr.f32.mxu0 %v1557
        %1822 = vmatmul.mubr.f32.gmra.mrb[0].mxu0 %v1556
        %v1823 = vpop.f32.mrb[0].mxu0
        %v1824 = vadd.f32 0.0, %v1823
        %v1825 = vpop.f32.mrb[0].mxu0
        %1826 = vmatprep.mubr.f32.mxu0 %v1559
        %1827 = vmatmul.mubr.f32.gmra.mrb[0].mxu0 %v1558
        %v1828 = vpop.f32.mrb[0].mxu0
        %v1829 = vadd.f32 0.0, %v1828
        %v1830 = vpop.f32.mrb[0].mxu0
        %1831 = vmatprep.mubr.f32.mxu0 %v1561
        %1832 = vmatmul.mubr.f32.gmra.mrb[0].mxu0 %v1560
        %v1833 = vpop.f32.mrb[0].mxu0
        %v1834 = vadd.f32 0.0, %v1833
        %v1835 = vpop.f32.mrb[0].mxu0
        %1836 = vdwg.mxu0
        %v1837 = vmax.f32 %v1661, %v1799
        %v1838 = vmax.f32 %v1666, %v1804
        %v1839 = vmax.f32 %v1671, %v1809
        %v1840 = vmax.f32 %v1676, %v1814
        %v1841 = vmax.f32 %v1681, %v1819
        %v1842 = vmax.f32 %v1686, %v1824
        %v1843 = vmax.f32 %v1691, %v1829
        %v1844 = vmax.f32 %v1696, %v1834
        %v1845 = vld [vmem:[#allocation5] sm:$0xff]
        %v1846 = vld [vmem:[#allocation5 + $0x8] sm:$0xff]
        %v1847 = vld [vmem:[#allocation5 + $0x10] sm:$0xff]
        %v1848 = vld [vmem:[#allocation5 + $0x18] sm:$0xff]
        %v1850 = vsel %vm850, %v1845, 0
        %v1853 = vsel %vm850, %v1846, 0
        %v1856 = vsel %vm850, %v1847, 0
        %v1859 = vsel %vm850, %v1848, 0
        %1861 = vmatprep.subr.mxu0 0.0
        %1862 = vmatpush1.msra.mxu0 %v1837
        %1863 = vmatprep.subr.mxu0 0.0
        %1864 = vmatpush1.msra.mxu0 %v1838
        %1865 = vmatprep.subr.mxu0 0.0
        %1866 = vmatpush1.msra.mxu0 %v1839
        %1867 = vmatprep.subr.mxu0 0.0
        %1868 = vmatpush1.msra.mxu0 %v1840
        %1869 = vmatprep.subr.mxu0 0.0
        %1870 = vmatpush1.msra.mxu0 %v1841
        %1871 = vmatprep.subr.mxu0 0.0
        %1872 = vmatpush1.msra.mxu0 %v1842
        %1873 = vmatprep.subr.mxu0 0.0
        %1874 = vmatpush1.msra.mxu0 %v1843
        %1875 = vmatprep.subr.mxu0 0.0
        %1876 = vmatpush1.msra.mxu0 %v1844
        %1877 = vmatprep.subr.mxu0 0.0
        %1878 = vmatpush1.msra.mxu0 0.0
        %1879 = vmatprep.subr.mxu0 0.0
        %1880 = vmatpush1.msra.mxu0 0.0
        %1881 = vmatprep.subr.mxu0 0.0
        %1882 = vmatpush1.msra.mxu0 0.0
        %1883 = vmatprep.subr.mxu0 0.0
        %1884 = vmatpush1.msra.mxu0 0.0
        %1885 = vmatprep.subr.mxu0 0.0
        %1886 = vmatpush1.msra.mxu0 0.0
        %1887 = vmatprep.subr.mxu0 0.0
        %1888 = vmatpush1.msra.mxu0 0.0
        %1889 = vmatprep.subr.mxu0 0.0
        %1890 = vmatpush1.msra.mxu0 0.0
        %1891 = vmatprep.subr.mxu0 0.0
        %1892 = vmatpush1.msra.mxu0 0.0
        %1893 = vmatprep.subr.mxu0 0.0
        %1894 = vmatpush1.msra.mxu0 0.0
        %1895 = vmatprep.subr.mxu0 0.0
        %1896 = vmatpush1.msra.mxu0 0.0
        %1897 = vmatprep.subr.mxu0 0.0
        %1898 = vmatpush1.msra.mxu0 0.0
        %1899 = vmatprep.subr.mxu0 0.0
        %1900 = vmatpush1.msra.mxu0 0.0
        %1901 = vmatprep.subr.mxu0 0.0
        %1902 = vmatpush1.msra.mxu0 0.0
        %1903 = vmatprep.subr.mxu0 0.0
        %1904 = vmatpush1.msra.mxu0 0.0
        %1905 = vmatprep.subr.mxu0 0.0
        %1906 = vmatpush1.msra.mxu0 0.0
        %1907 = vmatprep.subr.mxu0 0.0
        %1908 = vmatpush1.msra.mxu0 0.0
        %1909 = vmatprep.subr.mxu0 0.0
        %1910 = vmatpush1.msra.mxu0 0.0
        %1911 = vmatprep.subr.mxu0 0.0
        %1912 = vmatpush1.msra.mxu0 0.0
        %1913 = vmatprep.subr.mxu0 0.0
        %1914 = vmatpush1.msra.mxu0 0.0
        %1915 = vmatprep.subr.mxu0 0.0
        %1916 = vmatpush1.msra.mxu0 0.0
        %1917 = vmatprep.subr.mxu0 0.0
        %1918 = vmatpush1.msra.mxu0 0.0
        %1919 = vmatprep.subr.mxu0 0.0
        %1920 = vmatpush1.msra.mxu0 0.0
        %1921 = vmatprep.subr.mxu0 0.0
        %1922 = vmatpush1.msra.mxu0 0.0
        %1923 = vmatprep.subr.mxu0 0.0
        %1924 = vmatpush1.msra.mxu0 0.0
        %1925 = vmatprep.mubr.f32.mxu0 0.0
        %1926 = vmatmul.mubr.f32.gmra.mrb[0].mxu0 %v1850
        %v1927 = vpop.f32.mrb[0].mxu0
        %v1928 = vadd.f32 0.0, %v1927
        %v1929 = vpop.f32.mrb[0].mxu0
        %1930 = vmatprep.mubr.f32.mxu0 0.0
        %1931 = vmatmul.mubr.f32.gmra.mrb[0].mxu0 %v1853
        %v1932 = vpop.f32.mrb[0].mxu0
        %v1933 = vadd.f32 0.0, %v1932
        %v1934 = vpop.f32.mrb[0].mxu0
        %1935 = vmatprep.mubr.f32.mxu0 0.0
        %1936 = vmatmul.mubr.f32.gmra.mrb[0].mxu0 %v1856
        %v1937 = vpop.f32.mrb[0].mxu0
        %v1938 = vadd.f32 0.0, %v1937
        %v1939 = vpop.f32.mrb[0].mxu0
        %1940 = vmatprep.mubr.f32.mxu0 0.0
        %1941 = vmatmul.mubr.f32.gmra.mrb[0].mxu0 %v1859
        %v1942 = vpop.f32.mrb[0].mxu0
        %v1943 = vadd.f32 0.0, %v1942
        %v1944 = vpop.f32.mrb[0].mxu0
        %1945 = vdwg.mxu0
        %s1946 = scalar_lea.vmem [#allocation5], 32
        %v1947 = vld [vmem:[%s1946] sm:$0xff]
        %v1948 = vld [vmem:[%s1946 + $0x8] sm:$0xff]
        %v1949 = vld [vmem:[%s1946 + $0x10] sm:$0xff]
        %v1950 = vld [vmem:[%s1946 + $0x18] sm:$0xff]
        %v1952 = vsel %vm850, %v1947, 0
        %v1955 = vsel %vm850, %v1948, 0
        %v1958 = vsel %vm850, %v1949, 0
        %v1961 = vsel %vm850, %v1950, 0
        %1963 = vmatprep.subr.mxu0 0.0
        %1964 = vmatpush1.msra.mxu0 %v1837
        %1965 = vmatprep.subr.mxu0 0.0
        %1966 = vmatpush1.msra.mxu0 %v1838
        %1967 = vmatprep.subr.mxu0 0.0
        %1968 = vmatpush1.msra.mxu0 %v1839
        %1969 = vmatprep.subr.mxu0 0.0
        %1970 = vmatpush1.msra.mxu0 %v1840
        %1971 = vmatprep.subr.mxu0 0.0
        %1972 = vmatpush1.msra.mxu0 %v1841
        %1973 = vmatprep.subr.mxu0 0.0
        %1974 = vmatpush1.msra.mxu0 %v1842
        %1975 = vmatprep.subr.mxu0 0.0
        %1976 = vmatpush1.msra.mxu0 %v1843
        %1977 = vmatprep.subr.mxu0 0.0
        %1978 = vmatpush1.msra.mxu0 %v1844
        %1979 = vmatprep.subr.mxu0 0.0
        %1980 = vmatpush1.msra.mxu0 0.0
        %1981 = vmatprep.subr.mxu0 0.0
        %1982 = vmatpush1.msra.mxu0 0.0
        %1983 = vmatprep.subr.mxu0 0.0
        %1984 = vmatpush1.msra.mxu0 0.0
        %1985 = vmatprep.subr.mxu0 0.0
        %1986 = vmatpush1.msra.mxu0 0.0
        %1987 = vmatprep.subr.mxu0 0.0
        %1988 = vmatpush1.msra.mxu0 0.0
        %1989 = vmatprep.subr.mxu0 0.0
        %1990 = vmatpush1.msra.mxu0 0.0
        %1991 = vmatprep.subr.mxu0 0.0
        %1992 = vmatpush1.msra.mxu0 0.0
        %1993 = vmatprep.subr.mxu0 0.0
        %1994 = vmatpush1.msra.mxu0 0.0
        %1995 = vmatprep.subr.mxu0 0.0
        %1996 = vmatpush1.msra.mxu0 0.0
        %1997 = vmatprep.subr.mxu0 0.0
        %1998 = vmatpush1.msra.mxu0 0.0
        %1999 = vmatprep.subr.mxu0 0.0
        %2000 = vmatpush1.msra.mxu0 0.0
        %2001 = vmatprep.subr.mxu0 0.0
        %2002 = vmatpush1.msra.mxu0 0.0
        %2003 = vmatprep.subr.mxu0 0.0
        %2004 = vmatpush1.msra.mxu0 0.0
        %2005 = vmatprep.subr.mxu0 0.0
        %2006 = vmatpush1.msra.mxu0 0.0
        %2007 = vmatprep.subr.mxu0 0.0
        %2008 = vmatpush1.msra.mxu0 0.0
        %2009 = vmatprep.subr.mxu0 0.0
        %2010 = vmatpush1.msra.mxu0 0.0
        %2011 = vmatprep.subr.mxu0 0.0
        %2012 = vmatpush1.msra.mxu0 0.0
        %2013 = vmatprep.subr.mxu0 0.0
        %2014 = vmatpush1.msra.mxu0 0.0
        %2015 = vmatprep.subr.mxu0 0.0
        %2016 = vmatpush1.msra.mxu0 0.0
        %2017 = vmatprep.subr.mxu0 0.0
        %2018 = vmatpush1.msra.mxu0 0.0
        %2019 = vmatprep.subr.mxu0 0.0
        %2020 = vmatpush1.msra.mxu0 0.0
        %2021 = vmatprep.subr.mxu0 0.0
        %2022 = vmatpush1.msra.mxu0 0.0
        %2023 = vmatprep.subr.mxu0 0.0
        %2024 = vmatpush1.msra.mxu0 0.0
        %2025 = vmatprep.subr.mxu0 0.0
        %2026 = vmatpush1.msra.mxu0 0.0
        %2027 = vmatprep.mubr.f32.mxu0 0.0
        %2028 = vmatmul.mubr.f32.gmra.mrb[0].mxu0 %v1952
        %v2029 = vpop.f32.mrb[0].mxu0
        %v2030 = vadd.f32 0.0, %v2029
        %v2031 = vpop.f32.mrb[0].mxu0
        %2032 = vmatprep.mubr.f32.mxu0 0.0
        %2033 = vmatmul.mubr.f32.gmra.mrb[0].mxu0 %v1955
        %v2034 = vpop.f32.mrb[0].mxu0
        %v2035 = vadd.f32 0.0, %v2034
        %v2036 = vpop.f32.mrb[0].mxu0
        %2037 = vmatprep.mubr.f32.mxu0 0.0
        %2038 = vmatmul.mubr.f32.gmra.mrb[0].mxu0 %v1958
        %v2039 = vpop.f32.mrb[0].mxu0
        %v2040 = vadd.f32 0.0, %v2039
        %v2041 = vpop.f32.mrb[0].mxu0
        %2042 = vmatprep.mubr.f32.mxu0 0.0
        %2043 = vmatmul.mubr.f32.gmra.mrb[0].mxu0 %v1961
        %v2044 = vpop.f32.mrb[0].mxu0
        %v2045 = vadd.f32 0.0, %v2044
        %v2046 = vpop.f32.mrb[0].mxu0
        %2047 = vdwg.mxu0
        %v2048 = vmax.f32 %v1928, %v2030
        %v2049 = vmax.f32 %v1933, %v2035
        %v2050 = vmax.f32 %v1938, %v2040
        %v2051 = vmax.f32 %v1943, %v2045
        %v2052 = vld [vmem:[%s5] sm:$0x1]
        %v2054 = vlaneseq
        %v2055 = vshrl.u32 %v2054, 7
        %v2056 = vsub.s32 0, %v2055
        %v2057 = vrot.slane %v2052, %v2056
        %v2059 = vadd.f32 %v2048, %v2057
        %v2060 = vadd.f32 %v2049, %v2057
        %v2061 = vadd.f32 %v2050, %v2057
        %v2062 = vadd.f32 %v2051, %v2057
        %v2063 = vmax.f32 %v2059, 0.0
        %v2064 = vmax.f32 %v2060, 0.0
        %v2065 = vmax.f32 %v2061, 0.0
        %v2066 = vmax.f32 %v2062, 0.0
        %s2067 = scalar_lea.vmem %s6, 256
        %v2068 = vld [vmem:[%s2067] sm:$0xff]
        %v2069 = vld [vmem:[%s2067 + $0x8] sm:$0xff]
        %v2070 = vld [vmem:[%s2067 + $0x10] sm:$0xff]
        %v2071 = vld [vmem:[%s2067 + $0x18] sm:$0xff]
        %v2072 = vld [vmem:[%s2067 + $0x20] sm:$0xff]
        %v2073 = vld [vmem:[%s2067 + $0x28] sm:$0xff]
        %v2074 = vld [vmem:[%s2067 + $0x30] sm:$0xff]
        %v2075 = vld [vmem:[%s2067 + $0x38] sm:$0xff]
        %v2076 = vld [vmem:[%s2067 + $0x40] sm:$0xff]
        %v2077 = vld [vmem:[%s2067 + $0x48] sm:$0xff]
        %v2078 = vld [vmem:[%s2067 + $0x50] sm:$0xff]
        %v2079 = vld [vmem:[%s2067 + $0x58] sm:$0xff]
        %v2080 = vld [vmem:[%s2067 + $0x60] sm:$0xff]
        %v2081 = vld [vmem:[%s2067 + $0x68] sm:$0xff]
        %v2082 = vld [vmem:[%s2067 + $0x70] sm:$0xff]
        %v2083 = vld [vmem:[%s2067 + $0x78] sm:$0xff]
        %v2084 = vld [vmem:[%s2067 + $0x80] sm:$0xff]
        %v2085 = vld [vmem:[%s2067 + $0x88] sm:$0xff]
        %v2086 = vld [vmem:[%s2067 + $0x90] sm:$0xff]
        %v2087 = vld [vmem:[%s2067 + $0x98] sm:$0xff]
        %v2088 = vld [vmem:[%s2067 + $0xa0] sm:$0xff]
        %v2089 = vld [vmem:[%s2067 + $0xa8] sm:$0xff]
        %v2090 = vld [vmem:[%s2067 + $0xb0] sm:$0xff]
        %v2091 = vld [vmem:[%s2067 + $0xb8] sm:$0xff]
        %v2092 = vld [vmem:[%s2067 + $0xc0] sm:$0xff]
        %v2093 = vld [vmem:[%s2067 + $0xc8] sm:$0xff]
        %v2094 = vld [vmem:[%s2067 + $0xd0] sm:$0xff]
        %v2095 = vld [vmem:[%s2067 + $0xd8] sm:$0xff]
        %v2096 = vld [vmem:[%s2067 + $0xe0] sm:$0xff]
        %v2097 = vld [vmem:[%s2067 + $0xe8] sm:$0xff]
        %v2098 = vld [vmem:[%s2067 + $0xf0] sm:$0xff]
        %v2099 = vld [vmem:[%s2067 + $0xf8] sm:$0xff]
        %v2100 = vld [vmem:[#allocation7] sm:$0xff]
        %v2101 = vld [vmem:[#allocation7 + $0x8] sm:$0xff]
        %v2102 = vld [vmem:[#allocation7 + $0x10] sm:$0xff]
        %v2103 = vld [vmem:[#allocation7 + $0x18] sm:$0xff]
        %v2104 = vld [vmem:[%s6] sm:$0xff]
        %v2105 = vld [vmem:[%s6 + $0x8] sm:$0xff]
        %v2106 = vld [vmem:[%s6 + $0x10] sm:$0xff]
        %v2107 = vld [vmem:[%s6 + $0x18] sm:$0xff]
        %v2108 = vld [vmem:[%s6 + $0x20] sm:$0xff]
        %v2109 = vld [vmem:[%s6 + $0x28] sm:$0xff]
        %v2110 = vld [vmem:[%s6 + $0x30] sm:$0xff]
        %v2111 = vld [vmem:[%s6 + $0x38] sm:$0xff]
        %v2112 = vld [vmem:[%s6 + $0x40] sm:$0xff]
        %v2113 = vld [vmem:[%s6 + $0x48] sm:$0xff]
        %v2114 = vld [vmem:[%s6 + $0x50] sm:$0xff]
        %v2115 = vld [vmem:[%s6 + $0x58] sm:$0xff]
        %v2116 = vld [vmem:[%s6 + $0x60] sm:$0xff]
        %v2117 = vld [vmem:[%s6 + $0x68] sm:$0xff]
        %v2118 = vld [vmem:[%s6 + $0x70] sm:$0xff]
        %v2119 = vld [vmem:[%s6 + $0x78] sm:$0xff]
        %v2120 = vld [vmem:[%s6 + $0x80] sm:$0xff]
        %v2121 = vld [vmem:[%s6 + $0x88] sm:$0xff]
        %v2122 = vld [vmem:[%s6 + $0x90] sm:$0xff]
        %v2123 = vld [vmem:[%s6 + $0x98] sm:$0xff]
        %v2124 = vld [vmem:[%s6 + $0xa0] sm:$0xff]
        %v2125 = vld [vmem:[%s6 + $0xa8] sm:$0xff]
        %v2126 = vld [vmem:[%s6 + $0xb0] sm:$0xff]
        %v2127 = vld [vmem:[%s6 + $0xb8] sm:$0xff]
        %v2128 = vld [vmem:[%s6 + $0xc0] sm:$0xff]
        %v2129 = vld [vmem:[%s6 + $0xc8] sm:$0xff]
        %v2130 = vld [vmem:[%s6 + $0xd0] sm:$0xff]
        %v2131 = vld [vmem:[%s6 + $0xd8] sm:$0xff]
        %v2132 = vld [vmem:[%s6 + $0xe0] sm:$0xff]
        %v2133 = vld [vmem:[%s6 + $0xe8] sm:$0xff]
        %v2134 = vld [vmem:[%s6 + $0xf0] sm:$0xff]
        %v2135 = vld [vmem:[%s6 + $0xf8] sm:$0xff]
        %2136 = vmatprep.subr.mxu0 %v2105
        %2137 = vmatpush1.msra.mxu0 %v2104
        %2138 = vmatprep.subr.mxu0 %v2107
        %2139 = vmatpush1.msra.mxu0 %v2106
        %2140 = vmatprep.subr.mxu0 %v2109
        %2141 = vmatpush1.msra.mxu0 %v2108
        %2142 = vmatprep.subr.mxu0 %v2111
        %2143 = vmatpush1.msra.mxu0 %v2110
        %2144 = vmatprep.subr.mxu0 %v2113
        %2145 = vmatpush1.msra.mxu0 %v2112
        %2146 = vmatprep.subr.mxu0 %v2115
        %2147 = vmatpush1.msra.mxu0 %v2114
        %2148 = vmatprep.subr.mxu0 %v2117
        %2149 = vmatpush1.msra.mxu0 %v2116
        %2150 = vmatprep.subr.mxu0 %v2119
        %2151 = vmatpush1.msra.mxu0 %v2118
        %2152 = vmatprep.subr.mxu0 %v2121
        %2153 = vmatpush1.msra.mxu0 %v2120
        %2154 = vmatprep.subr.mxu0 %v2123
        %2155 = vmatpush1.msra.mxu0 %v2122
        %2156 = vmatprep.subr.mxu0 %v2125
        %2157 = vmatpush1.msra.mxu0 %v2124
        %2158 = vmatprep.subr.mxu0 %v2127
        %2159 = vmatpush1.msra.mxu0 %v2126
        %2160 = vmatprep.subr.mxu0 %v2129
        %2161 = vmatpush1.msra.mxu0 %v2128
        %2162 = vmatprep.subr.mxu0 %v2131
        %2163 = vmatpush1.msra.mxu0 %v2130
        %2164 = vmatprep.subr.mxu0 %v2133
        %2165 = vmatpush1.msra.mxu0 %v2132
        %2166 = vmatprep.subr.mxu0 %v2135
        %2167 = vmatpush1.msra.mxu0 %v2134
        %2168 = vmatprep.subr.mxu0 0.0
        %2169 = vmatpush1.msra.mxu0 0.0
        %2170 = vmatprep.subr.mxu0 0.0
        %2171 = vmatpush1.msra.mxu0 0.0
        %2172 = vmatprep.subr.mxu0 0.0
        %2173 = vmatpush1.msra.mxu0 0.0
        %2174 = vmatprep.subr.mxu0 0.0
        %2175 = vmatpush1.msra.mxu0 0.0
        %2176 = vmatprep.subr.mxu0 0.0
        %2177 = vmatpush1.msra.mxu0 0.0
        %2178 = vmatprep.subr.mxu0 0.0
        %2179 = vmatpush1.msra.mxu0 0.0
        %2180 = vmatprep.subr.mxu0 0.0
        %2181 = vmatpush1.msra.mxu0 0.0
        %2182 = vmatprep.subr.mxu0 0.0
        %2183 = vmatpush1.msra.mxu0 0.0
        %2184 = vmatprep.subr.mxu0 0.0
        %2185 = vmatpush1.msra.mxu0 0.0
        %2186 = vmatprep.subr.mxu0 0.0
        %2187 = vmatpush1.msra.mxu0 0.0
        %2188 = vmatprep.subr.mxu0 0.0
        %2189 = vmatpush1.msra.mxu0 0.0
        %2190 = vmatprep.subr.mxu0 0.0
        %2191 = vmatpush1.msra.mxu0 0.0
        %2192 = vmatprep.subr.mxu0 0.0
        %2193 = vmatpush1.msra.mxu0 0.0
        %2194 = vmatprep.subr.mxu0 0.0
        %2195 = vmatpush1.msra.mxu0 0.0
        %2196 = vmatprep.subr.mxu0 0.0
        %2197 = vmatpush1.msra.mxu0 0.0
        %2198 = vmatprep.subr.mxu0 0.0
        %2199 = vmatpush1.msra.mxu0 0.0
        %2200 = vmatprep.mubr.f32.mxu0 0.0
        %2201 = vmatmul.mubr.f32.gmra.mrb[0].mxu0 %v2063
        %v2202 = vpop.f32.mrb[0].mxu0
        %v2203 = vadd.f32 0.0, %v2202
        %v2204 = vpop.f32.mrb[0].mxu0
        %v2205 = vadd.f32 0.0, %v2204
        %2206 = vmatprep.mubr.f32.mxu0 0.0
        %2207 = vmatmul.mubr.f32.gmra.mrb[0].mxu0 %v2064
        %v2208 = vpop.f32.mrb[0].mxu0
        %v2209 = vadd.f32 0.0, %v2208
        %v2210 = vpop.f32.mrb[0].mxu0
        %v2211 = vadd.f32 0.0, %v2210
        %2212 = vmatprep.mubr.f32.mxu0 0.0
        %2213 = vmatmul.mubr.f32.gmra.mrb[0].mxu0 %v2065
        %v2214 = vpop.f32.mrb[0].mxu0
        %v2215 = vadd.f32 0.0, %v2214
        %v2216 = vpop.f32.mrb[0].mxu0
        %v2217 = vadd.f32 0.0, %v2216
        %2218 = vmatprep.mubr.f32.mxu0 0.0
        %2219 = vmatmul.mubr.f32.gmra.mrb[0].mxu0 %v2066
        %v2220 = vpop.f32.mrb[0].mxu0
        %v2221 = vadd.f32 0.0, %v2220
        %v2222 = vpop.f32.mrb[0].mxu0
        %v2223 = vadd.f32 0.0, %v2222
        %2224 = vdwg.mxu0
        %vm2225 = vcmask 261120
        %v2227 = vsel %vm2225, %v2100, 0
        %v2230 = vsel %vm2225, %v2101, 0
        %v2233 = vsel %vm2225, %v2102, 0
        %v2236 = vsel %vm2225, %v2103, 0
        %2238 = vmatprep.subr.mxu0 %v2205
        %2239 = vmatpush1.msra.mxu0 %v2203
        %2240 = vmatprep.subr.mxu0 %v2211
        %2241 = vmatpush1.msra.mxu0 %v2209
        %2242 = vmatprep.subr.mxu0 %v2217
        %2243 = vmatpush1.msra.mxu0 %v2215
        %2244 = vmatprep.subr.mxu0 %v2223
        %2245 = vmatpush1.msra.mxu0 %v2221
        %2246 = vmatprep.subr.mxu0 0.0
        %2247 = vmatpush1.msra.mxu0 0.0
        %2248 = vmatprep.subr.mxu0 0.0
        %2249 = vmatpush1.msra.mxu0 0.0
        %2250 = vmatprep.subr.mxu0 0.0
        %2251 = vmatpush1.msra.mxu0 0.0
        %2252 = vmatprep.subr.mxu0 0.0
        %2253 = vmatpush1.msra.mxu0 0.0
        %2254 = vmatprep.subr.mxu0 0.0
        %2255 = vmatpush1.msra.mxu0 0.0
        %2256 = vmatprep.subr.mxu0 0.0
        %2257 = vmatpush1.msra.mxu0 0.0
        %2258 = vmatprep.subr.mxu0 0.0
        %2259 = vmatpush1.msra.mxu0 0.0
        %2260 = vmatprep.subr.mxu0 0.0
        %2261 = vmatpush1.msra.mxu0 0.0
        %2262 = vmatprep.subr.mxu0 0.0
        %2263 = vmatpush1.msra.mxu0 0.0
        %2264 = vmatprep.subr.mxu0 0.0
        %2265 = vmatpush1.msra.mxu0 0.0
        %2266 = vmatprep.subr.mxu0 0.0
        %2267 = vmatpush1.msra.mxu0 0.0
        %2268 = vmatprep.subr.mxu0 0.0
        %2269 = vmatpush1.msra.mxu0 0.0
        %2270 = vmatprep.subr.mxu0 0.0
        %2271 = vmatpush1.msra.mxu0 0.0
        %2272 = vmatprep.subr.mxu0 0.0
        %2273 = vmatpush1.msra.mxu0 0.0
        %2274 = vmatprep.subr.mxu0 0.0
        %2275 = vmatpush1.msra.mxu0 0.0
        %2276 = vmatprep.subr.mxu0 0.0
        %2277 = vmatpush1.msra.mxu0 0.0
        %2278 = vmatprep.subr.mxu0 0.0
        %2279 = vmatpush1.msra.mxu0 0.0
        %2280 = vmatprep.subr.mxu0 0.0
        %2281 = vmatpush1.msra.mxu0 0.0
        %2282 = vmatprep.subr.mxu0 0.0
        %2283 = vmatpush1.msra.mxu0 0.0
        %2284 = vmatprep.subr.mxu0 0.0
        %2285 = vmatpush1.msra.mxu0 0.0
        %2286 = vmatprep.subr.mxu0 0.0
        %2287 = vmatpush1.msra.mxu0 0.0
        %2288 = vmatprep.subr.mxu0 0.0
        %2289 = vmatpush1.msra.mxu0 0.0
        %2290 = vmatprep.subr.mxu0 0.0
        %2291 = vmatpush1.msra.mxu0 0.0
        %2292 = vmatprep.subr.mxu0 0.0
        %2293 = vmatpush1.msra.mxu0 0.0
        %2294 = vmatprep.subr.mxu0 0.0
        %2295 = vmatpush1.msra.mxu0 0.0
        %2296 = vmatprep.subr.mxu0 0.0
        %2297 = vmatpush1.msra.mxu0 0.0
        %2298 = vmatprep.subr.mxu0 0.0
        %2299 = vmatpush1.msra.mxu0 0.0
        %2300 = vmatprep.subr.mxu0 0.0
        %2301 = vmatpush1.msra.mxu0 0.0
        %2302 = vmatprep.mubr.f32.mxu0 0.0
        %2303 = vmatmul.mubr.f32.gmra.mrb[0].mxu0 %v2227
        %v2304 = vpop.f32.mrb[0].mxu0
        %v2305 = vadd.f32 0.0, %v2304
        %v2306 = vpop.f32.mrb[0].mxu0
        %v2307 = vadd.f32 0.0, %v2306
        %2308 = vmatprep.mubr.f32.mxu0 0.0
        %2309 = vmatmul.mubr.f32.gmra.mrb[0].mxu0 %v2230
        %v2310 = vpop.f32.mrb[0].mxu0
        %v2311 = vadd.f32 0.0, %v2310
        %v2312 = vpop.f32.mrb[0].mxu0
        %v2313 = vadd.f32 0.0, %v2312
        %2314 = vmatprep.mubr.f32.mxu0 0.0
        %2315 = vmatmul.mubr.f32.gmra.mrb[0].mxu0 %v2233
        %v2316 = vpop.f32.mrb[0].mxu0
        %v2317 = vadd.f32 0.0, %v2316
        %v2318 = vpop.f32.mrb[0].mxu0
        %v2319 = vadd.f32 0.0, %v2318
        %2320 = vmatprep.mubr.f32.mxu0 0.0
        %2321 = vmatmul.mubr.f32.gmra.mrb[0].mxu0 %v2236
        %v2322 = vpop.f32.mrb[0].mxu0
        %v2323 = vadd.f32 0.0, %v2322
        %v2324 = vpop.f32.mrb[0].mxu0
        %v2325 = vadd.f32 0.0, %v2324
        %2326 = vdwg.mxu0
        %2327 = vmatprep.subr.mxu0 %v2069
        %2328 = vmatpush1.msra.mxu0 %v2068
        %2329 = vmatprep.subr.mxu0 %v2071
        %2330 = vmatpush1.msra.mxu0 %v2070
        %2331 = vmatprep.subr.mxu0 %v2073
        %2332 = vmatpush1.msra.mxu0 %v2072
        %2333 = vmatprep.subr.mxu0 %v2075
        %2334 = vmatpush1.msra.mxu0 %v2074
        %2335 = vmatprep.subr.mxu0 %v2077
        %2336 = vmatpush1.msra.mxu0 %v2076
        %2337 = vmatprep.subr.mxu0 %v2079
        %2338 = vmatpush1.msra.mxu0 %v2078
        %2339 = vmatprep.subr.mxu0 %v2081
        %2340 = vmatpush1.msra.mxu0 %v2080
        %2341 = vmatprep.subr.mxu0 %v2083
        %2342 = vmatpush1.msra.mxu0 %v2082
        %2343 = vmatprep.subr.mxu0 %v2085
        %2344 = vmatpush1.msra.mxu0 %v2084
        %2345 = vmatprep.subr.mxu0 %v2087
        %2346 = vmatpush1.msra.mxu0 %v2086
        %2347 = vmatprep.subr.mxu0 %v2089
        %2348 = vmatpush1.msra.mxu0 %v2088
        %2349 = vmatprep.subr.mxu0 %v2091
        %2350 = vmatpush1.msra.mxu0 %v2090
        %2351 = vmatprep.subr.mxu0 %v2093
        %2352 = vmatpush1.msra.mxu0 %v2092
        %2353 = vmatprep.subr.mxu0 %v2095
        %2354 = vmatpush1.msra.mxu0 %v2094
        %2355 = vmatprep.subr.mxu0 %v2097
        %2356 = vmatpush1.msra.mxu0 %v2096
        %2357 = vmatprep.subr.mxu0 %v2099
        %2358 = vmatpush1.msra.mxu0 %v2098
        %2359 = vmatprep.subr.mxu0 0.0
        %2360 = vmatpush1.msra.mxu0 0.0
        %2361 = vmatprep.subr.mxu0 0.0
        %2362 = vmatpush1.msra.mxu0 0.0
        %2363 = vmatprep.subr.mxu0 0.0
        %2364 = vmatpush1.msra.mxu0 0.0
        %2365 = vmatprep.subr.mxu0 0.0
        %2366 = vmatpush1.msra.mxu0 0.0
        %2367 = vmatprep.subr.mxu0 0.0
        %2368 = vmatpush1.msra.mxu0 0.0
        %2369 = vmatprep.subr.mxu0 0.0
        %2370 = vmatpush1.msra.mxu0 0.0
        %2371 = vmatprep.subr.mxu0 0.0
        %2372 = vmatpush1.msra.mxu0 0.0
        %2373 = vmatprep.subr.mxu0 0.0
        %2374 = vmatpush1.msra.mxu0 0.0
        %2375 = vmatprep.subr.mxu0 0.0
        %2376 = vmatpush1.msra.mxu0 0.0
        %2377 = vmatprep.subr.mxu0 0.0
        %2378 = vmatpush1.msra.mxu0 0.0
        %2379 = vmatprep.subr.mxu0 0.0
        %2380 = vmatpush1.msra.mxu0 0.0
        %2381 = vmatprep.subr.mxu0 0.0
        %2382 = vmatpush1.msra.mxu0 0.0
        %2383 = vmatprep.subr.mxu0 0.0
        %2384 = vmatpush1.msra.mxu0 0.0
        %2385 = vmatprep.subr.mxu0 0.0
        %2386 = vmatpush1.msra.mxu0 0.0
        %2387 = vmatprep.subr.mxu0 0.0
        %2388 = vmatpush1.msra.mxu0 0.0
        %2389 = vmatprep.subr.mxu0 0.0
        %2390 = vmatpush1.msra.mxu0 0.0
        %2391 = vmatprep.mubr.f32.mxu0 0.0
        %2392 = vmatmul.mubr.f32.gmra.mrb[0].mxu0 %v2063
        %v2393 = vpop.f32.mrb[0].mxu0
        %v2394 = vadd.f32 %v2305, %v2393
        %v2395 = vpop.f32.mrb[0].mxu0
        %v2396 = vadd.f32 %v2307, %v2395
        %2397 = vmatprep.mubr.f32.mxu0 0.0
        %2398 = vmatmul.mubr.f32.gmra.mrb[0].mxu0 %v2064
        %v2399 = vpop.f32.mrb[0].mxu0
        %v2400 = vadd.f32 %v2311, %v2399
        %v2401 = vpop.f32.mrb[0].mxu0
        %v2402 = vadd.f32 %v2313, %v2401
        %2403 = vmatprep.mubr.f32.mxu0 0.0
        %2404 = vmatmul.mubr.f32.gmra.mrb[0].mxu0 %v2065
        %v2405 = vpop.f32.mrb[0].mxu0
        %v2406 = vadd.f32 %v2317, %v2405
        %v2407 = vpop.f32.mrb[0].mxu0
        %v2408 = vadd.f32 %v2319, %v2407
        %2409 = vmatprep.mubr.f32.mxu0 0.0
        %2410 = vmatmul.mubr.f32.gmra.mrb[0].mxu0 %v2066
        %v2411 = vpop.f32.mrb[0].mxu0
        %v2412 = vadd.f32 %v2323, %v2411
        %v2413 = vpop.f32.mrb[0].mxu0
        %v2414 = vadd.f32 %v2325, %v2413
        %2415 = vdwg.mxu0
        %s2416 = scalar_lea.vmem [#allocation7], 32
        %v2417 = vld [vmem:[%s2416] sm:$0xff]
        %v2418 = vld [vmem:[%s2416 + $0x8] sm:$0xff]
        %v2419 = vld [vmem:[%s2416 + $0x10] sm:$0xff]
        %v2420 = vld [vmem:[%s2416 + $0x18] sm:$0xff]
        %s2421 = scalar_lea.vmem %s6, 512
        %v2422 = vld [vmem:[%s2421] sm:$0xff]
        %v2423 = vld [vmem:[%s2421 + $0x8] sm:$0xff]
        %v2424 = vld [vmem:[%s2421 + $0x10] sm:$0xff]
        %v2425 = vld [vmem:[%s2421 + $0x18] sm:$0xff]
        %v2426 = vld [vmem:[%s2421 + $0x20] sm:$0xff]
        %v2427 = vld [vmem:[%s2421 + $0x28] sm:$0xff]
        %v2428 = vld [vmem:[%s2421 + $0x30] sm:$0xff]
        %v2429 = vld [vmem:[%s2421 + $0x38] sm:$0xff]
        %v2430 = vld [vmem:[%s2421 + $0x40] sm:$0xff]
        %v2431 = vld [vmem:[%s2421 + $0x48] sm:$0xff]
        %v2432 = vld [vmem:[%s2421 + $0x50] sm:$0xff]
        %v2433 = vld [vmem:[%s2421 + $0x58] sm:$0xff]
        %v2434 = vld [vmem:[%s2421 + $0x60] sm:$0xff]
        %v2435 = vld [vmem:[%s2421 + $0x68] sm:$0xff]
        %v2436 = vld [vmem:[%s2421 + $0x70] sm:$0xff]
        %v2437 = vld [vmem:[%s2421 + $0x78] sm:$0xff]
        %v2438 = vld [vmem:[%s2421 + $0x80] sm:$0xff]
        %v2439 = vld [vmem:[%s2421 + $0x88] sm:$0xff]
        %v2440 = vld [vmem:[%s2421 + $0x90] sm:$0xff]
        %v2441 = vld [vmem:[%s2421 + $0x98] sm:$0xff]
        %v2442 = vld [vmem:[%s2421 + $0xa0] sm:$0xff]
        %v2443 = vld [vmem:[%s2421 + $0xa8] sm:$0xff]
        %v2444 = vld [vmem:[%s2421 + $0xb0] sm:$0xff]
        %v2445 = vld [vmem:[%s2421 + $0xb8] sm:$0xff]
        %v2446 = vld [vmem:[%s2421 + $0xc0] sm:$0xff]
        %v2447 = vld [vmem:[%s2421 + $0xc8] sm:$0xff]
        %v2448 = vld [vmem:[%s2421 + $0xd0] sm:$0xff]
        %v2449 = vld [vmem:[%s2421 + $0xd8] sm:$0xff]
        %v2450 = vld [vmem:[%s2421 + $0xe0] sm:$0xff]
        %v2451 = vld [vmem:[%s2421 + $0xe8] sm:$0xff]
        %v2452 = vld [vmem:[%s2421 + $0xf0] sm:$0xff]
        %v2453 = vld [vmem:[%s2421 + $0xf8] sm:$0xff]
        %2454 = vmatprep.subr.mxu0 %v2423
        %2455 = vmatpush1.msra.mxu0 %v2422
        %2456 = vmatprep.subr.mxu0 %v2425
        %2457 = vmatpush1.msra.mxu0 %v2424
        %2458 = vmatprep.subr.mxu0 %v2427
        %2459 = vmatpush1.msra.mxu0 %v2426
        %2460 = vmatprep.subr.mxu0 %v2429
        %2461 = vmatpush1.msra.mxu0 %v2428
        %2462 = vmatprep.subr.mxu0 %v2431
        %2463 = vmatpush1.msra.mxu0 %v2430
        %2464 = vmatprep.subr.mxu0 %v2433
        %2465 = vmatpush1.msra.mxu0 %v2432
        %2466 = vmatprep.subr.mxu0 %v2435
        %2467 = vmatpush1.msra.mxu0 %v2434
        %2468 = vmatprep.subr.mxu0 %v2437
        %2469 = vmatpush1.msra.mxu0 %v2436
        %2470 = vmatprep.subr.mxu0 %v2439
        %2471 = vmatpush1.msra.mxu0 %v2438
        %2472 = vmatprep.subr.mxu0 %v2441
        %2473 = vmatpush1.msra.mxu0 %v2440
        %2474 = vmatprep.subr.mxu0 %v2443
        %2475 = vmatpush1.msra.mxu0 %v2442
        %2476 = vmatprep.subr.mxu0 %v2445
        %2477 = vmatpush1.msra.mxu0 %v2444
        %2478 = vmatprep.subr.mxu0 %v2447
        %2479 = vmatpush1.msra.mxu0 %v2446
        %2480 = vmatprep.subr.mxu0 %v2449
        %2481 = vmatpush1.msra.mxu0 %v2448
        %2482 = vmatprep.subr.mxu0 %v2451
        %2483 = vmatpush1.msra.mxu0 %v2450
        %2484 = vmatprep.subr.mxu0 %v2453
        %2485 = vmatpush1.msra.mxu0 %v2452
        %2486 = vmatprep.subr.mxu0 0.0
        %2487 = vmatpush1.msra.mxu0 0.0
        %2488 = vmatprep.subr.mxu0 0.0
        %2489 = vmatpush1.msra.mxu0 0.0
        %2490 = vmatprep.subr.mxu0 0.0
        %2491 = vmatpush1.msra.mxu0 0.0
        %2492 = vmatprep.subr.mxu0 0.0
        %2493 = vmatpush1.msra.mxu0 0.0
        %2494 = vmatprep.subr.mxu0 0.0
        %2495 = vmatpush1.msra.mxu0 0.0
        %2496 = vmatprep.subr.mxu0 0.0
        %2497 = vmatpush1.msra.mxu0 0.0
        %2498 = vmatprep.subr.mxu0 0.0
        %2499 = vmatpush1.msra.mxu0 0.0
        %2500 = vmatprep.subr.mxu0 0.0
        %2501 = vmatpush1.msra.mxu0 0.0
        %2502 = vmatprep.subr.mxu0 0.0
        %2503 = vmatpush1.msra.mxu0 0.0
        %2504 = vmatprep.subr.mxu0 0.0
        %2505 = vmatpush1.msra.mxu0 0.0
        %2506 = vmatprep.subr.mxu0 0.0
        %2507 = vmatpush1.msra.mxu0 0.0
        %2508 = vmatprep.subr.mxu0 0.0
        %2509 = vmatpush1.msra.mxu0 0.0
        %2510 = vmatprep.subr.mxu0 0.0
        %2511 = vmatpush1.msra.mxu0 0.0
        %2512 = vmatprep.subr.mxu0 0.0
        %2513 = vmatpush1.msra.mxu0 0.0
        %2514 = vmatprep.subr.mxu0 0.0
        %2515 = vmatpush1.msra.mxu0 0.0
        %2516 = vmatprep.subr.mxu0 0.0
        %2517 = vmatpush1.msra.mxu0 0.0
        %2518 = vmatprep.mubr.f32.mxu0 0.0
        %2519 = vmatmul.mubr.f32.gmra.mrb[0].mxu0 %v2063
        %v2520 = vpop.f32.mrb[0].mxu0
        %v2521 = vadd.f32 0.0, %v2520
        %v2522 = vpop.f32.mrb[0].mxu0
        %v2523 = vadd.f32 0.0, %v2522
        %2524 = vmatprep.mubr.f32.mxu0 0.0
        %2525 = vmatmul.mubr.f32.gmra.mrb[0].mxu0 %v2064
        %v2526 = vpop.f32.mrb[0].mxu0
        %v2527 = vadd.f32 0.0, %v2526
        %v2528 = vpop.f32.mrb[0].mxu0
        %v2529 = vadd.f32 0.0, %v2528
        %2530 = vmatprep.mubr.f32.mxu0 0.0
        %2531 = vmatmul.mubr.f32.gmra.mrb[0].mxu0 %v2065
        %v2532 = vpop.f32.mrb[0].mxu0
        %v2533 = vadd.f32 0.0, %v2532
        %v2534 = vpop.f32.mrb[0].mxu0
        %v2535 = vadd.f32 0.0, %v2534
        %2536 = vmatprep.mubr.f32.mxu0 0.0
        %2537 = vmatmul.mubr.f32.gmra.mrb[0].mxu0 %v2066
        %v2538 = vpop.f32.mrb[0].mxu0
        %v2539 = vadd.f32 0.0, %v2538
        %v2540 = vpop.f32.mrb[0].mxu0
        %v2541 = vadd.f32 0.0, %v2540
        %2542 = vdwg.mxu0
        %v2544 = vsel %vm2225, %v2417, 0
        %v2547 = vsel %vm2225, %v2418, 0
        %v2550 = vsel %vm2225, %v2419, 0
        %v2553 = vsel %vm2225, %v2420, 0
        %2555 = vmatprep.subr.mxu0 %v2523
        %2556 = vmatpush1.msra.mxu0 %v2521
        %2557 = vmatprep.subr.mxu0 %v2529
        %2558 = vmatpush1.msra.mxu0 %v2527
        %2559 = vmatprep.subr.mxu0 %v2535
        %2560 = vmatpush1.msra.mxu0 %v2533
        %2561 = vmatprep.subr.mxu0 %v2541
        %2562 = vmatpush1.msra.mxu0 %v2539
        %2563 = vmatprep.subr.mxu0 0.0
        %2564 = vmatpush1.msra.mxu0 0.0
        %2565 = vmatprep.subr.mxu0 0.0
        %2566 = vmatpush1.msra.mxu0 0.0
        %2567 = vmatprep.subr.mxu0 0.0
        %2568 = vmatpush1.msra.mxu0 0.0
        %2569 = vmatprep.subr.mxu0 0.0
        %2570 = vmatpush1.msra.mxu0 0.0
        %2571 = vmatprep.subr.mxu0 0.0
        %2572 = vmatpush1.msra.mxu0 0.0
        %2573 = vmatprep.subr.mxu0 0.0
        %2574 = vmatpush1.msra.mxu0 0.0
        %2575 = vmatprep.subr.mxu0 0.0
        %2576 = vmatpush1.msra.mxu0 0.0
        %2577 = vmatprep.subr.mxu0 0.0
        %2578 = vmatpush1.msra.mxu0 0.0
        %2579 = vmatprep.subr.mxu0 0.0
        %2580 = vmatpush1.msra.mxu0 0.0
        %2581 = vmatprep.subr.mxu0 0.0
        %2582 = vmatpush1.msra.mxu0 0.0
        %2583 = vmatprep.subr.mxu0 0.0
        %2584 = vmatpush1.msra.mxu0 0.0
        %2585 = vmatprep.subr.mxu0 0.0
        %2586 = vmatpush1.msra.mxu0 0.0
        %2587 = vmatprep.subr.mxu0 0.0
        %2588 = vmatpush1.msra.mxu0 0.0
        %2589 = vmatprep.subr.mxu0 0.0
        %2590 = vmatpush1.msra.mxu0 0.0
        %2591 = vmatprep.subr.mxu0 0.0
        %2592 = vmatpush1.msra.mxu0 0.0
        %2593 = vmatprep.subr.mxu0 0.0
        %2594 = vmatpush1.msra.mxu0 0.0
        %2595 = vmatprep.subr.mxu0 0.0
        %2596 = vmatpush1.msra.mxu0 0.0
        %2597 = vmatprep.subr.mxu0 0.0
        %2598 = vmatpush1.msra.mxu0 0.0
        %2599 = vmatprep.subr.mxu0 0.0
        %2600 = vmatpush1.msra.mxu0 0.0
        %2601 = vmatprep.subr.mxu0 0.0
        %2602 = vmatpush1.msra.mxu0 0.0
        %2603 = vmatprep.subr.mxu0 0.0
        %2604 = vmatpush1.msra.mxu0 0.0
        %2605 = vmatprep.subr.mxu0 0.0
        %2606 = vmatpush1.msra.mxu0 0.0
        %2607 = vmatprep.subr.mxu0 0.0
        %2608 = vmatpush1.msra.mxu0 0.0
        %2609 = vmatprep.subr.mxu0 0.0
        %2610 = vmatpush1.msra.mxu0 0.0
        %2611 = vmatprep.subr.mxu0 0.0
        %2612 = vmatpush1.msra.mxu0 0.0
        %2613 = vmatprep.subr.mxu0 0.0
        %2614 = vmatpush1.msra.mxu0 0.0
        %2615 = vmatprep.subr.mxu0 0.0
        %2616 = vmatpush1.msra.mxu0 0.0
        %2617 = vmatprep.subr.mxu0 0.0
        %2618 = vmatpush1.msra.mxu0 0.0
        %2619 = vmatprep.mubr.f32.mxu0 0.0
        %2620 = vmatmul.mubr.f32.gmra.mrb[0].mxu0 %v2544
        %v2621 = vpop.f32.mrb[0].mxu0
        %v2622 = vadd.f32 0.0, %v2621
        %v2623 = vpop.f32.mrb[0].mxu0
        %v2624 = vadd.f32 0.0, %v2623
        %2625 = vmatprep.mubr.f32.mxu0 0.0
        %2626 = vmatmul.mubr.f32.gmra.mrb[0].mxu0 %v2547
        %v2627 = vpop.f32.mrb[0].mxu0
        %v2628 = vadd.f32 0.0, %v2627
        %v2629 = vpop.f32.mrb[0].mxu0
        %v2630 = vadd.f32 0.0, %v2629
        %2631 = vmatprep.mubr.f32.mxu0 0.0
        %2632 = vmatmul.mubr.f32.gmra.mrb[0].mxu0 %v2550
        %v2633 = vpop.f32.mrb[0].mxu0
        %v2634 = vadd.f32 0.0, %v2633
        %v2635 = vpop.f32.mrb[0].mxu0
        %v2636 = vadd.f32 0.0, %v2635
        %2637 = vmatprep.mubr.f32.mxu0 0.0
        %2638 = vmatmul.mubr.f32.gmra.mrb[0].mxu0 %v2553
        %v2639 = vpop.f32.mrb[0].mxu0
        %v2640 = vadd.f32 0.0, %v2639
        %v2641 = vpop.f32.mrb[0].mxu0
        %v2642 = vadd.f32 0.0, %v2641
        %2643 = vdwg.mxu0
        %v2644 = vadd.f32 %v2394, %v2622
        %v2645 = vadd.f32 %v2396, %v2624
        %v2646 = vadd.f32 %v2400, %v2628
        %v2647 = vadd.f32 %v2402, %v2630
        %v2648 = vadd.f32 %v2406, %v2634
        %v2649 = vadd.f32 %v2408, %v2636
        %v2650 = vadd.f32 %v2412, %v2640
        %v2651 = vadd.f32 %v2414, %v2642
        %v2652 = vld [vmem:[#allocation8] sm:$0xff]
        %v2653 = vld [vmem:[#allocation8 + $0x8] sm:$0xff]
        %v2654 = vld [vmem:[#allocation8 + $0x10] sm:$0xff]
        %v2655 = vld [vmem:[#allocation8 + $0x18] sm:$0xff]
        %v2656 = vld [vmem:[#allocation8 + $0x20] sm:$0xff]
        %v2657 = vld [vmem:[#allocation8 + $0x28] sm:$0xff]
        %v2658 = vld [vmem:[#allocation8 + $0x30] sm:$0xff]
        %v2659 = vld [vmem:[#allocation8 + $0x38] sm:$0xff]
        %v2660 = vld [vmem:[#allocation8 + $0x40] sm:$0xff]
        %v2661 = vld [vmem:[#allocation8 + $0x48] sm:$0xff]
        %v2662 = vld [vmem:[#allocation8 + $0x50] sm:$0xff]
        %v2663 = vld [vmem:[#allocation8 + $0x58] sm:$0xff]
        %v2664 = vld [vmem:[#allocation8 + $0x60] sm:$0xff]
        %v2665 = vld [vmem:[#allocation8 + $0x68] sm:$0xff]
        %v2666 = vld [vmem:[#allocation8 + $0x70] sm:$0xff]
        %v2667 = vld [vmem:[#allocation8 + $0x78] sm:$0xff]
        %v2668 = vld [vmem:[#allocation8 + $0x80] sm:$0xff]
        %v2669 = vld [vmem:[#allocation8 + $0x88] sm:$0xff]
        %v2670 = vld [vmem:[#allocation8 + $0x90] sm:$0xff]
        %v2671 = vld [vmem:[#allocation8 + $0x98] sm:$0xff]
        %v2672 = vld [vmem:[#allocation8 + $0xa0] sm:$0xff]
        %v2673 = vld [vmem:[#allocation8 + $0xa8] sm:$0xff]
        %v2674 = vld [vmem:[#allocation8 + $0xb0] sm:$0xff]
        %v2675 = vld [vmem:[#allocation8 + $0xb8] sm:$0xff]
        %v2676 = vld [vmem:[#allocation8 + $0xc0] sm:$0xff]
        %v2677 = vld [vmem:[#allocation8 + $0xc8] sm:$0xff]
        %v2678 = vld [vmem:[#allocation8 + $0xd0] sm:$0xff]
        %v2679 = vld [vmem:[#allocation8 + $0xd8] sm:$0xff]
        %v2680 = vld [vmem:[#allocation8 + $0xe0] sm:$0xff]
        %v2681 = vld [vmem:[#allocation8 + $0xe8] sm:$0xff]
        %v2682 = vld [vmem:[#allocation8 + $0xf0] sm:$0xff]
        %v2683 = vld [vmem:[#allocation8 + $0xf8] sm:$0xff]
        %2684 = vmatprep.subr.mxu0 0.0
        %2685 = vmatpush1.msra.mxu0 %v2652
        %2686 = vmatprep.subr.mxu0 0.0
        %2687 = vmatpush1.msra.mxu0 %v2653
        %2688 = vmatprep.subr.mxu0 0.0
        %2689 = vmatpush1.msra.mxu0 %v2654
        %2690 = vmatprep.subr.mxu0 0.0
        %2691 = vmatpush1.msra.mxu0 %v2655
        %2692 = vmatprep.subr.mxu0 0.0
        %2693 = vmatpush1.msra.mxu0 %v2656
        %2694 = vmatprep.subr.mxu0 0.0
        %2695 = vmatpush1.msra.mxu0 %v2657
        %2696 = vmatprep.subr.mxu0 0.0
        %2697 = vmatpush1.msra.mxu0 %v2658
        %2698 = vmatprep.subr.mxu0 0.0
        %2699 = vmatpush1.msra.mxu0 %v2659
        %2700 = vmatprep.subr.mxu0 0.0
        %2701 = vmatpush1.msra.mxu0 %v2660
        %2702 = vmatprep.subr.mxu0 0.0
        %2703 = vmatpush1.msra.mxu0 %v2661
        %2704 = vmatprep.subr.mxu0 0.0
        %2705 = vmatpush1.msra.mxu0 %v2662
        %2706 = vmatprep.subr.mxu0 0.0
        %2707 = vmatpush1.msra.mxu0 %v2663
        %2708 = vmatprep.subr.mxu0 0.0
        %2709 = vmatpush1.msra.mxu0 %v2664
        %2710 = vmatprep.subr.mxu0 0.0
        %2711 = vmatpush1.msra.mxu0 %v2665
        %2712 = vmatprep.subr.mxu0 0.0
        %2713 = vmatpush1.msra.mxu0 %v2666
        %2714 = vmatprep.subr.mxu0 0.0
        %2715 = vmatpush1.msra.mxu0 %v2667
        %2716 = vmatprep.subr.mxu0 0.0
        %2717 = vmatpush1.msra.mxu0 %v2668
        %2718 = vmatprep.subr.mxu0 0.0
        %2719 = vmatpush1.msra.mxu0 %v2669
        %2720 = vmatprep.subr.mxu0 0.0
        %2721 = vmatpush1.msra.mxu0 %v2670
        %2722 = vmatprep.subr.mxu0 0.0
        %2723 = vmatpush1.msra.mxu0 %v2671
        %2724 = vmatprep.subr.mxu0 0.0
        %2725 = vmatpush1.msra.mxu0 %v2672
        %2726 = vmatprep.subr.mxu0 0.0
        %2727 = vmatpush1.msra.mxu0 %v2673
        %2728 = vmatprep.subr.mxu0 0.0
        %2729 = vmatpush1.msra.mxu0 %v2674
        %2730 = vmatprep.subr.mxu0 0.0
        %2731 = vmatpush1.msra.mxu0 %v2675
        %2732 = vmatprep.subr.mxu0 0.0
        %2733 = vmatpush1.msra.mxu0 %v2676
        %2734 = vmatprep.subr.mxu0 0.0
        %2735 = vmatpush1.msra.mxu0 %v2677
        %2736 = vmatprep.subr.mxu0 0.0
        %2737 = vmatpush1.msra.mxu0 %v2678
        %2738 = vmatprep.subr.mxu0 0.0
        %2739 = vmatpush1.msra.mxu0 %v2679
        %2740 = vmatprep.subr.mxu0 0.0
        %2741 = vmatpush1.msra.mxu0 %v2680
        %2742 = vmatprep.subr.mxu0 0.0
        %2743 = vmatpush1.msra.mxu0 %v2681
        %2744 = vmatprep.subr.mxu0 0.0
        %2745 = vmatpush1.msra.mxu0 %v2682
        %2746 = vmatprep.subr.mxu0 0.0
        %2747 = vmatpush1.msra.mxu0 %v2683
        %2748 = vmatprep.mubr.f32.mxu0 %v2645
        %2749 = vmatmul.mubr.f32.gmra.mrb[0].mxu0 %v2644
        %v2750 = vpop.f32.mrb[0].mxu0
        %v2751 = vadd.f32 0.0, %v2750
        %v2752 = vpop.f32.mrb[0].mxu0
        %2753 = vmatprep.mubr.f32.mxu0 %v2647
        %2754 = vmatmul.mubr.f32.gmra.mrb[0].mxu0 %v2646
        %v2755 = vpop.f32.mrb[0].mxu0
        %v2756 = vadd.f32 0.0, %v2755
        %v2757 = vpop.f32.mrb[0].mxu0
        %2758 = vmatprep.mubr.f32.mxu0 %v2649
        %2759 = vmatmul.mubr.f32.gmra.mrb[0].mxu0 %v2648
        %v2760 = vpop.f32.mrb[0].mxu0
        %v2761 = vadd.f32 0.0, %v2760
        %v2762 = vpop.f32.mrb[0].mxu0
        %2763 = vmatprep.mubr.f32.mxu0 %v2651
        %2764 = vmatmul.mubr.f32.gmra.mrb[0].mxu0 %v2650
        %v2765 = vpop.f32.mrb[0].mxu0
        %v2766 = vadd.f32 0.0, %v2765
        %v2767 = vpop.f32.mrb[0].mxu0
        %2768 = vdwg.mxu0
        %s2769 = scalar_lea.vmem [#allocation8], 256
        %v2770 = vld [vmem:[%s2769] sm:$0xff]
        %v2771 = vld [vmem:[%s2769 + $0x8] sm:$0xff]
        %v2772 = vld [vmem:[%s2769 + $0x10] sm:$0xff]
        %v2773 = vld [vmem:[%s2769 + $0x18] sm:$0xff]
        %v2774 = vld [vmem:[%s2769 + $0x20] sm:$0xff]
        %v2775 = vld [vmem:[%s2769 + $0x28] sm:$0xff]
        %v2776 = vld [vmem:[%s2769 + $0x30] sm:$0xff]
        %v2777 = vld [vmem:[%s2769 + $0x38] sm:$0xff]
        %v2778 = vld [vmem:[%s2769 + $0x40] sm:$0xff]
        %v2779 = vld [vmem:[%s2769 + $0x48] sm:$0xff]
        %v2780 = vld [vmem:[%s2769 + $0x50] sm:$0xff]
        %v2781 = vld [vmem:[%s2769 + $0x58] sm:$0xff]
        %v2782 = vld [vmem:[%s2769 + $0x60] sm:$0xff]
        %v2783 = vld [vmem:[%s2769 + $0x68] sm:$0xff]
        %v2784 = vld [vmem:[%s2769 + $0x70] sm:$0xff]
        %v2785 = vld [vmem:[%s2769 + $0x78] sm:$0xff]
        %v2786 = vld [vmem:[%s2769 + $0x80] sm:$0xff]
        %v2787 = vld [vmem:[%s2769 + $0x88] sm:$0xff]
        %v2788 = vld [vmem:[%s2769 + $0x90] sm:$0xff]
        %v2789 = vld [vmem:[%s2769 + $0x98] sm:$0xff]
        %v2790 = vld [vmem:[%s2769 + $0xa0] sm:$0xff]
        %v2791 = vld [vmem:[%s2769 + $0xa8] sm:$0xff]
        %v2792 = vld [vmem:[%s2769 + $0xb0] sm:$0xff]
        %v2793 = vld [vmem:[%s2769 + $0xb8] sm:$0xff]
        %v2794 = vld [vmem:[%s2769 + $0xc0] sm:$0xff]
        %v2795 = vld [vmem:[%s2769 + $0xc8] sm:$0xff]
        %v2796 = vld [vmem:[%s2769 + $0xd0] sm:$0xff]
        %v2797 = vld [vmem:[%s2769 + $0xd8] sm:$0xff]
        %v2798 = vld [vmem:[%s2769 + $0xe0] sm:$0xff]
        %v2799 = vld [vmem:[%s2769 + $0xe8] sm:$0xff]
        %v2800 = vld [vmem:[%s2769 + $0xf0] sm:$0xff]
        %v2801 = vld [vmem:[%s2769 + $0xf8] sm:$0xff]
        %2802 = vmatprep.subr.mxu0 0.0
        %2803 = vmatpush1.msra.mxu0 %v2770
        %2804 = vmatprep.subr.mxu0 0.0
        %2805 = vmatpush1.msra.mxu0 %v2771
        %2806 = vmatprep.subr.mxu0 0.0
        %2807 = vmatpush1.msra.mxu0 %v2772
        %2808 = vmatprep.subr.mxu0 0.0
        %2809 = vmatpush1.msra.mxu0 %v2773
        %2810 = vmatprep.subr.mxu0 0.0
        %2811 = vmatpush1.msra.mxu0 %v2774
        %2812 = vmatprep.subr.mxu0 0.0
        %2813 = vmatpush1.msra.mxu0 %v2775
        %2814 = vmatprep.subr.mxu0 0.0
        %2815 = vmatpush1.msra.mxu0 %v2776
        %2816 = vmatprep.subr.mxu0 0.0
        %2817 = vmatpush1.msra.mxu0 %v2777
        %2818 = vmatprep.subr.mxu0 0.0
        %2819 = vmatpush1.msra.mxu0 %v2778
        %2820 = vmatprep.subr.mxu0 0.0
        %2821 = vmatpush1.msra.mxu0 %v2779
        %2822 = vmatprep.subr.mxu0 0.0
        %2823 = vmatpush1.msra.mxu0 %v2780
        %2824 = vmatprep.subr.mxu0 0.0
        %2825 = vmatpush1.msra.mxu0 %v2781
        %2826 = vmatprep.subr.mxu0 0.0
        %2827 = vmatpush1.msra.mxu0 %v2782
        %2828 = vmatprep.subr.mxu0 0.0
        %2829 = vmatpush1.msra.mxu0 %v2783
        %2830 = vmatprep.subr.mxu0 0.0
        %2831 = vmatpush1.msra.mxu0 %v2784
        %2832 = vmatprep.subr.mxu0 0.0
        %2833 = vmatpush1.msra.mxu0 %v2785
        %2834 = vmatprep.subr.mxu0 0.0
        %2835 = vmatpush1.msra.mxu0 %v2786
        %2836 = vmatprep.subr.mxu0 0.0
        %2837 = vmatpush1.msra.mxu0 %v2787
        %2838 = vmatprep.subr.mxu0 0.0
        %2839 = vmatpush1.msra.mxu0 %v2788
        %2840 = vmatprep.subr.mxu0 0.0
        %2841 = vmatpush1.msra.mxu0 %v2789
        %2842 = vmatprep.subr.mxu0 0.0
        %2843 = vmatpush1.msra.mxu0 %v2790
        %2844 = vmatprep.subr.mxu0 0.0
        %2845 = vmatpush1.msra.mxu0 %v2791
        %2846 = vmatprep.subr.mxu0 0.0
        %2847 = vmatpush1.msra.mxu0 %v2792
        %2848 = vmatprep.subr.mxu0 0.0
        %2849 = vmatpush1.msra.mxu0 %v2793
        %2850 = vmatprep.subr.mxu0 0.0
        %2851 = vmatpush1.msra.mxu0 %v2794
        %2852 = vmatprep.subr.mxu0 0.0
        %2853 = vmatpush1.msra.mxu0 %v2795
        %2854 = vmatprep.subr.mxu0 0.0
        %2855 = vmatpush1.msra.mxu0 %v2796
        %2856 = vmatprep.subr.mxu0 0.0
        %2857 = vmatpush1.msra.mxu0 %v2797
        %2858 = vmatprep.subr.mxu0 0.0
        %2859 = vmatpush1.msra.mxu0 %v2798
        %2860 = vmatprep.subr.mxu0 0.0
        %2861 = vmatpush1.msra.mxu0 %v2799
        %2862 = vmatprep.subr.mxu0 0.0
        %2863 = vmatpush1.msra.mxu0 %v2800
        %2864 = vmatprep.subr.mxu0 0.0
        %2865 = vmatpush1.msra.mxu0 %v2801
        %2866 = vmatprep.mubr.f32.mxu0 %v2645
        %2867 = vmatmul.mubr.f32.gmra.mrb[0].mxu0 %v2644
        %v2868 = vpop.f32.mrb[0].mxu0
        %v2869 = vadd.f32 0.0, %v2868
        %v2870 = vpop.f32.mrb[0].mxu0
        %2871 = vmatprep.mubr.f32.mxu0 %v2647
        %2872 = vmatmul.mubr.f32.gmra.mrb[0].mxu0 %v2646
        %v2873 = vpop.f32.mrb[0].mxu0
        %v2874 = vadd.f32 0.0, %v2873
        %v2875 = vpop.f32.mrb[0].mxu0
        %2876 = vmatprep.mubr.f32.mxu0 %v2649
        %2877 = vmatmul.mubr.f32.gmra.mrb[0].mxu0 %v2648
        %v2878 = vpop.f32.mrb[0].mxu0
        %v2879 = vadd.f32 0.0, %v2878
        %v2880 = vpop.f32.mrb[0].mxu0
        %2881 = vmatprep.mubr.f32.mxu0 %v2651
        %2882 = vmatmul.mubr.f32.gmra.mrb[0].mxu0 %v2650
        %v2883 = vpop.f32.mrb[0].mxu0
        %v2884 = vadd.f32 0.0, %v2883
        %v2885 = vpop.f32.mrb[0].mxu0
        %2886 = vdwg.mxu0
        %v2887 = vmax.f32 %v2751, %v2869
        %v2888 = vmax.f32 %v2756, %v2874
        %v2889 = vmax.f32 %v2761, %v2879
        %v2890 = vmax.f32 %v2766, %v2884
        %v2891 = vld [vmem:[%s9] sm:$0xff]
        %v2892 = vld [vmem:[%s9 + $0x8] sm:$0xff]
        %v2894 = vsel %vm2225, %v2891, 0
        %v2897 = vsel %vm2225, %v2892, 0
        %2899 = vmatprep.subr.mxu0 0.0
        %2900 = vmatpush1.msra.mxu0 %v2887
        %2901 = vmatprep.subr.mxu0 0.0
        %2902 = vmatpush1.msra.mxu0 %v2888
        %2903 = vmatprep.subr.mxu0 0.0
        %2904 = vmatpush1.msra.mxu0 %v2889
        %2905 = vmatprep.subr.mxu0 0.0
        %2906 = vmatpush1.msra.mxu0 %v2890
        %2907 = vmatprep.subr.mxu0 0.0
        %2908 = vmatpush1.msra.mxu0 0.0
        %2909 = vmatprep.subr.mxu0 0.0
        %2910 = vmatpush1.msra.mxu0 0.0
        %2911 = vmatprep.subr.mxu0 0.0
        %2912 = vmatpush1.msra.mxu0 0.0
        %2913 = vmatprep.subr.mxu0 0.0
        %2914 = vmatpush1.msra.mxu0 0.0
        %2915 = vmatprep.subr.mxu0 0.0
        %2916 = vmatpush1.msra.mxu0 0.0
        %2917 = vmatprep.subr.mxu0 0.0
        %2918 = vmatpush1.msra.mxu0 0.0
        %2919 = vmatprep.subr.mxu0 0.0
        %2920 = vmatpush1.msra.mxu0 0.0
        %2921 = vmatprep.subr.mxu0 0.0
        %2922 = vmatpush1.msra.mxu0 0.0
        %2923 = vmatprep.subr.mxu0 0.0
        %2924 = vmatpush1.msra.mxu0 0.0
        %2925 = vmatprep.subr.mxu0 0.0
        %2926 = vmatpush1.msra.mxu0 0.0
        %2927 = vmatprep.subr.mxu0 0.0
        %2928 = vmatpush1.msra.mxu0 0.0
        %2929 = vmatprep.subr.mxu0 0.0
        %2930 = vmatpush1.msra.mxu0 0.0
        %2931 = vmatprep.subr.mxu0 0.0
        %2932 = vmatpush1.msra.mxu0 0.0
        %2933 = vmatprep.subr.mxu0 0.0
        %2934 = vmatpush1.msra.mxu0 0.0
        %2935 = vmatprep.subr.mxu0 0.0
        %2936 = vmatpush1.msra.mxu0 0.0
        %2937 = vmatprep.subr.mxu0 0.0
        %2938 = vmatpush1.msra.mxu0 0.0
        %2939 = vmatprep.subr.mxu0 0.0
        %2940 = vmatpush1.msra.mxu0 0.0
        %2941 = vmatprep.subr.mxu0 0.0
        %2942 = vmatpush1.msra.mxu0 0.0
        %2943 = vmatprep.subr.mxu0 0.0
        %2944 = vmatpush1.msra.mxu0 0.0
        %2945 = vmatprep.subr.mxu0 0.0
        %2946 = vmatpush1.msra.mxu0 0.0
        %2947 = vmatprep.subr.mxu0 0.0
        %2948 = vmatpush1.msra.mxu0 0.0
        %2949 = vmatprep.subr.mxu0 0.0
        %2950 = vmatpush1.msra.mxu0 0.0
        %2951 = vmatprep.subr.mxu0 0.0
        %2952 = vmatpush1.msra.mxu0 0.0
        %2953 = vmatprep.subr.mxu0 0.0
        %2954 = vmatpush1.msra.mxu0 0.0
        %2955 = vmatprep.subr.mxu0 0.0
        %2956 = vmatpush1.msra.mxu0 0.0
        %2957 = vmatprep.subr.mxu0 0.0
        %2958 = vmatpush1.msra.mxu0 0.0
        %2959 = vmatprep.subr.mxu0 0.0
        %2960 = vmatpush1.msra.mxu0 0.0
        %2961 = vmatprep.subr.mxu0 0.0
        %2962 = vmatpush1.msra.mxu0 0.0
        %2963 = vmatprep.mubr.f32.mxu0 0.0
        %2964 = vmatmul.mubr.f32.gmra.mrb[0].mxu0 %v2894
        %v2965 = vpop.f32.mrb[0].mxu0
        %v2966 = vadd.f32 0.0, %v2965
        %v2967 = vpop.f32.mrb[0].mxu0
        %2968 = vmatprep.mubr.f32.mxu0 0.0
        %2969 = vmatmul.mubr.f32.gmra.mrb[0].mxu0 %v2897
        %v2970 = vpop.f32.mrb[0].mxu0
        %v2971 = vadd.f32 0.0, %v2970
        %v2972 = vpop.f32.mrb[0].mxu0
        %2973 = vdwg.mxu0
        %s2974 = scalar_lea.vmem %s9, 16
        %v2975 = vld [vmem:[%s2974] sm:$0xff]
        %v2976 = vld [vmem:[%s2974 + $0x8] sm:$0xff]
        %v2978 = vsel %vm2225, %v2975, 0
        %v2981 = vsel %vm2225, %v2976, 0
        %2983 = vmatprep.subr.mxu0 0.0
        %2984 = vmatpush1.msra.mxu0 %v2887
        %2985 = vmatprep.subr.mxu0 0.0
        %2986 = vmatpush1.msra.mxu0 %v2888
        %2987 = vmatprep.subr.mxu0 0.0
        %2988 = vmatpush1.msra.mxu0 %v2889
        %2989 = vmatprep.subr.mxu0 0.0
        %2990 = vmatpush1.msra.mxu0 %v2890
        %2991 = vmatprep.subr.mxu0 0.0
        %2992 = vmatpush1.msra.mxu0 0.0
        %2993 = vmatprep.subr.mxu0 0.0
        %2994 = vmatpush1.msra.mxu0 0.0
        %2995 = vmatprep.subr.mxu0 0.0
        %2996 = vmatpush1.msra.mxu0 0.0
        %2997 = vmatprep.subr.mxu0 0.0
        %2998 = vmatpush1.msra.mxu0 0.0
        %2999 = vmatprep.subr.mxu0 0.0
        %3000 = vmatpush1.msra.mxu0 0.0
        %3001 = vmatprep.subr.mxu0 0.0
        %3002 = vmatpush1.msra.mxu0 0.0
        %3003 = vmatprep.subr.mxu0 0.0
        %3004 = vmatpush1.msra.mxu0 0.0
        %3005 = vmatprep.subr.mxu0 0.0
        %3006 = vmatpush1.msra.mxu0 0.0
        %3007 = vmatprep.subr.mxu0 0.0
        %3008 = vmatpush1.msra.mxu0 0.0
        %3009 = vmatprep.subr.mxu0 0.0
        %3010 = vmatpush1.msra.mxu0 0.0
        %3011 = vmatprep.subr.mxu0 0.0
        %3012 = vmatpush1.msra.mxu0 0.0
        %3013 = vmatprep.subr.mxu0 0.0
        %3014 = vmatpush1.msra.mxu0 0.0
        %3015 = vmatprep.subr.mxu0 0.0
        %3016 = vmatpush1.msra.mxu0 0.0
        %3017 = vmatprep.subr.mxu0 0.0
        %3018 = vmatpush1.msra.mxu0 0.0
        %3019 = vmatprep.subr.mxu0 0.0
        %3020 = vmatpush1.msra.mxu0 0.0
        %3021 = vmatprep.subr.mxu0 0.0
        %3022 = vmatpush1.msra.mxu0 0.0
        %3023 = vmatprep.subr.mxu0 0.0
        %3024 = vmatpush1.msra.mxu0 0.0
        %3025 = vmatprep.subr.mxu0 0.0
        %3026 = vmatpush1.msra.mxu0 0.0
        %3027 = vmatprep.subr.mxu0 0.0
        %3028 = vmatpush1.msra.mxu0 0.0
        %3029 = vmatprep.subr.mxu0 0.0
        %3030 = vmatpush1.msra.mxu0 0.0
        %3031 = vmatprep.subr.mxu0 0.0
        %3032 = vmatpush1.msra.mxu0 0.0
        %3033 = vmatprep.subr.mxu0 0.0
        %3034 = vmatpush1.msra.mxu0 0.0
        %3035 = vmatprep.subr.mxu0 0.0
        %3036 = vmatpush1.msra.mxu0 0.0
        %3037 = vmatprep.subr.mxu0 0.0
        %3038 = vmatpush1.msra.mxu0 0.0
        %3039 = vmatprep.subr.mxu0 0.0
        %3040 = vmatpush1.msra.mxu0 0.0
        %3041 = vmatprep.subr.mxu0 0.0
        %3042 = vmatpush1.msra.mxu0 0.0
        %3043 = vmatprep.subr.mxu0 0.0
        %3044 = vmatpush1.msra.mxu0 0.0
        %3045 = vmatprep.subr.mxu0 0.0
        %3046 = vmatpush1.msra.mxu0 0.0
        %3047 = vmatprep.mubr.f32.mxu0 0.0
        %3048 = vmatmul.mubr.f32.gmra.mrb[0].mxu0 %v2978
        %v3049 = vpop.f32.mrb[0].mxu0
        %v3050 = vadd.f32 0.0, %v3049
        %v3051 = vpop.f32.mrb[0].mxu0
        %3052 = vmatprep.mubr.f32.mxu0 0.0
        %3053 = vmatmul.mubr.f32.gmra.mrb[0].mxu0 %v2981
        %v3054 = vpop.f32.mrb[0].mxu0
        %v3055 = vadd.f32 0.0, %v3054
        %v3056 = vpop.f32.mrb[0].mxu0
        %3057 = vdwg.mxu0
        %v3058 = vmax.f32 %v2966, %v3050
        %v3059 = vmax.f32 %v2971, %v3055
        %v3060 = vld [vmem:[%s10] sm:$0x1]
        %v3062 = vlaneseq
        %v3063 = vshrl.u32 %v3062, 7
        %v3064 = vsub.s32 0, %v3063
        %v3065 = vrot.slane %v3060, %v3064
        %v3067 = vadd.f32 %v3058, %v3065
        %v3068 = vadd.f32 %v3059, %v3065
        %v3069 = vmax.f32 %v3067, 0.0
        %v3070 = vmax.f32 %v3068, 0.0
        %s3071 = scalar_lea.vmem [#allocation10], 256
        %v3072 = vld [vmem:[%s3071] sm:$0xff]
        %v3073 = vld [vmem:[%s3071 + $0x8] sm:$0xff]
        %v3074 = vld [vmem:[%s3071 + $0x10] sm:$0xff]
        %v3075 = vld [vmem:[%s3071 + $0x18] sm:$0xff]
        %v3076 = vld [vmem:[%s3071 + $0x20] sm:$0xff]
        %v3077 = vld [vmem:[%s3071 + $0x28] sm:$0xff]
        %v3078 = vld [vmem:[%s3071 + $0x30] sm:$0xff]
        %v3079 = vld [vmem:[%s3071 + $0x38] sm:$0xff]
        %v3080 = vld [vmem:[%s3071 + $0x40] sm:$0xff]
        %v3081 = vld [vmem:[%s3071 + $0x48] sm:$0xff]
        %v3082 = vld [vmem:[%s3071 + $0x50] sm:$0xff]
        %v3083 = vld [vmem:[%s3071 + $0x58] sm:$0xff]
        %v3084 = vld [vmem:[%s3071 + $0x60] sm:$0xff]
        %v3085 = vld [vmem:[%s3071 + $0x68] sm:$0xff]
        %v3086 = vld [vmem:[%s3071 + $0x70] sm:$0xff]
        %v3087 = vld [vmem:[%s3071 + $0x78] sm:$0xff]
        %v3088 = vld [vmem:[%s3071 + $0x80] sm:$0xff]
        %v3089 = vld [vmem:[%s3071 + $0x88] sm:$0xff]
        %v3090 = vld [vmem:[%s3071 + $0x90] sm:$0xff]
        %v3091 = vld [vmem:[%s3071 + $0x98] sm:$0xff]
        %v3092 = vld [vmem:[%s3071 + $0xa0] sm:$0xff]
        %v3093 = vld [vmem:[%s3071 + $0xa8] sm:$0xff]
        %v3094 = vld [vmem:[%s3071 + $0xb0] sm:$0xff]
        %v3095 = vld [vmem:[%s3071 + $0xb8] sm:$0xff]
        %v3096 = vld [vmem:[%s3071 + $0xc0] sm:$0xff]
        %v3097 = vld [vmem:[%s3071 + $0xc8] sm:$0xff]
        %v3098 = vld [vmem:[%s3071 + $0xd0] sm:$0xff]
        %v3099 = vld [vmem:[%s3071 + $0xd8] sm:$0xff]
        %v3100 = vld [vmem:[%s3071 + $0xe0] sm:$0xff]
        %v3101 = vld [vmem:[%s3071 + $0xe8] sm:$0xff]
        %v3102 = vld [vmem:[%s3071 + $0xf0] sm:$0xff]
        %v3103 = vld [vmem:[%s3071 + $0xf8] sm:$0xff]
        %v3104 = vld [vmem:[#allocation11] sm:$0xff]
        %v3105 = vld [vmem:[#allocation11 + $0x8] sm:$0xff]
        %v3106 = vld [vmem:[#allocation10] sm:$0xff]
        %v3107 = vld [vmem:[#allocation10 + $0x8] sm:$0xff]
        %v3108 = vld [vmem:[#allocation10 + $0x10] sm:$0xff]
        %v3109 = vld [vmem:[#allocation10 + $0x18] sm:$0xff]
        %v3110 = vld [vmem:[#allocation10 + $0x20] sm:$0xff]
        %v3111 = vld [vmem:[#allocation10 + $0x28] sm:$0xff]
        %v3112 = vld [vmem:[#allocation10 + $0x30] sm:$0xff]
        %v3113 = vld [vmem:[#allocation10 + $0x38] sm:$0xff]
        %v3114 = vld [vmem:[#allocation10 + $0x40] sm:$0xff]
        %v3115 = vld [vmem:[#allocation10 + $0x48] sm:$0xff]
        %v3116 = vld [vmem:[#allocation10 + $0x50] sm:$0xff]
        %v3117 = vld [vmem:[#allocation10 + $0x58] sm:$0xff]
        %v3118 = vld [vmem:[#allocation10 + $0x60] sm:$0xff]
        %v3119 = vld [vmem:[#allocation10 + $0x68] sm:$0xff]
        %v3120 = vld [vmem:[#allocation10 + $0x70] sm:$0xff]
        %v3121 = vld [vmem:[#allocation10 + $0x78] sm:$0xff]
        %v3122 = vld [vmem:[#allocation10 + $0x80] sm:$0xff]
        %v3123 = vld [vmem:[#allocation10 + $0x88] sm:$0xff]
        %v3124 = vld [vmem:[#allocation10 + $0x90] sm:$0xff]
        %v3125 = vld [vmem:[#allocation10 + $0x98] sm:$0xff]
        %v3126 = vld [vmem:[#allocation10 + $0xa0] sm:$0xff]
        %v3127 = vld [vmem:[#allocation10 + $0xa8] sm:$0xff]
        %v3128 = vld [vmem:[#allocation10 + $0xb0] sm:$0xff]
        %v3129 = vld [vmem:[#allocation10 + $0xb8] sm:$0xff]
        %v3130 = vld [vmem:[#allocation10 + $0xc0] sm:$0xff]
        %v3131 = vld [vmem:[#allocation10 + $0xc8] sm:$0xff]
        %v3132 = vld [vmem:[#allocation10 + $0xd0] sm:$0xff]
        %v3133 = vld [vmem:[#allocation10 + $0xd8] sm:$0xff]
        %v3134 = vld [vmem:[#allocation10 + $0xe0] sm:$0xff]
        %v3135 = vld [vmem:[#allocation10 + $0xe8] sm:$0xff]
        %v3136 = vld [vmem:[#allocation10 + $0xf0] sm:$0xff]
        %v3137 = vld [vmem:[#allocation10 + $0xf8] sm:$0xff]
        %3138 = vmatprep.subr.mxu0 %v3107
        %3139 = vmatpush1.msra.mxu0 %v3106
        %3140 = vmatprep.subr.mxu0 %v3109
        %3141 = vmatpush1.msra.mxu0 %v3108
        %3142 = vmatprep.subr.mxu0 %v3111
        %3143 = vmatpush1.msra.mxu0 %v3110
        %3144 = vmatprep.subr.mxu0 %v3113
        %3145 = vmatpush1.msra.mxu0 %v3112
        %3146 = vmatprep.subr.mxu0 %v3115
        %3147 = vmatpush1.msra.mxu0 %v3114
        %3148 = vmatprep.subr.mxu0 %v3117
        %3149 = vmatpush1.msra.mxu0 %v3116
        %3150 = vmatprep.subr.mxu0 %v3119
        %3151 = vmatpush1.msra.mxu0 %v3118
        %3152 = vmatprep.subr.mxu0 %v3121
        %3153 = vmatpush1.msra.mxu0 %v3120
        %3154 = vmatprep.subr.mxu0 %v3123
        %3155 = vmatpush1.msra.mxu0 %v3122
        %3156 = vmatprep.subr.mxu0 %v3125
        %3157 = vmatpush1.msra.mxu0 %v3124
        %3158 = vmatprep.subr.mxu0 %v3127
        %3159 = vmatpush1.msra.mxu0 %v3126
        %3160 = vmatprep.subr.mxu0 %v3129
        %3161 = vmatpush1.msra.mxu0 %v3128
        %3162 = vmatprep.subr.mxu0 %v3131
        %3163 = vmatpush1.msra.mxu0 %v3130
        %3164 = vmatprep.subr.mxu0 %v3133
        %3165 = vmatpush1.msra.mxu0 %v3132
        %3166 = vmatprep.subr.mxu0 %v3135
        %3167 = vmatpush1.msra.mxu0 %v3134
        %3168 = vmatprep.subr.mxu0 %v3137
        %3169 = vmatpush1.msra.mxu0 %v3136
        %3170 = vmatprep.subr.mxu0 0.0
        %3171 = vmatpush1.msra.mxu0 0.0
        %3172 = vmatprep.subr.mxu0 0.0
        %3173 = vmatpush1.msra.mxu0 0.0
        %3174 = vmatprep.subr.mxu0 0.0
        %3175 = vmatpush1.msra.mxu0 0.0
        %3176 = vmatprep.subr.mxu0 0.0
        %3177 = vmatpush1.msra.mxu0 0.0
        %3178 = vmatprep.subr.mxu0 0.0
        %3179 = vmatpush1.msra.mxu0 0.0
        %3180 = vmatprep.subr.mxu0 0.0
        %3181 = vmatpush1.msra.mxu0 0.0
        %3182 = vmatprep.subr.mxu0 0.0
        %3183 = vmatpush1.msra.mxu0 0.0
        %3184 = vmatprep.subr.mxu0 0.0
        %3185 = vmatpush1.msra.mxu0 0.0
        %3186 = vmatprep.subr.mxu0 0.0
        %3187 = vmatpush1.msra.mxu0 0.0
        %3188 = vmatprep.subr.mxu0 0.0
        %3189 = vmatpush1.msra.mxu0 0.0
        %3190 = vmatprep.subr.mxu0 0.0
        %3191 = vmatpush1.msra.mxu0 0.0
        %3192 = vmatprep.subr.mxu0 0.0
        %3193 = vmatpush1.msra.mxu0 0.0
        %3194 = vmatprep.subr.mxu0 0.0
        %3195 = vmatpush1.msra.mxu0 0.0
        %3196 = vmatprep.subr.mxu0 0.0
        %3197 = vmatpush1.msra.mxu0 0.0
        %3198 = vmatprep.subr.mxu0 0.0
        %3199 = vmatpush1.msra.mxu0 0.0
        %3200 = vmatprep.subr.mxu0 0.0
        %3201 = vmatpush1.msra.mxu0 0.0
        %3202 = vmatprep.mubr.f32.mxu0 0.0
        %3203 = vmatmul.mubr.f32.gmra.mrb[0].mxu0 %v3069
        %v3204 = vpop.f32.mrb[0].mxu0
        %v3205 = vadd.f32 0.0, %v3204
        %v3206 = vpop.f32.mrb[0].mxu0
        %v3207 = vadd.f32 0.0, %v3206
        %3208 = vmatprep.mubr.f32.mxu0 0.0
        %3209 = vmatmul.mubr.f32.gmra.mrb[0].mxu0 %v3070
        %v3210 = vpop.f32.mrb[0].mxu0
        %v3211 = vadd.f32 0.0, %v3210
        %v3212 = vpop.f32.mrb[0].mxu0
        %v3213 = vadd.f32 0.0, %v3212
        %3214 = vdwg.mxu0
        %vm3215 = vcmask 130048
        %v3217 = vsel %vm3215, %v3104, 0
        %v3220 = vsel %vm3215, %v3105, 0
        %3222 = vmatprep.subr.mxu0 %v3207
        %3223 = vmatpush1.msra.mxu0 %v3205
        %3224 = vmatprep.subr.mxu0 %v3213
        %3225 = vmatpush1.msra.mxu0 %v3211
        %3226 = vmatprep.subr.mxu0 0.0
        %3227 = vmatpush1.msra.mxu0 0.0
        %3228 = vmatprep.subr.mxu0 0.0
        %3229 = vmatpush1.msra.mxu0 0.0
        %3230 = vmatprep.subr.mxu0 0.0
        %3231 = vmatpush1.msra.mxu0 0.0
        %3232 = vmatprep.subr.mxu0 0.0
        %3233 = vmatpush1.msra.mxu0 0.0
        %3234 = vmatprep.subr.mxu0 0.0
        %3235 = vmatpush1.msra.mxu0 0.0
        %3236 = vmatprep.subr.mxu0 0.0
        %3237 = vmatpush1.msra.mxu0 0.0
        %3238 = vmatprep.subr.mxu0 0.0
        %3239 = vmatpush1.msra.mxu0 0.0
        %3240 = vmatprep.subr.mxu0 0.0
        %3241 = vmatpush1.msra.mxu0 0.0
        %3242 = vmatprep.subr.mxu0 0.0
        %3243 = vmatpush1.msra.mxu0 0.0
        %3244 = vmatprep.subr.mxu0 0.0
        %3245 = vmatpush1.msra.mxu0 0.0
        %3246 = vmatprep.subr.mxu0 0.0
        %3247 = vmatpush1.msra.mxu0 0.0
        %3248 = vmatprep.subr.mxu0 0.0
        %3249 = vmatpush1.msra.mxu0 0.0
        %3250 = vmatprep.subr.mxu0 0.0
        %3251 = vmatpush1.msra.mxu0 0.0
        %3252 = vmatprep.subr.mxu0 0.0
        %3253 = vmatpush1.msra.mxu0 0.0
        %3254 = vmatprep.subr.mxu0 0.0
        %3255 = vmatpush1.msra.mxu0 0.0
        %3256 = vmatprep.subr.mxu0 0.0
        %3257 = vmatpush1.msra.mxu0 0.0
        %3258 = vmatprep.subr.mxu0 0.0
        %3259 = vmatpush1.msra.mxu0 0.0
        %3260 = vmatprep.subr.mxu0 0.0
        %3261 = vmatpush1.msra.mxu0 0.0
        %3262 = vmatprep.subr.mxu0 0.0
        %3263 = vmatpush1.msra.mxu0 0.0
        %3264 = vmatprep.subr.mxu0 0.0
        %3265 = vmatpush1.msra.mxu0 0.0
        %3266 = vmatprep.subr.mxu0 0.0
        %3267 = vmatpush1.msra.mxu0 0.0
        %3268 = vmatprep.subr.mxu0 0.0
        %3269 = vmatpush1.msra.mxu0 0.0
        %3270 = vmatprep.subr.mxu0 0.0
        %3271 = vmatpush1.msra.mxu0 0.0
        %3272 = vmatprep.subr.mxu0 0.0
        %3273 = vmatpush1.msra.mxu0 0.0
        %3274 = vmatprep.subr.mxu0 0.0
        %3275 = vmatpush1.msra.mxu0 0.0
        %3276 = vmatprep.subr.mxu0 0.0
        %3277 = vmatpush1.msra.mxu0 0.0
        %3278 = vmatprep.subr.mxu0 0.0
        %3279 = vmatpush1.msra.mxu0 0.0
        %3280 = vmatprep.subr.mxu0 0.0
        %3281 = vmatpush1.msra.mxu0 0.0
        %3282 = vmatprep.subr.mxu0 0.0
        %3283 = vmatpush1.msra.mxu0 0.0
        %3284 = vmatprep.subr.mxu0 0.0
        %3285 = vmatpush1.msra.mxu0 0.0
        %3286 = vmatprep.mubr.f32.mxu0 0.0
        %3287 = vmatmul.mubr.f32.gmra.mrb[0].mxu0 %v3217
        %v3288 = vpop.f32.mrb[0].mxu0
        %v3289 = vadd.f32 0.0, %v3288
        %v3290 = vpop.f32.mrb[0].mxu0
        %v3291 = vadd.f32 0.0, %v3290
        %3292 = vmatprep.mubr.f32.mxu0 0.0
        %3293 = vmatmul.mubr.f32.gmra.mrb[0].mxu0 %v3220
        %v3294 = vpop.f32.mrb[0].mxu0
        %v3295 = vadd.f32 0.0, %v3294
        %v3296 = vpop.f32.mrb[0].mxu0
        %v3297 = vadd.f32 0.0, %v3296
        %3298 = vdwg.mxu0
        %3299 = vmatprep.subr.mxu0 %v3073
        %3300 = vmatpush1.msra.mxu0 %v3072
        %3301 = vmatprep.subr.mxu0 %v3075
        %3302 = vmatpush1.msra.mxu0 %v3074
        %3303 = vmatprep.subr.mxu0 %v3077
        %3304 = vmatpush1.msra.mxu0 %v3076
        %3305 = vmatprep.subr.mxu0 %v3079
        %3306 = vmatpush1.msra.mxu0 %v3078
        %3307 = vmatprep.subr.mxu0 %v3081
        %3308 = vmatpush1.msra.mxu0 %v3080
        %3309 = vmatprep.subr.mxu0 %v3083
        %3310 = vmatpush1.msra.mxu0 %v3082
        %3311 = vmatprep.subr.mxu0 %v3085
        %3312 = vmatpush1.msra.mxu0 %v3084
        %3313 = vmatprep.subr.mxu0 %v3087
        %3314 = vmatpush1.msra.mxu0 %v3086
        %3315 = vmatprep.subr.mxu0 %v3089
        %3316 = vmatpush1.msra.mxu0 %v3088
        %3317 = vmatprep.subr.mxu0 %v3091
        %3318 = vmatpush1.msra.mxu0 %v3090
        %3319 = vmatprep.subr.mxu0 %v3093
        %3320 = vmatpush1.msra.mxu0 %v3092
        %3321 = vmatprep.subr.mxu0 %v3095
        %3322 = vmatpush1.msra.mxu0 %v3094
        %3323 = vmatprep.subr.mxu0 %v3097
        %3324 = vmatpush1.msra.mxu0 %v3096
        %3325 = vmatprep.subr.mxu0 %v3099
        %3326 = vmatpush1.msra.mxu0 %v3098
        %3327 = vmatprep.subr.mxu0 %v3101
        %3328 = vmatpush1.msra.mxu0 %v3100
        %3329 = vmatprep.subr.mxu0 %v3103
        %3330 = vmatpush1.msra.mxu0 %v3102
        %3331 = vmatprep.subr.mxu0 0.0
        %3332 = vmatpush1.msra.mxu0 0.0
        %3333 = vmatprep.subr.mxu0 0.0
        %3334 = vmatpush1.msra.mxu0 0.0
        %3335 = vmatprep.subr.mxu0 0.0
        %3336 = vmatpush1.msra.mxu0 0.0
        %3337 = vmatprep.subr.mxu0 0.0
        %3338 = vmatpush1.msra.mxu0 0.0
        %3339 = vmatprep.subr.mxu0 0.0
        %3340 = vmatpush1.msra.mxu0 0.0
        %3341 = vmatprep.subr.mxu0 0.0
        %3342 = vmatpush1.msra.mxu0 0.0
        %3343 = vmatprep.subr.mxu0 0.0
        %3344 = vmatpush1.msra.mxu0 0.0
        %3345 = vmatprep.subr.mxu0 0.0
        %3346 = vmatpush1.msra.mxu0 0.0
        %3347 = vmatprep.subr.mxu0 0.0
        %3348 = vmatpush1.msra.mxu0 0.0
        %3349 = vmatprep.subr.mxu0 0.0
        %3350 = vmatpush1.msra.mxu0 0.0
        %3351 = vmatprep.subr.mxu0 0.0
        %3352 = vmatpush1.msra.mxu0 0.0
        %3353 = vmatprep.subr.mxu0 0.0
        %3354 = vmatpush1.msra.mxu0 0.0
        %3355 = vmatprep.subr.mxu0 0.0
        %3356 = vmatpush1.msra.mxu0 0.0
        %3357 = vmatprep.subr.mxu0 0.0
        %3358 = vmatpush1.msra.mxu0 0.0
        %3359 = vmatprep.subr.mxu0 0.0
        %3360 = vmatpush1.msra.mxu0 0.0
        %3361 = vmatprep.subr.mxu0 0.0
        %3362 = vmatpush1.msra.mxu0 0.0
        %3363 = vmatprep.mubr.f32.mxu0 0.0
        %3364 = vmatmul.mubr.f32.gmra.mrb[0].mxu0 %v3069
        %v3365 = vpop.f32.mrb[0].mxu0
        %v3366 = vadd.f32 %v3289, %v3365
        %v3367 = vpop.f32.mrb[0].mxu0
        %v3368 = vadd.f32 %v3291, %v3367
        %3369 = vmatprep.mubr.f32.mxu0 0.0
        %3370 = vmatmul.mubr.f32.gmra.mrb[0].mxu0 %v3070
        %v3371 = vpop.f32.mrb[0].mxu0
        %v3372 = vadd.f32 %v3295, %v3371
        %v3373 = vpop.f32.mrb[0].mxu0
        %v3374 = vadd.f32 %v3297, %v3373
        %3375 = vdwg.mxu0
        %s3376 = scalar_lea.vmem [#allocation11], 16
        %v3377 = vld [vmem:[%s3376] sm:$0xff]
        %v3378 = vld [vmem:[%s3376 + $0x8] sm:$0xff]
        %s3379 = scalar_lea.vmem [#allocation10], 512
        %v3380 = vld [vmem:[%s3379] sm:$0xff]
        %v3381 = vld [vmem:[%s3379 + $0x8] sm:$0xff]
        %v3382 = vld [vmem:[%s3379 + $0x10] sm:$0xff]
        %v3383 = vld [vmem:[%s3379 + $0x18] sm:$0xff]
        %v3384 = vld [vmem:[%s3379 + $0x20] sm:$0xff]
        %v3385 = vld [vmem:[%s3379 + $0x28] sm:$0xff]
        %v3386 = vld [vmem:[%s3379 + $0x30] sm:$0xff]
        %v3387 = vld [vmem:[%s3379 + $0x38] sm:$0xff]
        %v3388 = vld [vmem:[%s3379 + $0x40] sm:$0xff]
        %v3389 = vld [vmem:[%s3379 + $0x48] sm:$0xff]
        %v3390 = vld [vmem:[%s3379 + $0x50] sm:$0xff]
        %v3391 = vld [vmem:[%s3379 + $0x58] sm:$0xff]
        %v3392 = vld [vmem:[%s3379 + $0x60] sm:$0xff]
        %v3393 = vld [vmem:[%s3379 + $0x68] sm:$0xff]
        %v3394 = vld [vmem:[%s3379 + $0x70] sm:$0xff]
        %v3395 = vld [vmem:[%s3379 + $0x78] sm:$0xff]
        %v3396 = vld [vmem:[%s3379 + $0x80] sm:$0xff]
        %v3397 = vld [vmem:[%s3379 + $0x88] sm:$0xff]
        %v3398 = vld [vmem:[%s3379 + $0x90] sm:$0xff]
        %v3399 = vld [vmem:[%s3379 + $0x98] sm:$0xff]
        %v3400 = vld [vmem:[%s3379 + $0xa0] sm:$0xff]
        %v3401 = vld [vmem:[%s3379 + $0xa8] sm:$0xff]
        %v3402 = vld [vmem:[%s3379 + $0xb0] sm:$0xff]
        %v3403 = vld [vmem:[%s3379 + $0xb8] sm:$0xff]
        %v3404 = vld [vmem:[%s3379 + $0xc0] sm:$0xff]
        %v3405 = vld [vmem:[%s3379 + $0xc8] sm:$0xff]
        %v3406 = vld [vmem:[%s3379 + $0xd0] sm:$0xff]
        %v3407 = vld [vmem:[%s3379 + $0xd8] sm:$0xff]
        %v3408 = vld [vmem:[%s3379 + $0xe0] sm:$0xff]
        %v3409 = vld [vmem:[%s3379 + $0xe8] sm:$0xff]
        %v3410 = vld [vmem:[%s3379 + $0xf0] sm:$0xff]
        %v3411 = vld [vmem:[%s3379 + $0xf8] sm:$0xff]
        %3412 = vmatprep.subr.mxu0 %v3381
        %3413 = vmatpush1.msra.mxu0 %v3380
        %3414 = vmatprep.subr.mxu0 %v3383
        %3415 = vmatpush1.msra.mxu0 %v3382
        %3416 = vmatprep.subr.mxu0 %v3385
        %3417 = vmatpush1.msra.mxu0 %v3384
        %3418 = vmatprep.subr.mxu0 %v3387
        %3419 = vmatpush1.msra.mxu0 %v3386
        %3420 = vmatprep.subr.mxu0 %v3389
        %3421 = vmatpush1.msra.mxu0 %v3388
        %3422 = vmatprep.subr.mxu0 %v3391
        %3423 = vmatpush1.msra.mxu0 %v3390
        %3424 = vmatprep.subr.mxu0 %v3393
        %3425 = vmatpush1.msra.mxu0 %v3392
        %3426 = vmatprep.subr.mxu0 %v3395
        %3427 = vmatpush1.msra.mxu0 %v3394
        %3428 = vmatprep.subr.mxu0 %v3397
        %3429 = vmatpush1.msra.mxu0 %v3396
        %3430 = vmatprep.subr.mxu0 %v3399
        %3431 = vmatpush1.msra.mxu0 %v3398
        %3432 = vmatprep.subr.mxu0 %v3401
        %3433 = vmatpush1.msra.mxu0 %v3400
        %3434 = vmatprep.subr.mxu0 %v3403
        %3435 = vmatpush1.msra.mxu0 %v3402
        %3436 = vmatprep.subr.mxu0 %v3405
        %3437 = vmatpush1.msra.mxu0 %v3404
        %3438 = vmatprep.subr.mxu0 %v3407
        %3439 = vmatpush1.msra.mxu0 %v3406
        %3440 = vmatprep.subr.mxu0 %v3409
        %3441 = vmatpush1.msra.mxu0 %v3408
        %3442 = vmatprep.subr.mxu0 %v3411
        %3443 = vmatpush1.msra.mxu0 %v3410
        %3444 = vmatprep.subr.mxu0 0.0
        %3445 = vmatpush1.msra.mxu0 0.0
        %3446 = vmatprep.subr.mxu0 0.0
        %3447 = vmatpush1.msra.mxu0 0.0
        %3448 = vmatprep.subr.mxu0 0.0
        %3449 = vmatpush1.msra.mxu0 0.0
        %3450 = vmatprep.subr.mxu0 0.0
        %3451 = vmatpush1.msra.mxu0 0.0
        %3452 = vmatprep.subr.mxu0 0.0
        %3453 = vmatpush1.msra.mxu0 0.0
        %3454 = vmatprep.subr.mxu0 0.0
        %3455 = vmatpush1.msra.mxu0 0.0
        %3456 = vmatprep.subr.mxu0 0.0
        %3457 = vmatpush1.msra.mxu0 0.0
        %3458 = vmatprep.subr.mxu0 0.0
        %3459 = vmatpush1.msra.mxu0 0.0
        %3460 = vmatprep.subr.mxu0 0.0
        %3461 = vmatpush1.msra.mxu0 0.0
        %3462 = vmatprep.subr.mxu0 0.0
        %3463 = vmatpush1.msra.mxu0 0.0
        %3464 = vmatprep.subr.mxu0 0.0
        %3465 = vmatpush1.msra.mxu0 0.0
        %3466 = vmatprep.subr.mxu0 0.0
        %3467 = vmatpush1.msra.mxu0 0.0
        %3468 = vmatprep.subr.mxu0 0.0
        %3469 = vmatpush1.msra.mxu0 0.0
        %3470 = vmatprep.subr.mxu0 0.0
        %3471 = vmatpush1.msra.mxu0 0.0
        %3472 = vmatprep.subr.mxu0 0.0
        %3473 = vmatpush1.msra.mxu0 0.0
        %3474 = vmatprep.subr.mxu0 0.0
        %3475 = vmatpush1.msra.mxu0 0.0
        %3476 = vmatprep.mubr.f32.mxu0 0.0
        %3477 = vmatmul.mubr.f32.gmra.mrb[0].mxu0 %v3069
        %v3478 = vpop.f32.mrb[0].mxu0
        %v3479 = vadd.f32 0.0, %v3478
        %v3480 = vpop.f32.mrb[0].mxu0
        %v3481 = vadd.f32 0.0, %v3480
        %3482 = vmatprep.mubr.f32.mxu0 0.0
        %3483 = vmatmul.mubr.f32.gmra.mrb[0].mxu0 %v3070
        %v3484 = vpop.f32.mrb[0].mxu0
        %v3485 = vadd.f32 0.0, %v3484
        %v3486 = vpop.f32.mrb[0].mxu0
        %v3487 = vadd.f32 0.0, %v3486
        %3488 = vdwg.mxu0
        %v3490 = vsel %vm3215, %v3377, 0
        %v3493 = vsel %vm3215, %v3378, 0
        %3495 = vmatprep.subr.mxu0 %v3481
        %3496 = vmatpush1.msra.mxu0 %v3479
        %3497 = vmatprep.subr.mxu0 %v3487
        %3498 = vmatpush1.msra.mxu0 %v3485
        %3499 = vmatprep.subr.mxu0 0.0
        %3500 = vmatpush1.msra.mxu0 0.0
        %3501 = vmatprep.subr.mxu0 0.0
        %3502 = vmatpush1.msra.mxu0 0.0
        %3503 = vmatprep.subr.mxu0 0.0
        %3504 = vmatpush1.msra.mxu0 0.0
        %3505 = vmatprep.subr.mxu0 0.0
        %3506 = vmatpush1.msra.mxu0 0.0
        %3507 = vmatprep.subr.mxu0 0.0
        %3508 = vmatpush1.msra.mxu0 0.0
        %3509 = vmatprep.subr.mxu0 0.0
        %3510 = vmatpush1.msra.mxu0 0.0
        %3511 = vmatprep.subr.mxu0 0.0
        %3512 = vmatpush1.msra.mxu0 0.0
        %3513 = vmatprep.subr.mxu0 0.0
        %3514 = vmatpush1.msra.mxu0 0.0
        %3515 = vmatprep.subr.mxu0 0.0
        %3516 = vmatpush1.msra.mxu0 0.0
        %3517 = vmatprep.subr.mxu0 0.0
        %3518 = vmatpush1.msra.mxu0 0.0
        %3519 = vmatprep.subr.mxu0 0.0
        %3520 = vmatpush1.msra.mxu0 0.0
        %3521 = vmatprep.subr.mxu0 0.0
        %3522 = vmatpush1.msra.mxu0 0.0
        %3523 = vmatprep.subr.mxu0 0.0
        %3524 = vmatpush1.msra.mxu0 0.0
        %3525 = vmatprep.subr.mxu0 0.0
        %3526 = vmatpush1.msra.mxu0 0.0
        %3527 = vmatprep.subr.mxu0 0.0
        %3528 = vmatpush1.msra.mxu0 0.0
        %3529 = vmatprep.subr.mxu0 0.0
        %3530 = vmatpush1.msra.mxu0 0.0
        %3531 = vmatprep.subr.mxu0 0.0
        %3532 = vmatpush1.msra.mxu0 0.0
        %3533 = vmatprep.subr.mxu0 0.0
        %3534 = vmatpush1.msra.mxu0 0.0
        %3535 = vmatprep.subr.mxu0 0.0
        %3536 = vmatpush1.msra.mxu0 0.0
        %3537 = vmatprep.subr.mxu0 0.0
        %3538 = vmatpush1.msra.mxu0 0.0
        %3539 = vmatprep.subr.mxu0 0.0
        %3540 = vmatpush1.msra.mxu0 0.0
        %3541 = vmatprep.subr.mxu0 0.0
        %3542 = vmatpush1.msra.mxu0 0.0
        %3543 = vmatprep.subr.mxu0 0.0
        %3544 = vmatpush1.msra.mxu0 0.0
        %3545 = vmatprep.subr.mxu0 0.0
        %3546 = vmatpush1.msra.mxu0 0.0
        %3547 = vmatprep.subr.mxu0 0.0
        %3548 = vmatpush1.msra.mxu0 0.0
        %3549 = vmatprep.subr.mxu0 0.0
        %3550 = vmatpush1.msra.mxu0 0.0
        %3551 = vmatprep.subr.mxu0 0.0
        %3552 = vmatpush1.msra.mxu0 0.0
        %3553 = vmatprep.subr.mxu0 0.0
        %3554 = vmatpush1.msra.mxu0 0.0
        %3555 = vmatprep.subr.mxu0 0.0
        %3556 = vmatpush1.msra.mxu0 0.0
        %3557 = vmatprep.subr.mxu0 0.0
        %3558 = vmatpush1.msra.mxu0 0.0
        %3559 = vmatprep.mubr.f32.mxu0 0.0
        %3560 = vmatmul.mubr.f32.gmra.mrb[0].mxu0 %v3490
        %v3561 = vpop.f32.mrb[0].mxu0
        %v3562 = vadd.f32 0.0, %v3561
        %v3563 = vpop.f32.mrb[0].mxu0
        %v3564 = vadd.f32 0.0, %v3563
        %3565 = vmatprep.mubr.f32.mxu0 0.0
        %3566 = vmatmul.mubr.f32.gmra.mrb[0].mxu0 %v3493
        %v3567 = vpop.f32.mrb[0].mxu0
        %v3568 = vadd.f32 0.0, %v3567
        %v3569 = vpop.f32.mrb[0].mxu0
        %v3570 = vadd.f32 0.0, %v3569
        %3571 = vdwg.mxu0
        %v3572 = vadd.f32 %v3366, %v3562
        %v3573 = vadd.f32 %v3368, %v3564
        %v3574 = vadd.f32 %v3372, %v3568
        %v3575 = vadd.f32 %v3374, %v3570
        %v3576 = vld [vmem:[#allocation13] sm:$0xff]
        %v3577 = vld [vmem:[#allocation13 + $0x8] sm:$0xff]
        %v3578 = vld [vmem:[#allocation13 + $0x10] sm:$0xff]
        %v3579 = vld [vmem:[#allocation13 + $0x18] sm:$0xff]
        %v3580 = vld [vmem:[#allocation13 + $0x20] sm:$0xff]
        %v3581 = vld [vmem:[#allocation13 + $0x28] sm:$0xff]
        %v3582 = vld [vmem:[#allocation13 + $0x30] sm:$0xff]
        %v3583 = vld [vmem:[#allocation13 + $0x38] sm:$0xff]
        %v3584 = vld [vmem:[#allocation13 + $0x40] sm:$0xff]
        %v3585 = vld [vmem:[#allocation13 + $0x48] sm:$0xff]
        %v3586 = vld [vmem:[#allocation13 + $0x50] sm:$0xff]
        %v3587 = vld [vmem:[#allocation13 + $0x58] sm:$0xff]
        %v3588 = vld [vmem:[#allocation13 + $0x60] sm:$0xff]
        %v3589 = vld [vmem:[#allocation13 + $0x68] sm:$0xff]
        %v3590 = vld [vmem:[#allocation13 + $0x70] sm:$0xff]
        %v3591 = vld [vmem:[#allocation13 + $0x78] sm:$0xff]
        %v3592 = vld [vmem:[#allocation13 + $0x80] sm:$0xff]
        %v3593 = vld [vmem:[#allocation13 + $0x88] sm:$0xff]
        %v3594 = vld [vmem:[#allocation13 + $0x90] sm:$0xff]
        %v3595 = vld [vmem:[#allocation13 + $0x98] sm:$0xff]
        %v3596 = vld [vmem:[#allocation13 + $0xa0] sm:$0xff]
        %v3597 = vld [vmem:[#allocation13 + $0xa8] sm:$0xff]
        %v3598 = vld [vmem:[#allocation13 + $0xb0] sm:$0xff]
        %v3599 = vld [vmem:[#allocation13 + $0xb8] sm:$0xff]
        %v3600 = vld [vmem:[#allocation13 + $0xc0] sm:$0xff]
        %v3601 = vld [vmem:[#allocation13 + $0xc8] sm:$0xff]
        %v3602 = vld [vmem:[#allocation13 + $0xd0] sm:$0xff]
        %v3603 = vld [vmem:[#allocation13 + $0xd8] sm:$0xff]
        %v3604 = vld [vmem:[#allocation13 + $0xe0] sm:$0xff]
        %v3605 = vld [vmem:[#allocation13 + $0xe8] sm:$0xff]
        %v3606 = vld [vmem:[#allocation13 + $0xf0] sm:$0xff]
        %v3607 = vld [vmem:[#allocation13 + $0xf8] sm:$0xff]
        %3608 = vmatprep.subr.mxu0 0.0
        %3609 = vmatpush1.msra.mxu0 %v3576
        %3610 = vmatprep.subr.mxu0 0.0
        %3611 = vmatpush1.msra.mxu0 %v3577
        %3612 = vmatprep.subr.mxu0 0.0
        %3613 = vmatpush1.msra.mxu0 %v3578
        %3614 = vmatprep.subr.mxu0 0.0
        %3615 = vmatpush1.msra.mxu0 %v3579
        %3616 = vmatprep.subr.mxu0 0.0
        %3617 = vmatpush1.msra.mxu0 %v3580
        %3618 = vmatprep.subr.mxu0 0.0
        %3619 = vmatpush1.msra.mxu0 %v3581
        %3620 = vmatprep.subr.mxu0 0.0
        %3621 = vmatpush1.msra.mxu0 %v3582
        %3622 = vmatprep.subr.mxu0 0.0
        %3623 = vmatpush1.msra.mxu0 %v3583
        %3624 = vmatprep.subr.mxu0 0.0
        %3625 = vmatpush1.msra.mxu0 %v3584
        %3626 = vmatprep.subr.mxu0 0.0
        %3627 = vmatpush1.msra.mxu0 %v3585
        %3628 = vmatprep.subr.mxu0 0.0
        %3629 = vmatpush1.msra.mxu0 %v3586
        %3630 = vmatprep.subr.mxu0 0.0
        %3631 = vmatpush1.msra.mxu0 %v3587
        %3632 = vmatprep.subr.mxu0 0.0
        %3633 = vmatpush1.msra.mxu0 %v3588
        %3634 = vmatprep.subr.mxu0 0.0
        %3635 = vmatpush1.msra.mxu0 %v3589
        %3636 = vmatprep.subr.mxu0 0.0
        %3637 = vmatpush1.msra.mxu0 %v3590
        %3638 = vmatprep.subr.mxu0 0.0
        %3639 = vmatpush1.msra.mxu0 %v3591
        %3640 = vmatprep.subr.mxu0 0.0
        %3641 = vmatpush1.msra.mxu0 %v3592
        %3642 = vmatprep.subr.mxu0 0.0
        %3643 = vmatpush1.msra.mxu0 %v3593
        %3644 = vmatprep.subr.mxu0 0.0
        %3645 = vmatpush1.msra.mxu0 %v3594
        %3646 = vmatprep.subr.mxu0 0.0
        %3647 = vmatpush1.msra.mxu0 %v3595
        %3648 = vmatprep.subr.mxu0 0.0
        %3649 = vmatpush1.msra.mxu0 %v3596
        %3650 = vmatprep.subr.mxu0 0.0
        %3651 = vmatpush1.msra.mxu0 %v3597
        %3652 = vmatprep.subr.mxu0 0.0
        %3653 = vmatpush1.msra.mxu0 %v3598
        %3654 = vmatprep.subr.mxu0 0.0
        %3655 = vmatpush1.msra.mxu0 %v3599
        %3656 = vmatprep.subr.mxu0 0.0
        %3657 = vmatpush1.msra.mxu0 %v3600
        %3658 = vmatprep.subr.mxu0 0.0
        %3659 = vmatpush1.msra.mxu0 %v3601
        %3660 = vmatprep.subr.mxu0 0.0
        %3661 = vmatpush1.msra.mxu0 %v3602
        %3662 = vmatprep.subr.mxu0 0.0
        %3663 = vmatpush1.msra.mxu0 %v3603
        %3664 = vmatprep.subr.mxu0 0.0
        %3665 = vmatpush1.msra.mxu0 %v3604
        %3666 = vmatprep.subr.mxu0 0.0
        %3667 = vmatpush1.msra.mxu0 %v3605
        %3668 = vmatprep.subr.mxu0 0.0
        %3669 = vmatpush1.msra.mxu0 %v3606
        %3670 = vmatprep.subr.mxu0 0.0
        %3671 = vmatpush1.msra.mxu0 %v3607
        %3672 = vmatprep.mubr.f32.mxu0 %v3573
        %3673 = vmatmul.mubr.f32.gmra.mrb[0].mxu0 %v3572
        %v3674 = vpop.f32.mrb[0].mxu0
        %v3675 = vadd.f32 0.0, %v3674
        %v3676 = vpop.f32.mrb[0].mxu0
        %3677 = vmatprep.mubr.f32.mxu0 %v3575
        %3678 = vmatmul.mubr.f32.gmra.mrb[0].mxu0 %v3574
        %v3679 = vpop.f32.mrb[0].mxu0
        %v3680 = vadd.f32 0.0, %v3679
        %v3681 = vpop.f32.mrb[0].mxu0
        %3682 = vdwg.mxu0
        %s3683 = scalar_lea.vmem [#allocation13], 256
        %v3684 = vld [vmem:[%s3683] sm:$0xff]
        %v3685 = vld [vmem:[%s3683 + $0x8] sm:$0xff]
        %v3686 = vld [vmem:[%s3683 + $0x10] sm:$0xff]
        %v3687 = vld [vmem:[%s3683 + $0x18] sm:$0xff]
        %v3688 = vld [vmem:[%s3683 + $0x20] sm:$0xff]
        %v3689 = vld [vmem:[%s3683 + $0x28] sm:$0xff]
        %v3690 = vld [vmem:[%s3683 + $0x30] sm:$0xff]
        %v3691 = vld [vmem:[%s3683 + $0x38] sm:$0xff]
        %v3692 = vld [vmem:[%s3683 + $0x40] sm:$0xff]
        %v3693 = vld [vmem:[%s3683 + $0x48] sm:$0xff]
        %v3694 = vld [vmem:[%s3683 + $0x50] sm:$0xff]
        %v3695 = vld [vmem:[%s3683 + $0x58] sm:$0xff]
        %v3696 = vld [vmem:[%s3683 + $0x60] sm:$0xff]
        %v3697 = vld [vmem:[%s3683 + $0x68] sm:$0xff]
        %v3698 = vld [vmem:[%s3683 + $0x70] sm:$0xff]
        %v3699 = vld [vmem:[%s3683 + $0x78] sm:$0xff]
        %v3700 = vld [vmem:[%s3683 + $0x80] sm:$0xff]
        %v3701 = vld [vmem:[%s3683 + $0x88] sm:$0xff]
        %v3702 = vld [vmem:[%s3683 + $0x90] sm:$0xff]
        %v3703 = vld [vmem:[%s3683 + $0x98] sm:$0xff]
        %v3704 = vld [vmem:[%s3683 + $0xa0] sm:$0xff]
        %v3705 = vld [vmem:[%s3683 + $0xa8] sm:$0xff]
        %v3706 = vld [vmem:[%s3683 + $0xb0] sm:$0xff]
        %v3707 = vld [vmem:[%s3683 + $0xb8] sm:$0xff]
        %v3708 = vld [vmem:[%s3683 + $0xc0] sm:$0xff]
        %v3709 = vld [vmem:[%s3683 + $0xc8] sm:$0xff]
        %v3710 = vld [vmem:[%s3683 + $0xd0] sm:$0xff]
        %v3711 = vld [vmem:[%s3683 + $0xd8] sm:$0xff]
        %v3712 = vld [vmem:[%s3683 + $0xe0] sm:$0xff]
        %v3713 = vld [vmem:[%s3683 + $0xe8] sm:$0xff]
        %v3714 = vld [vmem:[%s3683 + $0xf0] sm:$0xff]
        %v3715 = vld [vmem:[%s3683 + $0xf8] sm:$0xff]
        %3716 = vmatprep.subr.mxu0 0.0
        %3717 = vmatpush1.msra.mxu0 %v3684
        %3718 = vmatprep.subr.mxu0 0.0
        %3719 = vmatpush1.msra.mxu0 %v3685
        %3720 = vmatprep.subr.mxu0 0.0
        %3721 = vmatpush1.msra.mxu0 %v3686
        %3722 = vmatprep.subr.mxu0 0.0
        %3723 = vmatpush1.msra.mxu0 %v3687
        %3724 = vmatprep.subr.mxu0 0.0
        %3725 = vmatpush1.msra.mxu0 %v3688
        %3726 = vmatprep.subr.mxu0 0.0
        %3727 = vmatpush1.msra.mxu0 %v3689
        %3728 = vmatprep.subr.mxu0 0.0
        %3729 = vmatpush1.msra.mxu0 %v3690
        %3730 = vmatprep.subr.mxu0 0.0
        %3731 = vmatpush1.msra.mxu0 %v3691
        %3732 = vmatprep.subr.mxu0 0.0
        %3733 = vmatpush1.msra.mxu0 %v3692
        %3734 = vmatprep.subr.mxu0 0.0
        %3735 = vmatpush1.msra.mxu0 %v3693
        %3736 = vmatprep.subr.mxu0 0.0
        %3737 = vmatpush1.msra.mxu0 %v3694
        %3738 = vmatprep.subr.mxu0 0.0
        %3739 = vmatpush1.msra.mxu0 %v3695
        %3740 = vmatprep.subr.mxu0 0.0
        %3741 = vmatpush1.msra.mxu0 %v3696
        %3742 = vmatprep.subr.mxu0 0.0
        %3743 = vmatpush1.msra.mxu0 %v3697
        %3744 = vmatprep.subr.mxu0 0.0
        %3745 = vmatpush1.msra.mxu0 %v3698
        %3746 = vmatprep.subr.mxu0 0.0
        %3747 = vmatpush1.msra.mxu0 %v3699
        %3748 = vmatprep.subr.mxu0 0.0
        %3749 = vmatpush1.msra.mxu0 %v3700
        %3750 = vmatprep.subr.mxu0 0.0
        %3751 = vmatpush1.msra.mxu0 %v3701
        %3752 = vmatprep.subr.mxu0 0.0
        %3753 = vmatpush1.msra.mxu0 %v3702
        %3754 = vmatprep.subr.mxu0 0.0
        %3755 = vmatpush1.msra.mxu0 %v3703
        %3756 = vmatprep.subr.mxu0 0.0
        %3757 = vmatpush1.msra.mxu0 %v3704
        %3758 = vmatprep.subr.mxu0 0.0
        %3759 = vmatpush1.msra.mxu0 %v3705
        %3760 = vmatprep.subr.mxu0 0.0
        %3761 = vmatpush1.msra.mxu0 %v3706
        %3762 = vmatprep.subr.mxu0 0.0
        %3763 = vmatpush1.msra.mxu0 %v3707
        %3764 = vmatprep.subr.mxu0 0.0
        %3765 = vmatpush1.msra.mxu0 %v3708
        %3766 = vmatprep.subr.mxu0 0.0
        %3767 = vmatpush1.msra.mxu0 %v3709
        %3768 = vmatprep.subr.mxu0 0.0
        %3769 = vmatpush1.msra.mxu0 %v3710
        %3770 = vmatprep.subr.mxu0 0.0
        %3771 = vmatpush1.msra.mxu0 %v3711
        %3772 = vmatprep.subr.mxu0 0.0
        %3773 = vmatpush1.msra.mxu0 %v3712
        %3774 = vmatprep.subr.mxu0 0.0
        %3775 = vmatpush1.msra.mxu0 %v3713
        %3776 = vmatprep.subr.mxu0 0.0
        %3777 = vmatpush1.msra.mxu0 %v3714
        %3778 = vmatprep.subr.mxu0 0.0
        %3779 = vmatpush1.msra.mxu0 %v3715
        %3780 = vmatprep.mubr.f32.mxu0 %v3573
        %3781 = vmatmul.mubr.f32.gmra.mrb[0].mxu0 %v3572
        %v3782 = vpop.f32.mrb[0].mxu0
        %v3783 = vadd.f32 0.0, %v3782
        %v3784 = vpop.f32.mrb[0].mxu0
        %3785 = vmatprep.mubr.f32.mxu0 %v3575
        %3786 = vmatmul.mubr.f32.gmra.mrb[0].mxu0 %v3574
        %v3787 = vpop.f32.mrb[0].mxu0
        %v3788 = vadd.f32 0.0, %v3787
        %v3789 = vpop.f32.mrb[0].mxu0
        %3790 = vdwg.mxu0
        %v3791 = vmax.f32 %v3675, %v3783
        %v3792 = vmax.f32 %v3680, %v3788
        %v3793 = vld [vmem:[%s14] sm:$0xff]
        %v3795 = vsel %vm3215, %v3793, 0
        %3797 = vmatprep.subr.mxu0 0.0
        %3798 = vmatpush1.msra.mxu0 %v3791
        %3799 = vmatprep.subr.mxu0 0.0
        %3800 = vmatpush1.msra.mxu0 %v3792
        %3801 = vmatprep.subr.mxu0 0.0
        %3802 = vmatpush1.msra.mxu0 0.0
        %3803 = vmatprep.subr.mxu0 0.0
        %3804 = vmatpush1.msra.mxu0 0.0
        %3805 = vmatprep.subr.mxu0 0.0
        %3806 = vmatpush1.msra.mxu0 0.0
        %3807 = vmatprep.subr.mxu0 0.0
        %3808 = vmatpush1.msra.mxu0 0.0
        %3809 = vmatprep.subr.mxu0 0.0
        %3810 = vmatpush1.msra.mxu0 0.0
        %3811 = vmatprep.subr.mxu0 0.0
        %3812 = vmatpush1.msra.mxu0 0.0
        %3813 = vmatprep.subr.mxu0 0.0
        %3814 = vmatpush1.msra.mxu0 0.0
        %3815 = vmatprep.subr.mxu0 0.0
        %3816 = vmatpush1.msra.mxu0 0.0
        %3817 = vmatprep.subr.mxu0 0.0
        %3818 = vmatpush1.msra.mxu0 0.0
        %3819 = vmatprep.subr.mxu0 0.0
        %3820 = vmatpush1.msra.mxu0 0.0
        %3821 = vmatprep.subr.mxu0 0.0
        %3822 = vmatpush1.msra.mxu0 0.0
        %3823 = vmatprep.subr.mxu0 0.0
        %3824 = vmatpush1.msra.mxu0 0.0
        %3825 = vmatprep.subr.mxu0 0.0
        %3826 = vmatpush1.msra.mxu0 0.0
        %3827 = vmatprep.subr.mxu0 0.0
        %3828 = vmatpush1.msra.mxu0 0.0
        %3829 = vmatprep.subr.mxu0 0.0
        %3830 = vmatpush1.msra.mxu0 0.0
        %3831 = vmatprep.subr.mxu0 0.0
        %3832 = vmatpush1.msra.mxu0 0.0
        %3833 = vmatprep.subr.mxu0 0.0
        %3834 = vmatpush1.msra.mxu0 0.0
        %3835 = vmatprep.subr.mxu0 0.0
        %3836 = vmatpush1.msra.mxu0 0.0
        %3837 = vmatprep.subr.mxu0 0.0
        %3838 = vmatpush1.msra.mxu0 0.0
        %3839 = vmatprep.subr.mxu0 0.0
        %3840 = vmatpush1.msra.mxu0 0.0
        %3841 = vmatprep.subr.mxu0 0.0
        %3842 = vmatpush1.msra.mxu0 0.0
        %3843 = vmatprep.subr.mxu0 0.0
        %3844 = vmatpush1.msra.mxu0 0.0
        %3845 = vmatprep.subr.mxu0 0.0
        %3846 = vmatpush1.msra.mxu0 0.0
        %3847 = vmatprep.subr.mxu0 0.0
        %3848 = vmatpush1.msra.mxu0 0.0
        %3849 = vmatprep.subr.mxu0 0.0
        %3850 = vmatpush1.msra.mxu0 0.0
        %3851 = vmatprep.subr.mxu0 0.0
        %3852 = vmatpush1.msra.mxu0 0.0
        %3853 = vmatprep.subr.mxu0 0.0
        %3854 = vmatpush1.msra.mxu0 0.0
        %3855 = vmatprep.subr.mxu0 0.0
        %3856 = vmatpush1.msra.mxu0 0.0
        %3857 = vmatprep.subr.mxu0 0.0
        %3858 = vmatpush1.msra.mxu0 0.0
        %3859 = vmatprep.subr.mxu0 0.0
        %3860 = vmatpush1.msra.mxu0 0.0
        %3861 = vmatprep.mubr.f32.mxu0 0.0
        %3862 = vmatmul.mubr.f32.gmra.mrb[0].mxu0 %v3795
        %v3863 = vpop.f32.mrb[0].mxu0
        %v3864 = vadd.f32 0.0, %v3863
        %v3865 = vpop.f32.mrb[0].mxu0
        %3866 = vdwg.mxu0
        %s3867 = scalar_lea.vmem %s14, 8
        %v3868 = vld [vmem:[%s3867] sm:$0xff]
        %v3870 = vsel %vm3215, %v3868, 0
        %3872 = vmatprep.subr.mxu0 0.0
        %3873 = vmatpush1.msra.mxu0 %v3791
        %3874 = vmatprep.subr.mxu0 0.0
        %3875 = vmatpush1.msra.mxu0 %v3792
        %3876 = vmatprep.subr.mxu0 0.0
        %3877 = vmatpush1.msra.mxu0 0.0
        %3878 = vmatprep.subr.mxu0 0.0
        %3879 = vmatpush1.msra.mxu0 0.0
        %3880 = vmatprep.subr.mxu0 0.0
        %3881 = vmatpush1.msra.mxu0 0.0
        %3882 = vmatprep.subr.mxu0 0.0
        %3883 = vmatpush1.msra.mxu0 0.0
        %3884 = vmatprep.subr.mxu0 0.0
        %3885 = vmatpush1.msra.mxu0 0.0
        %3886 = vmatprep.subr.mxu0 0.0
        %3887 = vmatpush1.msra.mxu0 0.0
        %3888 = vmatprep.subr.mxu0 0.0
        %3889 = vmatpush1.msra.mxu0 0.0
        %3890 = vmatprep.subr.mxu0 0.0
        %3891 = vmatpush1.msra.mxu0 0.0
        %3892 = vmatprep.subr.mxu0 0.0
        %3893 = vmatpush1.msra.mxu0 0.0
        %3894 = vmatprep.subr.mxu0 0.0
        %3895 = vmatpush1.msra.mxu0 0.0
        %3896 = vmatprep.subr.mxu0 0.0
        %3897 = vmatpush1.msra.mxu0 0.0
        %3898 = vmatprep.subr.mxu0 0.0
        %3899 = vmatpush1.msra.mxu0 0.0
        %3900 = vmatprep.subr.mxu0 0.0
        %3901 = vmatpush1.msra.mxu0 0.0
        %3902 = vmatprep.subr.mxu0 0.0
        %3903 = vmatpush1.msra.mxu0 0.0
        %3904 = vmatprep.subr.mxu0 0.0
        %3905 = vmatpush1.msra.mxu0 0.0
        %3906 = vmatprep.subr.mxu0 0.0
        %3907 = vmatpush1.msra.mxu0 0.0
        %3908 = vmatprep.subr.mxu0 0.0
        %3909 = vmatpush1.msra.mxu0 0.0
        %3910 = vmatprep.subr.mxu0 0.0
        %3911 = vmatpush1.msra.mxu0 0.0
        %3912 = vmatprep.subr.mxu0 0.0
        %3913 = vmatpush1.msra.mxu0 0.0
        %3914 = vmatprep.subr.mxu0 0.0
        %3915 = vmatpush1.msra.mxu0 0.0
        %3916 = vmatprep.subr.mxu0 0.0
        %3917 = vmatpush1.msra.mxu0 0.0
        %3918 = vmatprep.subr.mxu0 0.0
        %3919 = vmatpush1.msra.mxu0 0.0
        %3920 = vmatprep.subr.mxu0 0.0
        %3921 = vmatpush1.msra.mxu0 0.0
        %3922 = vmatprep.subr.mxu0 0.0
        %3923 = vmatpush1.msra.mxu0 0.0
        %3924 = vmatprep.subr.mxu0 0.0
        %3925 = vmatpush1.msra.mxu0 0.0
        %3926 = vmatprep.subr.mxu0 0.0
        %3927 = vmatpush1.msra.mxu0 0.0
        %3928 = vmatprep.subr.mxu0 0.0
        %3929 = vmatpush1.msra.mxu0 0.0
        %3930 = vmatprep.subr.mxu0 0.0
        %3931 = vmatpush1.msra.mxu0 0.0
        %3932 = vmatprep.subr.mxu0 0.0
        %3933 = vmatpush1.msra.mxu0 0.0
        %3934 = vmatprep.subr.mxu0 0.0
        %3935 = vmatpush1.msra.mxu0 0.0
        %3936 = vmatprep.mubr.f32.mxu0 0.0
        %3937 = vmatmul.mubr.f32.gmra.mrb[0].mxu0 %v3870
        %v3938 = vpop.f32.mrb[0].mxu0
        %v3939 = vadd.f32 0.0, %v3938
        %v3940 = vpop.f32.mrb[0].mxu0
        %3941 = vdwg.mxu0
        %v3942 = vmax.f32 %v3864, %v3939
        %v3943 = vld [vmem:[%s15] sm:$0x1]
        %v3945 = vlaneseq
        %v3946 = vshrl.u32 %v3945, 7
        %v3947 = vsub.s32 0, %v3946
        %v3948 = vrot.slane %v3943, %v3947
        %v3950 = vadd.f32 %v3942, %v3948
        %v3951 = vmax.f32 %v3950, 0.0
        %v3952 = vld [vmem:[%s16] sm:$0xff]
        %v3953 = vld [vmem:[%s16 + $0x8] sm:$0xff]
        %v3954 = vld [vmem:[%s16 + $0x10] sm:$0xff]
        %v3955 = vld [vmem:[%s16 + $0x18] sm:$0xff]
        %v3956 = vld [vmem:[%s16 + $0x20] sm:$0xff]
        %v3957 = vld [vmem:[%s16 + $0x28] sm:$0xff]
        %v3958 = vld [vmem:[%s16 + $0x30] sm:$0xff]
        %v3959 = vld [vmem:[%s16 + $0x38] sm:$0xff]
        %v3960 = vld [vmem:[%s16 + $0x40] sm:$0xff]
        %v3961 = vld [vmem:[%s16 + $0x48] sm:$0xff]
        %v3962 = vld [vmem:[%s16 + $0x50] sm:$0xff]
        %v3963 = vld [vmem:[%s16 + $0x58] sm:$0xff]
        %v3964 = vld [vmem:[%s16 + $0x60] sm:$0xff]
        %v3965 = vld [vmem:[%s16 + $0x68] sm:$0xff]
        %v3966 = vld [vmem:[%s16 + $0x70] sm:$0xff]
        %v3967 = vld [vmem:[%s16 + $0x78] sm:$0xff]
        %s3968 = scalar_lea.vmem %s16, 128
        %v3969 = vld [vmem:[%s3968] sm:$0xff]
        %v3970 = vld [vmem:[%s3968 + $0x8] sm:$0xff]
        %v3971 = vld [vmem:[%s3968 + $0x10] sm:$0xff]
        %v3972 = vld [vmem:[%s3968 + $0x18] sm:$0xff]
        %v3973 = vld [vmem:[%s3968 + $0x20] sm:$0xff]
        %v3974 = vld [vmem:[%s3968 + $0x28] sm:$0xff]
        %v3975 = vld [vmem:[%s3968 + $0x30] sm:$0xff]
        %v3976 = vld [vmem:[%s3968 + $0x38] sm:$0xff]
        %v3977 = vld [vmem:[%s3968 + $0x40] sm:$0xff]
        %v3978 = vld [vmem:[%s3968 + $0x48] sm:$0xff]
        %v3979 = vld [vmem:[%s3968 + $0x50] sm:$0xff]
        %v3980 = vld [vmem:[%s3968 + $0x58] sm:$0xff]
        %v3981 = vld [vmem:[%s3968 + $0x60] sm:$0xff]
        %v3982 = vld [vmem:[%s3968 + $0x68] sm:$0xff]
        %v3983 = vld [vmem:[%s3968 + $0x70] sm:$0xff]
        %v3984 = vld [vmem:[%s3968 + $0x78] sm:$0xff]
        %v3986 = vrot.slane %v3951, 1
        %3988 = vmatprep.subr.mxu0 0.0
        %3989 = vmatpush1.msra.mxu0 %v3969
        %3990 = vmatprep.subr.mxu0 0.0
        %3991 = vmatpush1.msra.mxu0 %v3970
        %3992 = vmatprep.subr.mxu0 0.0
        %3993 = vmatpush1.msra.mxu0 %v3971
        %3994 = vmatprep.subr.mxu0 0.0
        %3995 = vmatpush1.msra.mxu0 %v3972
        %3996 = vmatprep.subr.mxu0 0.0
        %3997 = vmatpush1.msra.mxu0 %v3973
        %3998 = vmatprep.subr.mxu0 0.0
        %3999 = vmatpush1.msra.mxu0 %v3974
        %4000 = vmatprep.subr.mxu0 0.0
        %4001 = vmatpush1.msra.mxu0 %v3975
        %4002 = vmatprep.subr.mxu0 0.0
        %4003 = vmatpush1.msra.mxu0 %v3976
        %4004 = vmatprep.subr.mxu0 0.0
        %4005 = vmatpush1.msra.mxu0 %v3977
        %4006 = vmatprep.subr.mxu0 0.0
        %4007 = vmatpush1.msra.mxu0 %v3978
        %4008 = vmatprep.subr.mxu0 0.0
        %4009 = vmatpush1.msra.mxu0 %v3979
        %4010 = vmatprep.subr.mxu0 0.0
        %4011 = vmatpush1.msra.mxu0 %v3980
        %4012 = vmatprep.subr.mxu0 0.0
        %4013 = vmatpush1.msra.mxu0 %v3981
        %4014 = vmatprep.subr.mxu0 0.0
        %4015 = vmatpush1.msra.mxu0 %v3982
        %4016 = vmatprep.subr.mxu0 0.0
        %4017 = vmatpush1.msra.mxu0 %v3983
        %4018 = vmatprep.subr.mxu0 0.0
        %4019 = vmatpush1.msra.mxu0 %v3984
        %4020 = vmatprep.subr.mxu0 0.0
        %4021 = vmatpush1.msra.mxu0 0.0
        %4022 = vmatprep.subr.mxu0 0.0
        %4023 = vmatpush1.msra.mxu0 0.0
        %4024 = vmatprep.subr.mxu0 0.0
        %4025 = vmatpush1.msra.mxu0 0.0
        %4026 = vmatprep.subr.mxu0 0.0
        %4027 = vmatpush1.msra.mxu0 0.0
        %4028 = vmatprep.subr.mxu0 0.0
        %4029 = vmatpush1.msra.mxu0 0.0
        %4030 = vmatprep.subr.mxu0 0.0
        %4031 = vmatpush1.msra.mxu0 0.0
        %4032 = vmatprep.subr.mxu0 0.0
        %4033 = vmatpush1.msra.mxu0 0.0
        %4034 = vmatprep.subr.mxu0 0.0
        %4035 = vmatpush1.msra.mxu0 0.0
        %4036 = vmatprep.subr.mxu0 0.0
        %4037 = vmatpush1.msra.mxu0 0.0
        %4038 = vmatprep.subr.mxu0 0.0
        %4039 = vmatpush1.msra.mxu0 0.0
        %4040 = vmatprep.subr.mxu0 0.0
        %4041 = vmatpush1.msra.mxu0 0.0
        %4042 = vmatprep.subr.mxu0 0.0
        %4043 = vmatpush1.msra.mxu0 0.0
        %4044 = vmatprep.subr.mxu0 0.0
        %4045 = vmatpush1.msra.mxu0 0.0
        %4046 = vmatprep.subr.mxu0 0.0
        %4047 = vmatpush1.msra.mxu0 0.0
        %4048 = vmatprep.subr.mxu0 0.0
        %4049 = vmatpush1.msra.mxu0 0.0
        %4050 = vmatprep.subr.mxu0 0.0
        %4051 = vmatpush1.msra.mxu0 0.0
        %4052 = vmatprep.mubr.f32.mxu0 0.0
        %4053 = vmatmul.mubr.f32.gmra.mrb[0].mxu0 %v3986
        %v4054 = vpop.f32.mrb[0].mxu0
        %v4055 = vadd.f32 0.0, %v4054
        %v4056 = vpop.f32.mrb[0].mxu0
        %4057 = vdwg.mxu0
        %4058 = vmatprep.subr.mxu0 0.0
        %4059 = vmatpush1.msra.mxu0 %v3952
        %4060 = vmatprep.subr.mxu0 0.0
        %4061 = vmatpush1.msra.mxu0 %v3953
        %4062 = vmatprep.subr.mxu0 0.0
        %4063 = vmatpush1.msra.mxu0 %v3954
        %4064 = vmatprep.subr.mxu0 0.0
        %4065 = vmatpush1.msra.mxu0 %v3955
        %4066 = vmatprep.subr.mxu0 0.0
        %4067 = vmatpush1.msra.mxu0 %v3956
        %4068 = vmatprep.subr.mxu0 0.0
        %4069 = vmatpush1.msra.mxu0 %v3957
        %4070 = vmatprep.subr.mxu0 0.0
        %4071 = vmatpush1.msra.mxu0 %v3958
        %4072 = vmatprep.subr.mxu0 0.0
        %4073 = vmatpush1.msra.mxu0 %v3959
        %4074 = vmatprep.subr.mxu0 0.0
        %4075 = vmatpush1.msra.mxu0 %v3960
        %4076 = vmatprep.subr.mxu0 0.0
        %4077 = vmatpush1.msra.mxu0 %v3961
        %4078 = vmatprep.subr.mxu0 0.0
        %4079 = vmatpush1.msra.mxu0 %v3962
        %4080 = vmatprep.subr.mxu0 0.0
        %4081 = vmatpush1.msra.mxu0 %v3963
        %4082 = vmatprep.subr.mxu0 0.0
        %4083 = vmatpush1.msra.mxu0 %v3964
        %4084 = vmatprep.subr.mxu0 0.0
        %4085 = vmatpush1.msra.mxu0 %v3965
        %4086 = vmatprep.subr.mxu0 0.0
        %4087 = vmatpush1.msra.mxu0 %v3966
        %4088 = vmatprep.subr.mxu0 0.0
        %4089 = vmatpush1.msra.mxu0 %v3967
        %4090 = vmatprep.subr.mxu0 0.0
        %4091 = vmatpush1.msra.mxu0 0.0
        %4092 = vmatprep.subr.mxu0 0.0
        %4093 = vmatpush1.msra.mxu0 0.0
        %4094 = vmatprep.subr.mxu0 0.0
        %4095 = vmatpush1.msra.mxu0 0.0
        %4096 = vmatprep.subr.mxu0 0.0
        %4097 = vmatpush1.msra.mxu0 0.0
        %4098 = vmatprep.subr.mxu0 0.0
        %4099 = vmatpush1.msra.mxu0 0.0
        %4100 = vmatprep.subr.mxu0 0.0
        %4101 = vmatpush1.msra.mxu0 0.0
        %4102 = vmatprep.subr.mxu0 0.0
        %4103 = vmatpush1.msra.mxu0 0.0
        %4104 = vmatprep.subr.mxu0 0.0
        %4105 = vmatpush1.msra.mxu0 0.0
        %4106 = vmatprep.subr.mxu0 0.0
        %4107 = vmatpush1.msra.mxu0 0.0
        %4108 = vmatprep.subr.mxu0 0.0
        %4109 = vmatpush1.msra.mxu0 0.0
        %4110 = vmatprep.subr.mxu0 0.0
        %4111 = vmatpush1.msra.mxu0 0.0
        %4112 = vmatprep.subr.mxu0 0.0
        %4113 = vmatpush1.msra.mxu0 0.0
        %4114 = vmatprep.subr.mxu0 0.0
        %4115 = vmatpush1.msra.mxu0 0.0
        %4116 = vmatprep.subr.mxu0 0.0
        %4117 = vmatpush1.msra.mxu0 0.0
        %4118 = vmatprep.subr.mxu0 0.0
        %4119 = vmatpush1.msra.mxu0 0.0
        %4120 = vmatprep.subr.mxu0 0.0
        %4121 = vmatpush1.msra.mxu0 0.0
        %4122 = vmatprep.mubr.f32.mxu0 0.0
        %4123 = vmatmul.mubr.f32.gmra.mrb[0].mxu0 %v3951
        %v4124 = vpop.f32.mrb[0].mxu0
        %v4125 = vadd.f32 %v4055, %v4124
        %v4126 = vpop.f32.mrb[0].mxu0
        %4127 = vdwg.mxu0
        %s4128 = scalar_lea.vmem %s16, 256
        %v4129 = vld [vmem:[%s4128] sm:$0xff]
        %v4130 = vld [vmem:[%s4128 + $0x8] sm:$0xff]
        %v4131 = vld [vmem:[%s4128 + $0x10] sm:$0xff]
        %v4132 = vld [vmem:[%s4128 + $0x18] sm:$0xff]
        %v4133 = vld [vmem:[%s4128 + $0x20] sm:$0xff]
        %v4134 = vld [vmem:[%s4128 + $0x28] sm:$0xff]
        %v4135 = vld [vmem:[%s4128 + $0x30] sm:$0xff]
        %v4136 = vld [vmem:[%s4128 + $0x38] sm:$0xff]
        %v4137 = vld [vmem:[%s4128 + $0x40] sm:$0xff]
        %v4138 = vld [vmem:[%s4128 + $0x48] sm:$0xff]
        %v4139 = vld [vmem:[%s4128 + $0x50] sm:$0xff]
        %v4140 = vld [vmem:[%s4128 + $0x58] sm:$0xff]
        %v4141 = vld [vmem:[%s4128 + $0x60] sm:$0xff]
        %v4142 = vld [vmem:[%s4128 + $0x68] sm:$0xff]
        %v4143 = vld [vmem:[%s4128 + $0x70] sm:$0xff]
        %v4144 = vld [vmem:[%s4128 + $0x78] sm:$0xff]
        %v4145 = vrot.slane %v3951, 2
        %4147 = vmatprep.subr.mxu0 0.0
        %4148 = vmatpush1.msra.mxu0 %v4129
        %4149 = vmatprep.subr.mxu0 0.0
        %4150 = vmatpush1.msra.mxu0 %v4130
        %4151 = vmatprep.subr.mxu0 0.0
        %4152 = vmatpush1.msra.mxu0 %v4131
        %4153 = vmatprep.subr.mxu0 0.0
        %4154 = vmatpush1.msra.mxu0 %v4132
        %4155 = vmatprep.subr.mxu0 0.0
        %4156 = vmatpush1.msra.mxu0 %v4133
        %4157 = vmatprep.subr.mxu0 0.0
        %4158 = vmatpush1.msra.mxu0 %v4134
        %4159 = vmatprep.subr.mxu0 0.0
        %4160 = vmatpush1.msra.mxu0 %v4135
        %4161 = vmatprep.subr.mxu0 0.0
        %4162 = vmatpush1.msra.mxu0 %v4136
        %4163 = vmatprep.subr.mxu0 0.0
        %4164 = vmatpush1.msra.mxu0 %v4137
        %4165 = vmatprep.subr.mxu0 0.0
        %4166 = vmatpush1.msra.mxu0 %v4138
        %4167 = vmatprep.subr.mxu0 0.0
        %4168 = vmatpush1.msra.mxu0 %v4139
        %4169 = vmatprep.subr.mxu0 0.0
        %4170 = vmatpush1.msra.mxu0 %v4140
        %4171 = vmatprep.subr.mxu0 0.0
        %4172 = vmatpush1.msra.mxu0 %v4141
        %4173 = vmatprep.subr.mxu0 0.0
        %4174 = vmatpush1.msra.mxu0 %v4142
        %4175 = vmatprep.subr.mxu0 0.0
        %4176 = vmatpush1.msra.mxu0 %v4143
        %4177 = vmatprep.subr.mxu0 0.0
        %4178 = vmatpush1.msra.mxu0 %v4144
        %4179 = vmatprep.subr.mxu0 0.0
        %4180 = vmatpush1.msra.mxu0 0.0
        %4181 = vmatprep.subr.mxu0 0.0
        %4182 = vmatpush1.msra.mxu0 0.0
        %4183 = vmatprep.subr.mxu0 0.0
        %4184 = vmatpush1.msra.mxu0 0.0
        %4185 = vmatprep.subr.mxu0 0.0
        %4186 = vmatpush1.msra.mxu0 0.0
        %4187 = vmatprep.subr.mxu0 0.0
        %4188 = vmatpush1.msra.mxu0 0.0
        %4189 = vmatprep.subr.mxu0 0.0
        %4190 = vmatpush1.msra.mxu0 0.0
        %4191 = vmatprep.subr.mxu0 0.0
        %4192 = vmatpush1.msra.mxu0 0.0
        %4193 = vmatprep.subr.mxu0 0.0
        %4194 = vmatpush1.msra.mxu0 0.0
        %4195 = vmatprep.subr.mxu0 0.0
        %4196 = vmatpush1.msra.mxu0 0.0
        %4197 = vmatprep.subr.mxu0 0.0
        %4198 = vmatpush1.msra.mxu0 0.0
        %4199 = vmatprep.subr.mxu0 0.0
        %4200 = vmatpush1.msra.mxu0 0.0
        %4201 = vmatprep.subr.mxu0 0.0
        %4202 = vmatpush1.msra.mxu0 0.0
        %4203 = vmatprep.subr.mxu0 0.0
        %4204 = vmatpush1.msra.mxu0 0.0
        %4205 = vmatprep.subr.mxu0 0.0
        %4206 = vmatpush1.msra.mxu0 0.0
        %4207 = vmatprep.subr.mxu0 0.0
        %4208 = vmatpush1.msra.mxu0 0.0
        %4209 = vmatprep.subr.mxu0 0.0
        %4210 = vmatpush1.msra.mxu0 0.0
        %4211 = vmatprep.mubr.f32.mxu0 0.0
        %4212 = vmatmul.mubr.f32.gmra.mrb[0].mxu0 %v4145
        %v4213 = vpop.f32.mrb[0].mxu0
        %v4214 = vadd.f32 0.0, %v4213
        %v4215 = vpop.f32.mrb[0].mxu0
        %4216 = vdwg.mxu0
        %v4217 = vadd.f32 %v4125, %v4214
        %s4218 = scalar_lea.vmem %s16, 384
        %v4219 = vld [vmem:[%s4218] sm:$0xff]
        %v4220 = vld [vmem:[%s4218 + $0x8] sm:$0xff]
        %v4221 = vld [vmem:[%s4218 + $0x10] sm:$0xff]
        %v4222 = vld [vmem:[%s4218 + $0x18] sm:$0xff]
        %v4223 = vld [vmem:[%s4218 + $0x20] sm:$0xff]
        %v4224 = vld [vmem:[%s4218 + $0x28] sm:$0xff]
        %v4225 = vld [vmem:[%s4218 + $0x30] sm:$0xff]
        %v4226 = vld [vmem:[%s4218 + $0x38] sm:$0xff]
        %v4227 = vld [vmem:[%s4218 + $0x40] sm:$0xff]
        %v4228 = vld [vmem:[%s4218 + $0x48] sm:$0xff]
        %v4229 = vld [vmem:[%s4218 + $0x50] sm:$0xff]
        %v4230 = vld [vmem:[%s4218 + $0x58] sm:$0xff]
        %v4231 = vld [vmem:[%s4218 + $0x60] sm:$0xff]
        %v4232 = vld [vmem:[%s4218 + $0x68] sm:$0xff]
        %v4233 = vld [vmem:[%s4218 + $0x70] sm:$0xff]
        %v4234 = vld [vmem:[%s4218 + $0x78] sm:$0xff]
        %v4235 = vrot.slane %v3951, 3
        %4237 = vmatprep.subr.mxu0 0.0
        %4238 = vmatpush1.msra.mxu0 %v4219
        %4239 = vmatprep.subr.mxu0 0.0
        %4240 = vmatpush1.msra.mxu0 %v4220
        %4241 = vmatprep.subr.mxu0 0.0
        %4242 = vmatpush1.msra.mxu0 %v4221
        %4243 = vmatprep.subr.mxu0 0.0
        %4244 = vmatpush1.msra.mxu0 %v4222
        %4245 = vmatprep.subr.mxu0 0.0
        %4246 = vmatpush1.msra.mxu0 %v4223
        %4247 = vmatprep.subr.mxu0 0.0
        %4248 = vmatpush1.msra.mxu0 %v4224
        %4249 = vmatprep.subr.mxu0 0.0
        %4250 = vmatpush1.msra.mxu0 %v4225
        %4251 = vmatprep.subr.mxu0 0.0
        %4252 = vmatpush1.msra.mxu0 %v4226
        %4253 = vmatprep.subr.mxu0 0.0
        %4254 = vmatpush1.msra.mxu0 %v4227
        %4255 = vmatprep.subr.mxu0 0.0
        %4256 = vmatpush1.msra.mxu0 %v4228
        %4257 = vmatprep.subr.mxu0 0.0
        %4258 = vmatpush1.msra.mxu0 %v4229
        %4259 = vmatprep.subr.mxu0 0.0
        %4260 = vmatpush1.msra.mxu0 %v4230
        %4261 = vmatprep.subr.mxu0 0.0
        %4262 = vmatpush1.msra.mxu0 %v4231
        %4263 = vmatprep.subr.mxu0 0.0
        %4264 = vmatpush1.msra.mxu0 %v4232
        %4265 = vmatprep.subr.mxu0 0.0
        %4266 = vmatpush1.msra.mxu0 %v4233
        %4267 = vmatprep.subr.mxu0 0.0
        %4268 = vmatpush1.msra.mxu0 %v4234
        %4269 = vmatprep.subr.mxu0 0.0
        %4270 = vmatpush1.msra.mxu0 0.0
        %4271 = vmatprep.subr.mxu0 0.0
        %4272 = vmatpush1.msra.mxu0 0.0
        %4273 = vmatprep.subr.mxu0 0.0
        %4274 = vmatpush1.msra.mxu0 0.0
        %4275 = vmatprep.subr.mxu0 0.0
        %4276 = vmatpush1.msra.mxu0 0.0
        %4277 = vmatprep.subr.mxu0 0.0
        %4278 = vmatpush1.msra.mxu0 0.0
        %4279 = vmatprep.subr.mxu0 0.0
        %4280 = vmatpush1.msra.mxu0 0.0
        %4281 = vmatprep.subr.mxu0 0.0
        %4282 = vmatpush1.msra.mxu0 0.0
        %4283 = vmatprep.subr.mxu0 0.0
        %4284 = vmatpush1.msra.mxu0 0.0
        %4285 = vmatprep.subr.mxu0 0.0
        %4286 = vmatpush1.msra.mxu0 0.0
        %4287 = vmatprep.subr.mxu0 0.0
        %4288 = vmatpush1.msra.mxu0 0.0
        %4289 = vmatprep.subr.mxu0 0.0
        %4290 = vmatpush1.msra.mxu0 0.0
        %4291 = vmatprep.subr.mxu0 0.0
        %4292 = vmatpush1.msra.mxu0 0.0
        %4293 = vmatprep.subr.mxu0 0.0
        %4294 = vmatpush1.msra.mxu0 0.0
        %4295 = vmatprep.subr.mxu0 0.0
        %4296 = vmatpush1.msra.mxu0 0.0
        %4297 = vmatprep.subr.mxu0 0.0
        %4298 = vmatpush1.msra.mxu0 0.0
        %4299 = vmatprep.subr.mxu0 0.0
        %4300 = vmatpush1.msra.mxu0 0.0
        %4301 = vmatprep.mubr.f32.mxu0 0.0
        %4302 = vmatmul.mubr.f32.gmra.mrb[0].mxu0 %v4235
        %v4303 = vpop.f32.mrb[0].mxu0
        %v4304 = vadd.f32 0.0, %v4303
        %v4305 = vpop.f32.mrb[0].mxu0
        %4306 = vdwg.mxu0
        %v4307 = vadd.f32 %v4217, %v4304
        %s4308 = scalar_lea.vmem %s16, 512
        %v4309 = vld [vmem:[%s4308] sm:$0xff]
        %v4310 = vld [vmem:[%s4308 + $0x8] sm:$0xff]
        %v4311 = vld [vmem:[%s4308 + $0x10] sm:$0xff]
        %v4312 = vld [vmem:[%s4308 + $0x18] sm:$0xff]
        %v4313 = vld [vmem:[%s4308 + $0x20] sm:$0xff]
        %v4314 = vld [vmem:[%s4308 + $0x28] sm:$0xff]
        %v4315 = vld [vmem:[%s4308 + $0x30] sm:$0xff]
        %v4316 = vld [vmem:[%s4308 + $0x38] sm:$0xff]
        %v4317 = vld [vmem:[%s4308 + $0x40] sm:$0xff]
        %v4318 = vld [vmem:[%s4308 + $0x48] sm:$0xff]
        %v4319 = vld [vmem:[%s4308 + $0x50] sm:$0xff]
        %v4320 = vld [vmem:[%s4308 + $0x58] sm:$0xff]
        %v4321 = vld [vmem:[%s4308 + $0x60] sm:$0xff]
        %v4322 = vld [vmem:[%s4308 + $0x68] sm:$0xff]
        %v4323 = vld [vmem:[%s4308 + $0x70] sm:$0xff]
        %v4324 = vld [vmem:[%s4308 + $0x78] sm:$0xff]
        %v4325 = vrot.slane %v3951, 4
        %4327 = vmatprep.subr.mxu0 0.0
        %4328 = vmatpush1.msra.mxu0 %v4309
        %4329 = vmatprep.subr.mxu0 0.0
        %4330 = vmatpush1.msra.mxu0 %v4310
        %4331 = vmatprep.subr.mxu0 0.0
        %4332 = vmatpush1.msra.mxu0 %v4311
        %4333 = vmatprep.subr.mxu0 0.0
        %4334 = vmatpush1.msra.mxu0 %v4312
        %4335 = vmatprep.subr.mxu0 0.0
        %4336 = vmatpush1.msra.mxu0 %v4313
        %4337 = vmatprep.subr.mxu0 0.0
        %4338 = vmatpush1.msra.mxu0 %v4314
        %4339 = vmatprep.subr.mxu0 0.0
        %4340 = vmatpush1.msra.mxu0 %v4315
        %4341 = vmatprep.subr.mxu0 0.0
        %4342 = vmatpush1.msra.mxu0 %v4316
        %4343 = vmatprep.subr.mxu0 0.0
        %4344 = vmatpush1.msra.mxu0 %v4317
        %4345 = vmatprep.subr.mxu0 0.0
        %4346 = vmatpush1.msra.mxu0 %v4318
        %4347 = vmatprep.subr.mxu0 0.0
        %4348 = vmatpush1.msra.mxu0 %v4319
        %4349 = vmatprep.subr.mxu0 0.0
        %4350 = vmatpush1.msra.mxu0 %v4320
        %4351 = vmatprep.subr.mxu0 0.0
        %4352 = vmatpush1.msra.mxu0 %v4321
        %4353 = vmatprep.subr.mxu0 0.0
        %4354 = vmatpush1.msra.mxu0 %v4322
        %4355 = vmatprep.subr.mxu0 0.0
        %4356 = vmatpush1.msra.mxu0 %v4323
        %4357 = vmatprep.subr.mxu0 0.0
        %4358 = vmatpush1.msra.mxu0 %v4324
        %4359 = vmatprep.subr.mxu0 0.0
        %4360 = vmatpush1.msra.mxu0 0.0
        %4361 = vmatprep.subr.mxu0 0.0
        %4362 = vmatpush1.msra.mxu0 0.0
        %4363 = vmatprep.subr.mxu0 0.0
        %4364 = vmatpush1.msra.mxu0 0.0
        %4365 = vmatprep.subr.mxu0 0.0
        %4366 = vmatpush1.msra.mxu0 0.0
        %4367 = vmatprep.subr.mxu0 0.0
        %4368 = vmatpush1.msra.mxu0 0.0
        %4369 = vmatprep.subr.mxu0 0.0
        %4370 = vmatpush1.msra.mxu0 0.0
        %4371 = vmatprep.subr.mxu0 0.0
        %4372 = vmatpush1.msra.mxu0 0.0
        %4373 = vmatprep.subr.mxu0 0.0
        %4374 = vmatpush1.msra.mxu0 0.0
        %4375 = vmatprep.subr.mxu0 0.0
        %4376 = vmatpush1.msra.mxu0 0.0
        %4377 = vmatprep.subr.mxu0 0.0
        %4378 = vmatpush1.msra.mxu0 0.0
        %4379 = vmatprep.subr.mxu0 0.0
        %4380 = vmatpush1.msra.mxu0 0.0
        %4381 = vmatprep.subr.mxu0 0.0
        %4382 = vmatpush1.msra.mxu0 0.0
        %4383 = vmatprep.subr.mxu0 0.0
        %4384 = vmatpush1.msra.mxu0 0.0
        %4385 = vmatprep.subr.mxu0 0.0
        %4386 = vmatpush1.msra.mxu0 0.0
        %4387 = vmatprep.subr.mxu0 0.0
        %4388 = vmatpush1.msra.mxu0 0.0
        %4389 = vmatprep.subr.mxu0 0.0
        %4390 = vmatpush1.msra.mxu0 0.0
        %4391 = vmatprep.mubr.f32.mxu0 0.0
        %4392 = vmatmul.mubr.f32.gmra.mrb[0].mxu0 %v4325
        %v4393 = vpop.f32.mrb[0].mxu0
        %v4394 = vadd.f32 0.0, %v4393
        %v4395 = vpop.f32.mrb[0].mxu0
        %4396 = vdwg.mxu0
        %v4397 = vadd.f32 %v4307, %v4394
        %s4398 = scalar_lea.vmem %s16, 640
        %v4399 = vld [vmem:[%s4398] sm:$0xff]
        %v4400 = vld [vmem:[%s4398 + $0x8] sm:$0xff]
        %v4401 = vld [vmem:[%s4398 + $0x10] sm:$0xff]
        %v4402 = vld [vmem:[%s4398 + $0x18] sm:$0xff]
        %v4403 = vld [vmem:[%s4398 + $0x20] sm:$0xff]
        %v4404 = vld [vmem:[%s4398 + $0x28] sm:$0xff]
        %v4405 = vld [vmem:[%s4398 + $0x30] sm:$0xff]
        %v4406 = vld [vmem:[%s4398 + $0x38] sm:$0xff]
        %v4407 = vld [vmem:[%s4398 + $0x40] sm:$0xff]
        %v4408 = vld [vmem:[%s4398 + $0x48] sm:$0xff]
        %v4409 = vld [vmem:[%s4398 + $0x50] sm:$0xff]
        %v4410 = vld [vmem:[%s4398 + $0x58] sm:$0xff]
        %v4411 = vld [vmem:[%s4398 + $0x60] sm:$0xff]
        %v4412 = vld [vmem:[%s4398 + $0x68] sm:$0xff]
        %v4413 = vld [vmem:[%s4398 + $0x70] sm:$0xff]
        %v4414 = vld [vmem:[%s4398 + $0x78] sm:$0xff]
        %v4415 = vrot.slane %v3951, 5
        %4417 = vmatprep.subr.mxu0 0.0
        %4418 = vmatpush1.msra.mxu0 %v4399
        %4419 = vmatprep.subr.mxu0 0.0
        %4420 = vmatpush1.msra.mxu0 %v4400
        %4421 = vmatprep.subr.mxu0 0.0
        %4422 = vmatpush1.msra.mxu0 %v4401
        %4423 = vmatprep.subr.mxu0 0.0
        %4424 = vmatpush1.msra.mxu0 %v4402
        %4425 = vmatprep.subr.mxu0 0.0
        %4426 = vmatpush1.msra.mxu0 %v4403
        %4427 = vmatprep.subr.mxu0 0.0
        %4428 = vmatpush1.msra.mxu0 %v4404
        %4429 = vmatprep.subr.mxu0 0.0
        %4430 = vmatpush1.msra.mxu0 %v4405
        %4431 = vmatprep.subr.mxu0 0.0
        %4432 = vmatpush1.msra.mxu0 %v4406
        %4433 = vmatprep.subr.mxu0 0.0
        %4434 = vmatpush1.msra.mxu0 %v4407
        %4435 = vmatprep.subr.mxu0 0.0
        %4436 = vmatpush1.msra.mxu0 %v4408
        %4437 = vmatprep.subr.mxu0 0.0
        %4438 = vmatpush1.msra.mxu0 %v4409
        %4439 = vmatprep.subr.mxu0 0.0
        %4440 = vmatpush1.msra.mxu0 %v4410
        %4441 = vmatprep.subr.mxu0 0.0
        %4442 = vmatpush1.msra.mxu0 %v4411
        %4443 = vmatprep.subr.mxu0 0.0
        %4444 = vmatpush1.msra.mxu0 %v4412
        %4445 = vmatprep.subr.mxu0 0.0
        %4446 = vmatpush1.msra.mxu0 %v4413
        %4447 = vmatprep.subr.mxu0 0.0
        %4448 = vmatpush1.msra.mxu0 %v4414
        %4449 = vmatprep.subr.mxu0 0.0
        %4450 = vmatpush1.msra.mxu0 0.0
        %4451 = vmatprep.subr.mxu0 0.0
        %4452 = vmatpush1.msra.mxu0 0.0
        %4453 = vmatprep.subr.mxu0 0.0
        %4454 = vmatpush1.msra.mxu0 0.0
        %4455 = vmatprep.subr.mxu0 0.0
        %4456 = vmatpush1.msra.mxu0 0.0
        %4457 = vmatprep.subr.mxu0 0.0
        %4458 = vmatpush1.msra.mxu0 0.0
        %4459 = vmatprep.subr.mxu0 0.0
        %4460 = vmatpush1.msra.mxu0 0.0
        %4461 = vmatprep.subr.mxu0 0.0
        %4462 = vmatpush1.msra.mxu0 0.0
        %4463 = vmatprep.subr.mxu0 0.0
        %4464 = vmatpush1.msra.mxu0 0.0
        %4465 = vmatprep.subr.mxu0 0.0
        %4466 = vmatpush1.msra.mxu0 0.0
        %4467 = vmatprep.subr.mxu0 0.0
        %4468 = vmatpush1.msra.mxu0 0.0
        %4469 = vmatprep.subr.mxu0 0.0
        %4470 = vmatpush1.msra.mxu0 0.0
        %4471 = vmatprep.subr.mxu0 0.0
        %4472 = vmatpush1.msra.mxu0 0.0
        %4473 = vmatprep.subr.mxu0 0.0
        %4474 = vmatpush1.msra.mxu0 0.0
        %4475 = vmatprep.subr.mxu0 0.0
        %4476 = vmatpush1.msra.mxu0 0.0
        %4477 = vmatprep.subr.mxu0 0.0
        %4478 = vmatpush1.msra.mxu0 0.0
        %4479 = vmatprep.subr.mxu0 0.0
        %4480 = vmatpush1.msra.mxu0 0.0
        %4481 = vmatprep.mubr.f32.mxu0 0.0
        %4482 = vmatmul.mubr.f32.gmra.mrb[0].mxu0 %v4415
        %v4483 = vpop.f32.mrb[0].mxu0
        %v4484 = vadd.f32 0.0, %v4483
        %v4485 = vpop.f32.mrb[0].mxu0
        %4486 = vdwg.mxu0
        %v4487 = vadd.f32 %v4397, %v4484
        %s4488 = scalar_lea.vmem %s16, 768
        %v4489 = vld [vmem:[%s4488] sm:$0xff]
        %v4490 = vld [vmem:[%s4488 + $0x8] sm:$0xff]
        %v4491 = vld [vmem:[%s4488 + $0x10] sm:$0xff]
        %v4492 = vld [vmem:[%s4488 + $0x18] sm:$0xff]
        %v4493 = vld [vmem:[%s4488 + $0x20] sm:$0xff]
        %v4494 = vld [vmem:[%s4488 + $0x28] sm:$0xff]
        %v4495 = vld [vmem:[%s4488 + $0x30] sm:$0xff]
        %v4496 = vld [vmem:[%s4488 + $0x38] sm:$0xff]
        %v4497 = vld [vmem:[%s4488 + $0x40] sm:$0xff]
        %v4498 = vld [vmem:[%s4488 + $0x48] sm:$0xff]
        %v4499 = vld [vmem:[%s4488 + $0x50] sm:$0xff]
        %v4500 = vld [vmem:[%s4488 + $0x58] sm:$0xff]
        %v4501 = vld [vmem:[%s4488 + $0x60] sm:$0xff]
        %v4502 = vld [vmem:[%s4488 + $0x68] sm:$0xff]
        %v4503 = vld [vmem:[%s4488 + $0x70] sm:$0xff]
        %v4504 = vld [vmem:[%s4488 + $0x78] sm:$0xff]
        %v4505 = vrot.slane %v3951, 6
        %4507 = vmatprep.subr.mxu0 0.0
        %4508 = vmatpush1.msra.mxu0 %v4489
        %4509 = vmatprep.subr.mxu0 0.0
        %4510 = vmatpush1.msra.mxu0 %v4490
        %4511 = vmatprep.subr.mxu0 0.0
        %4512 = vmatpush1.msra.mxu0 %v4491
        %4513 = vmatprep.subr.mxu0 0.0
        %4514 = vmatpush1.msra.mxu0 %v4492
        %4515 = vmatprep.subr.mxu0 0.0
        %4516 = vmatpush1.msra.mxu0 %v4493
        %4517 = vmatprep.subr.mxu0 0.0
        %4518 = vmatpush1.msra.mxu0 %v4494
        %4519 = vmatprep.subr.mxu0 0.0
        %4520 = vmatpush1.msra.mxu0 %v4495
        %4521 = vmatprep.subr.mxu0 0.0
        %4522 = vmatpush1.msra.mxu0 %v4496
        %4523 = vmatprep.subr.mxu0 0.0
        %4524 = vmatpush1.msra.mxu0 %v4497
        %4525 = vmatprep.subr.mxu0 0.0
        %4526 = vmatpush1.msra.mxu0 %v4498
        %4527 = vmatprep.subr.mxu0 0.0
        %4528 = vmatpush1.msra.mxu0 %v4499
        %4529 = vmatprep.subr.mxu0 0.0
        %4530 = vmatpush1.msra.mxu0 %v4500
        %4531 = vmatprep.subr.mxu0 0.0
        %4532 = vmatpush1.msra.mxu0 %v4501
        %4533 = vmatprep.subr.mxu0 0.0
        %4534 = vmatpush1.msra.mxu0 %v4502
        %4535 = vmatprep.subr.mxu0 0.0
        %4536 = vmatpush1.msra.mxu0 %v4503
        %4537 = vmatprep.subr.mxu0 0.0
        %4538 = vmatpush1.msra.mxu0 %v4504
        %4539 = vmatprep.subr.mxu0 0.0
        %4540 = vmatpush1.msra.mxu0 0.0
        %4541 = vmatprep.subr.mxu0 0.0
        %4542 = vmatpush1.msra.mxu0 0.0
        %4543 = vmatprep.subr.mxu0 0.0
        %4544 = vmatpush1.msra.mxu0 0.0
        %4545 = vmatprep.subr.mxu0 0.0
        %4546 = vmatpush1.msra.mxu0 0.0
        %4547 = vmatprep.subr.mxu0 0.0
        %4548 = vmatpush1.msra.mxu0 0.0
        %4549 = vmatprep.subr.mxu0 0.0
        %4550 = vmatpush1.msra.mxu0 0.0
        %4551 = vmatprep.subr.mxu0 0.0
        %4552 = vmatpush1.msra.mxu0 0.0
        %4553 = vmatprep.subr.mxu0 0.0
        %4554 = vmatpush1.msra.mxu0 0.0
        %4555 = vmatprep.subr.mxu0 0.0
        %4556 = vmatpush1.msra.mxu0 0.0
        %4557 = vmatprep.subr.mxu0 0.0
        %4558 = vmatpush1.msra.mxu0 0.0
        %4559 = vmatprep.subr.mxu0 0.0
        %4560 = vmatpush1.msra.mxu0 0.0
        %4561 = vmatprep.subr.mxu0 0.0
        %4562 = vmatpush1.msra.mxu0 0.0
        %4563 = vmatprep.subr.mxu0 0.0
        %4564 = vmatpush1.msra.mxu0 0.0
        %4565 = vmatprep.subr.mxu0 0.0
        %4566 = vmatpush1.msra.mxu0 0.0
        %4567 = vmatprep.subr.mxu0 0.0
        %4568 = vmatpush1.msra.mxu0 0.0
        %4569 = vmatprep.subr.mxu0 0.0
        %4570 = vmatpush1.msra.mxu0 0.0
        %4571 = vmatprep.mubr.f32.mxu0 0.0
        %4572 = vmatmul.mubr.f32.gmra.mrb[0].mxu0 %v4505
        %v4573 = vpop.f32.mrb[0].mxu0
        %v4574 = vadd.f32 0.0, %v4573
        %v4575 = vpop.f32.mrb[0].mxu0
        %4576 = vdwg.mxu0
        %v4577 = vadd.f32 %v4487, %v4574
        %s4578 = scalar_lea.vmem %s16, 896
        %v4579 = vld [vmem:[%s4578] sm:$0xff]
        %v4580 = vld [vmem:[%s4578 + $0x8] sm:$0xff]
        %v4581 = vld [vmem:[%s4578 + $0x10] sm:$0xff]
        %v4582 = vld [vmem:[%s4578 + $0x18] sm:$0xff]
        %v4583 = vld [vmem:[%s4578 + $0x20] sm:$0xff]
        %v4584 = vld [vmem:[%s4578 + $0x28] sm:$0xff]
        %v4585 = vld [vmem:[%s4578 + $0x30] sm:$0xff]
        %v4586 = vld [vmem:[%s4578 + $0x38] sm:$0xff]
        %v4587 = vld [vmem:[%s4578 + $0x40] sm:$0xff]
        %v4588 = vld [vmem:[%s4578 + $0x48] sm:$0xff]
        %v4589 = vld [vmem:[%s4578 + $0x50] sm:$0xff]
        %v4590 = vld [vmem:[%s4578 + $0x58] sm:$0xff]
        %v4591 = vld [vmem:[%s4578 + $0x60] sm:$0xff]
        %v4592 = vld [vmem:[%s4578 + $0x68] sm:$0xff]
        %v4593 = vld [vmem:[%s4578 + $0x70] sm:$0xff]
        %v4594 = vld [vmem:[%s4578 + $0x78] sm:$0xff]
        %v4595 = vrot.slane %v3951, 7
        %4597 = vmatprep.subr.mxu0 0.0
        %4598 = vmatpush1.msra.mxu0 %v4579
        %4599 = vmatprep.subr.mxu0 0.0
        %4600 = vmatpush1.msra.mxu0 %v4580
        %4601 = vmatprep.subr.mxu0 0.0
        %4602 = vmatpush1.msra.mxu0 %v4581
        %4603 = vmatprep.subr.mxu0 0.0
        %4604 = vmatpush1.msra.mxu0 %v4582
        %4605 = vmatprep.subr.mxu0 0.0
        %4606 = vmatpush1.msra.mxu0 %v4583
        %4607 = vmatprep.subr.mxu0 0.0
        %4608 = vmatpush1.msra.mxu0 %v4584
        %4609 = vmatprep.subr.mxu0 0.0
        %4610 = vmatpush1.msra.mxu0 %v4585
        %4611 = vmatprep.subr.mxu0 0.0
        %4612 = vmatpush1.msra.mxu0 %v4586
        %4613 = vmatprep.subr.mxu0 0.0
        %4614 = vmatpush1.msra.mxu0 %v4587
        %4615 = vmatprep.subr.mxu0 0.0
        %4616 = vmatpush1.msra.mxu0 %v4588
        %4617 = vmatprep.subr.mxu0 0.0
        %4618 = vmatpush1.msra.mxu0 %v4589
        %4619 = vmatprep.subr.mxu0 0.0
        %4620 = vmatpush1.msra.mxu0 %v4590
        %4621 = vmatprep.subr.mxu0 0.0
        %4622 = vmatpush1.msra.mxu0 %v4591
        %4623 = vmatprep.subr.mxu0 0.0
        %4624 = vmatpush1.msra.mxu0 %v4592
        %4625 = vmatprep.subr.mxu0 0.0
        %4626 = vmatpush1.msra.mxu0 %v4593
        %4627 = vmatprep.subr.mxu0 0.0
        %4628 = vmatpush1.msra.mxu0 %v4594
        %4629 = vmatprep.subr.mxu0 0.0
        %4630 = vmatpush1.msra.mxu0 0.0
        %4631 = vmatprep.subr.mxu0 0.0
        %4632 = vmatpush1.msra.mxu0 0.0
        %4633 = vmatprep.subr.mxu0 0.0
        %4634 = vmatpush1.msra.mxu0 0.0
        %4635 = vmatprep.subr.mxu0 0.0
        %4636 = vmatpush1.msra.mxu0 0.0
        %4637 = vmatprep.subr.mxu0 0.0
        %4638 = vmatpush1.msra.mxu0 0.0
        %4639 = vmatprep.subr.mxu0 0.0
        %4640 = vmatpush1.msra.mxu0 0.0
        %4641 = vmatprep.subr.mxu0 0.0
        %4642 = vmatpush1.msra.mxu0 0.0
        %4643 = vmatprep.subr.mxu0 0.0
        %4644 = vmatpush1.msra.mxu0 0.0
        %4645 = vmatprep.subr.mxu0 0.0
        %4646 = vmatpush1.msra.mxu0 0.0
        %4647 = vmatprep.subr.mxu0 0.0
        %4648 = vmatpush1.msra.mxu0 0.0
        %4649 = vmatprep.subr.mxu0 0.0
        %4650 = vmatpush1.msra.mxu0 0.0
        %4651 = vmatprep.subr.mxu0 0.0
        %4652 = vmatpush1.msra.mxu0 0.0
        %4653 = vmatprep.subr.mxu0 0.0
        %4654 = vmatpush1.msra.mxu0 0.0
        %4655 = vmatprep.subr.mxu0 0.0
        %4656 = vmatpush1.msra.mxu0 0.0
        %4657 = vmatprep.subr.mxu0 0.0
        %4658 = vmatpush1.msra.mxu0 0.0
        %4659 = vmatprep.subr.mxu0 0.0
        %4660 = vmatpush1.msra.mxu0 0.0
        %4661 = vmatprep.mubr.f32.mxu0 0.0
        %4662 = vmatmul.mubr.f32.gmra.mrb[0].mxu0 %v4595
        %v4663 = vpop.f32.mrb[0].mxu0
        %v4664 = vadd.f32 0.0, %v4663
        %v4665 = vpop.f32.mrb[0].mxu0
        %4666 = vdwg.mxu0
        %v4667 = vadd.f32 %v4577, %v4664
        %v4668 = vld [vmem:[%s17] sm:$0x1]
        %v4669 = vadd.f32 %v4667, %v4668
        %v4670 = vmax.f32 %v4669, 0.0
        %v4671 = vld [vmem:[%s18] sm:$0xff]
        %v4672 = vld [vmem:[%s18 + $0x8] sm:$0xff]
        %v4673 = vld [vmem:[%s19] sm:$0x1]
        %v4675 = vsel %vm3215, %v4670, 0
        %4677 = vmatprep.subr.mxu0 0.0
        %4678 = vmatpush1.msra.mxu0 %v4671
        %4679 = vmatprep.subr.mxu0 0.0
        %4680 = vmatpush1.msra.mxu0 %v4672
        %4681 = vmatprep.subr.mxu0 0.0
        %4682 = vmatpush1.msra.mxu0 0.0
        %4683 = vmatprep.subr.mxu0 0.0
        %4684 = vmatpush1.msra.mxu0 0.0
        %4685 = vmatprep.subr.mxu0 0.0
        %4686 = vmatpush1.msra.mxu0 0.0
        %4687 = vmatprep.subr.mxu0 0.0
        %4688 = vmatpush1.msra.mxu0 0.0
        %4689 = vmatprep.subr.mxu0 0.0
        %4690 = vmatpush1.msra.mxu0 0.0
        %4691 = vmatprep.subr.mxu0 0.0
        %4692 = vmatpush1.msra.mxu0 0.0
        %4693 = vmatprep.subr.mxu0 0.0
        %4694 = vmatpush1.msra.mxu0 0.0
        %4695 = vmatprep.subr.mxu0 0.0
        %4696 = vmatpush1.msra.mxu0 0.0
        %4697 = vmatprep.subr.mxu0 0.0
        %4698 = vmatpush1.msra.mxu0 0.0
        %4699 = vmatprep.subr.mxu0 0.0
        %4700 = vmatpush1.msra.mxu0 0.0
        %4701 = vmatprep.subr.mxu0 0.0
        %4702 = vmatpush1.msra.mxu0 0.0
        %4703 = vmatprep.subr.mxu0 0.0
        %4704 = vmatpush1.msra.mxu0 0.0
        %4705 = vmatprep.subr.mxu0 0.0
        %4706 = vmatpush1.msra.mxu0 0.0
        %4707 = vmatprep.subr.mxu0 0.0
        %4708 = vmatpush1.msra.mxu0 0.0
        %4709 = vmatprep.subr.mxu0 0.0
        %4710 = vmatpush1.msra.mxu0 0.0
        %4711 = vmatprep.subr.mxu0 0.0
        %4712 = vmatpush1.msra.mxu0 0.0
        %4713 = vmatprep.subr.mxu0 0.0
        %4714 = vmatpush1.msra.mxu0 0.0
        %4715 = vmatprep.subr.mxu0 0.0
        %4716 = vmatpush1.msra.mxu0 0.0
        %4717 = vmatprep.subr.mxu0 0.0
        %4718 = vmatpush1.msra.mxu0 0.0
        %4719 = vmatprep.subr.mxu0 0.0
        %4720 = vmatpush1.msra.mxu0 0.0
        %4721 = vmatprep.subr.mxu0 0.0
        %4722 = vmatpush1.msra.mxu0 0.0
        %4723 = vmatprep.subr.mxu0 0.0
        %4724 = vmatpush1.msra.mxu0 0.0
        %4725 = vmatprep.subr.mxu0 0.0
        %4726 = vmatpush1.msra.mxu0 0.0
        %4727 = vmatprep.subr.mxu0 0.0
        %4728 = vmatpush1.msra.mxu0 0.0
        %4729 = vmatprep.subr.mxu0 0.0
        %4730 = vmatpush1.msra.mxu0 0.0
        %4731 = vmatprep.subr.mxu0 0.0
        %4732 = vmatpush1.msra.mxu0 0.0
        %4733 = vmatprep.subr.mxu0 0.0
        %4734 = vmatpush1.msra.mxu0 0.0
        %4735 = vmatprep.subr.mxu0 0.0
        %4736 = vmatpush1.msra.mxu0 0.0
        %4737 = vmatprep.subr.mxu0 0.0
        %4738 = vmatpush1.msra.mxu0 0.0
        %4739 = vmatprep.subr.mxu0 0.0
        %4740 = vmatpush1.msra.mxu0 0.0
        %4741 = vmatprep.mubr.f32.mxu0 0.0
        %4742 = vmatmul.mubr.f32.gmra.mrb[0].mxu0 %v4675
        %v4743 = vpop.f32.mrb[0].mxu0
        %v4744 = vadd.f32 %v4673, %v4743
        %v4745 = vpop.f32.mrb[0].mxu0
        %4746 = vdwg.mxu0
        %vm4747 = vcmask 40960
        %v4748 = vsel %vm4747, %v4744, -inf
        %4749 = vmax.xlane.f32.xlu0 %v4748
        %v4750 = vpop.xlane.xlu0 %4749
        %v4751 = vsub.f32 %v4744, %v4750
        %v4752 = vmul.f32 %v4751, 1.442695
        %v4753 = vpow.pop %v4752
        %v4754 = vsel %vm4747, %v4753, 0.0
        %4755 = vadd.xlane.f32.xlu0 %v4754
        %v4756 = vpop.xlane.xlu0 %4755
        %v4757 = vlog2.pop %v4756
        %v4758 = vmul.f32 %v4757, 0.6931472
        %v4759 = vadd.f32 %v4750, %v4758
        %v4760 = vsub.f32 %v4744, %v4759
        %4761 = vst.msk [vmem:[%s723] sm:$0x1] %vm4747, %v4760
        %s4762 = sand.u32 %s471, 1
        %s4763 = scalar_lea.sflag [#allocation4], %s4762
        %s4764 = sand.u32 %s471, 1
        %s4765 = scalar_lea.vmem [#allocation14], %s4764
        // Predicated region
        $region129: #{net_forward.1} parent=99 // pred_check
          %p4766 = pneg %p481
        $region130: #{net_forward.1} parent=99 // pred_check_branch
          %4768 = sbr.rel (%p4766) target = $region132
        $region131: #{net_forward.1} parent=99 // pred_region
          %s4770 = ssub.s32 16, 16
          %4771 = vsyncadd %s4763, %s4770
          %s4772 = smul.addr %s38, 16
          %s4773 = scalar_lea.hbm %s20, %s4772
          %s4775 = sshll.u32 %s4765, 4
          %s4776 = int_to_ptr.vmem [resolvable:$true] %s4775
          %4778 = dma.vmem_to_hbm [thread:$0]  %s4776, 16, %s4773, %s4763
        $region132: #{net_forward.1} parent=99 // pred_fallthru
          _
      $region100: #{net_forward.1} parent=5 // pred_fallthru
        _
      %p4779 = scmp.le.s32.totalorder 2, %s33
      // Predicated region
      $region133: #{net_forward.1} parent=5 // pred_check
        %p4780 = pneg %p4779
      $region134: #{net_forward.1} parent=5 // pred_check_branch
        %4782 = sbr.rel (%p4780) target = $region136
      $region135: #{net_forward.1} parent=5 // pred_region
        %s4783 = ssub.s32 %s33, 2
        // Predicated region
        $region137: #{net_forward.1} parent=135 // pred_check
          %p4784 = pneg %p487
        $region138: #{net_forward.1} parent=135 // pred_check_branch
          %4786 = sbr.rel (%p4784) target = $region140
        $region139: #{net_forward.1} parent=135 // pred_region
          %s4787 = sand.u32 %s472, 1
          %s4788 = scalar_lea.sflag [#allocation4], %s4787
          %s4789 = sand.u32 %s472, 1
          %s4790 = scalar_lea.vmem [#allocation14], %s4789
          %4791 = dma.done %s4788, 16
        $region140: #{net_forward.1} parent=135 // pred_fallthru
          _
      $region136: #{net_forward.1} parent=5 // pred_fallthru
        _
    $region6: #{net_forward.1} parent=1 // loop_footer
      %s37 = sadd.s32 1, %s33
    $region7: #{net_forward.1} parent=1 // loop_footer_branch
      %32 = sbr.rel target = $region3
    $region8: #{net_forward.1} parent=1 // loop_exit
      _
    %4792 = vsyncpa [#allocation3], 1
    %s4793 = scalar_lea.sflag [#allocation3], 1
    %4794 = vsyncpa %s4793, 1
    %4795 = vsyncpa [#allocation6], 1
    %4796 = vsyncpa [#allocation9], 1
    %4797 = vsyncpa [#allocation12], 1
    %4798 = vsyncpa [#allocation4], 1
    %s4799 = scalar_lea.sflag [#allocation4], 1
    %4800 = vsyncpa %s4799, 1

</llo_original>
